<compile_context>
chip_gen: v7x
topology: tpu7x:2x2x1
jax: 0.10.0
libtpu: 0.0.40
codegen_flags: <defaults>
</compile_context>

<pallas_src>
import math
from functools import partial

import jax
import jax.numpy as jnp
from jax.experimental import pallas as pl
from jax.experimental.pallas import tpu as pltpu


def _round_up(x, m):
    return (x + m - 1) // m * m


# ----------------------------------------------------------------------------
# Fused decoder kernel.  grid = (row_tiles, num_layers)
#   axis 0 ("parallel")  : tiles of whole batch elements (megacore-shardable)
#   axis 1 ("arbitrary") : decoder layer; h is carried in a VMEM scratch.
# ----------------------------------------------------------------------------

def _fused_decoder_kernel(
    x_ref, emb_ref,
    w_in_ref, b_in_ref,
    wq_ref, bq_ref, wkv_ref, bkv_ref, wo_ref, bo_ref,
    wf1_ref, bf1_ref, wf2_ref, bf2_ref,
    hw1_ref, hb1_ref, hw2_ref, hb2_ref,
    o_ref,
    h_ref,
    *, batch, q_len, kv_len, kv_valid, hidden_pad,
):
    l = pl.program_id(1)
    nl = pl.num_programs(1)

    def mm(a, w):
        # bf16 MXU operands, f32 accumulation.  x / emb arrive already in bf16.
        if a.dtype != jnp.bfloat16:
            a = a.astype(jnp.bfloat16)
        return jnp.dot(a, w, preferred_element_type=jnp.float32)

    # ---- input projection: once per row tile (first layer step) ----
    @pl.when(l == 0)
    def _():
        h_ref[...] = mm(x_ref[...], w_in_ref[...]) + b_in_ref[...]

    h = h_ref[...]                                           # [rows, Hp]  f32

    # ---- cross attention: Q from h, K/V from the embedding ----
    q = mm(h, wq_ref[...]) + bq_ref[...]                     # 1/sqrt(D) folded in
    kv = mm(emb_ref[...], wkv_ref[...]) + bkv_ref[...]       # [rows_kv, 2*Hp]

    q3 = q.reshape(batch, q_len, hidden_pad)
    kv3 = kv.reshape(batch, kv_len, 2 * hidden_pad)
    k3 = kv3[:, :, :hidden_pad]
    v3 = kv3[:, :, hidden_pad:]

    s = jnp.einsum('bqh,bkh->bqk',
                   q3.astype(jnp.bfloat16), k3.astype(jnp.bfloat16),
                   preferred_element_type=jnp.float32)       # [nb, S, T]
    if kv_valid < kv_len:
        # Mask zero-padded kv positions (wrapper pads T to a multiple of 8).
        kv_idx = jax.lax.broadcasted_iota(jnp.int32, s.shape, 2)
        s = jnp.where(kv_idx < kv_valid, s, -1e30)

    s_max = jnp.max(s, axis=-1, keepdims=True)
    p = jnp.exp(s - s_max)
    inv = pl.reciprocal(jnp.sum(p, axis=-1, keepdims=True), approx=True)
    if kv_len <= hidden_pad:
        # Normalize before PV: B*S*T multiplies <= B*S*Hp.
        a3 = jnp.einsum('bqk,bkh->bqh',
                        (p * inv).astype(jnp.bfloat16), v3.astype(jnp.bfloat16),
                        preferred_element_type=jnp.float32)
    else:
        # Normalize after PV: fewer VPU multiplies when T > Hp.
        a3 = jnp.einsum('bqk,bkh->bqh',
                        p.astype(jnp.bfloat16), v3.astype(jnp.bfloat16),
                        preferred_element_type=jnp.float32)
        a3 = a3 * inv
    a = a3.reshape(batch * q_len, hidden_pad)

    h = h + (mm(a, wo_ref[...]) + bo_ref[...])               # residual

    # ---- feed-forward: Linear -> ReLU -> Linear, residual ----
    f = jnp.maximum(mm(h, wf1_ref[...]) + bf1_ref[...], 0.0)
    h = h + (mm(f, wf2_ref[...]) + bf2_ref[...])

    h_ref[...] = h

    # ---- head (Linear -> ReLU -> Linear) on the last layer step ----
    @pl.when(l == nl - 1)
    def _():
        z = jnp.maximum(mm(h, hw1_ref[...]) + hb1_ref[...], 0.0)
        o_ref[...] = (mm(z, hw2_ref[...]) + hb2_ref[...]).astype(o_ref.dtype)


# ----------------------------------------------------------------------------
# Parameter initialization (natural sizes, PyTorch-Linear-style uniform init)
# ----------------------------------------------------------------------------

def init_params(key, state_size, hidden_size, head_hidden_size, res_size,
                decoder_layers):
    def dense(k, fan_in, fan_out):
        kw, kb = jax.random.split(k)
        lim = 1.0 / math.sqrt(fan_in)
        w = jax.random.uniform(kw, (fan_in, fan_out), jnp.float32, -lim, lim)
        b = jax.random.uniform(kb, (fan_out,), jnp.float32, -lim, lim)
        return w, b

    keys = jax.random.split(key, 2 + decoder_layers)
    params = {"in_proj": dense(keys[0], state_size, hidden_size)}

    layers = []
    for l in range(decoder_layers):
        lk = jax.random.split(keys[1 + l], 6)
        layers.append({
            "q": dense(lk[0], hidden_size, hidden_size),
            "k": dense(lk[1], hidden_size, hidden_size),
            "v": dense(lk[2], hidden_size, hidden_size),
            "o": dense(lk[3], hidden_size, hidden_size),
            "ffn1": dense(lk[4], hidden_size, hidden_size),
            "ffn2": dense(lk[5], hidden_size, hidden_size),
        })
    params["layers"] = layers

    hk = jax.random.split(keys[-1], 2)
    params["head1"] = dense(hk[0], hidden_size, head_hidden_size)
    params["head2"] = dense(hk[1], head_hidden_size, res_size)
    return params


# ----------------------------------------------------------------------------
# Pack / pad parameters for the fused kernel
# ----------------------------------------------------------------------------

def _pad2(w, rows, cols):
    out = jnp.zeros((rows, cols), jnp.float32)
    return out.at[: w.shape[0], : w.shape[1]].set(w)


def _pad_bias(b, cols):
    out = jnp.zeros((cols,), jnp.float32)
    return out.at[: b.shape[0]].set(b)


def pack_params(params, hidden_size):
    Hp = _round_up(hidden_size, 128)
    w_in, b_in = params["in_proj"]
    state = w_in.shape[0]
    hw1, hb1 = params["head1"]
    hw2, hb2 = params["head2"]
    HHp = _round_up(hw1.shape[1], 128)
    Rp = _round_up(hw2.shape[1], 128)
    scale = 1.0 / math.sqrt(hidden_size)

    packed = {
        "w_in": _pad2(w_in, state, Hp).astype(jnp.bfloat16),
        "b_in": _pad_bias(b_in, Hp).reshape(1, Hp),
        "hw1": _pad2(hw1, Hp, HHp).astype(jnp.bfloat16),
        "hb1": _pad_bias(hb1, HHp).reshape(1, HHp),
        "hw2": _pad2(hw2, HHp, Rp).astype(jnp.bfloat16),
        "hb2": _pad_bias(hb2, Rp).reshape(1, Rp),
    }

    wq_l, bq_l, wkv_l, bkv_l = [], [], [], []
    wo_l, bo_l, wf1_l, bf1_l, wf2_l, bf2_l = [], [], [], [], [], []
    for layer in params["layers"]:
        wq, bq = layer["q"]
        wk, bk = layer["k"]
        wv, bv = layer["v"]
        wo, bo = layer["o"]
        w1, b1 = layer["ffn1"]
        w2, b2 = layer["ffn2"]
        # fold 1/sqrt(D) attention scale into the Q projection
        wq_l.append(_pad2(wq * scale, Hp, Hp))
        bq_l.append(_pad_bias(bq * scale, Hp))
        # concatenate K and V projections -> single [He, 2*Hp] matmul
        wkv_l.append(jnp.concatenate(
            [_pad2(wk, hidden_size, Hp), _pad2(wv, hidden_size, Hp)], axis=1))
        bkv_l.append(jnp.concatenate([_pad_bias(bk, Hp), _pad_bias(bv, Hp)]))
        wo_l.append(_pad2(wo, Hp, Hp))
        bo_l.append(_pad_bias(bo, Hp))
        wf1_l.append(_pad2(w1, Hp, Hp))
        bf1_l.append(_pad_bias(b1, Hp))
        wf2_l.append(_pad2(w2, Hp, Hp))
        bf2_l.append(_pad_bias(b2, Hp))

    def stack_w(ws):                       # [L, K, N] bf16
        return jnp.stack(ws).astype(jnp.bfloat16)

    def stack_b(bs):                       # [L, 1, N] f32
        return jnp.stack(bs)[:, None, :]

    packed.update({
        "wq": stack_w(wq_l), "bq": stack_b(bq_l),
        "wkv": stack_w(wkv_l), "bkv": stack_b(bkv_l),
        "wo": stack_w(wo_l), "bo": stack_b(bo_l),
        "wf1": stack_w(wf1_l), "bf1": stack_b(bf1_l),
        "wf2": stack_w(wf2_l), "bf2": stack_b(bf2_l),
    })
    return packed


# ----------------------------------------------------------------------------
# VMEM budgeting / BlockSpec helpers
# ----------------------------------------------------------------------------

def _spec(shape, index_map, buffers=None):
    """BlockSpec with an optional per-operand buffer-depth hint."""
    if buffers is not None:
        try:
            return pl.BlockSpec(shape, index_map, pipeline_mode=pl.Buffered(buffers))
        except (TypeError, AttributeError):   # jax build without pipeline_mode
            pass
    return pl.BlockSpec(shape, index_map)


def _estimate_vmem_bytes(nb, S_pad, T_pad, state, He, Hp, HHp, Rp,
                         weight_buffers, fixed_buffers):
    bf, f32 = 2, 4
    rq, rk = nb * S_pad, nb * T_pad
    resident = (rq * state * bf + rk * He * bf                 # x, emb tiles
                + state * Hp * bf + Hp * f32                   # w_in, b_in
                + Hp * HHp * bf + HHp * f32                    # head1
                + HHp * Rp * bf + Rp * f32                     # head2
                + rq * Rp * f32) * fixed_buffers               # output tile
    per_layer = (4 * Hp * Hp + He * 2 * Hp) * bf + 6 * Hp * f32
    scratch = rq * Hp * f32                                    # resident h
    transient = (rk * 2 * Hp * f32                             # kv (f32)
                 + 2 * nb * S_pad * T_pad * f32                # scores / probs
                 + 3 * rq * Hp * f32)                          # q / attn-out / ffn
    return resident + per_layer * weight_buffers + scratch + transient


def _pick_vmem_limit(required_bytes):
    """Per-generation VMEM limit (~96 MiB v5e/v6e, ~48 MiB v7x); fail loudly if
    the kernel cannot fit instead of letting the compiler squeeze headroom."""
    try:
        phys = int(getattr(pltpu.get_tpu_info(), "vmem_capacity_bytes", 0))
    except Exception:
        phys = 0
    if phys <= 0:
        phys = 64 * 1024 * 1024           # conservative default: v7x per-TC VMEM
    limit = max(min(phys * 3 // 4, 100 * 1024 * 1024), 32 * 1024 * 1024)
    if required_bytes > limit:
        raise ValueError(
            f"fused PackDecoder kernel needs ~{required_bytes / 2**20:.1f} MiB VMEM "
            f"but the per-chip limit is {limit / 2**20:.1f} MiB; "
            f"reduce the row tile or hidden size")
    return int(limit)


# ----------------------------------------------------------------------------
# PackDecoder forward (single pallas_call)
# ----------------------------------------------------------------------------

def pack_decoder_forward(packed, x, embedding, *, res_size,
                         weight_buffers=2, use_buffer_hints=True):
    """
    x:         [B, S, state_size]   (queries of the cross-attention decoder)
    embedding: [B, T, hidden_size]  (keys / values)
    returns:   [B, S, res_size]
    """
    B, S, state = x.shape
    Be, T, He = embedding.shape
    assert Be == B, "batch mismatch between x and embedding"

    # Pad S / T to multiples of 8 so the in-kernel (rows,Hp)<->(nb,S,Hp) reshapes
    # stay on (8,128) tile boundaries (no per-layer relayout copies).
    S_pad = _round_up(S, 8)
    T_pad = _round_up(T, 8)
    if S_pad != S:
        x = jnp.pad(x, ((0, 0), (0, S_pad - S), (0, 0)))
    if T_pad != T:
        embedding = jnp.pad(embedding, ((0, 0), (0, T_pad - T), (0, 0)))

    Hp = packed["w_in"].shape[1]
    HHp = packed["hw1"].shape[1]
    Rp = packed["hw2"].shape[1]
    L = packed["wq"].shape[0]
    M = B * S_pad
    N = B * T_pad

    # MXU-LHS-only operands -> ship as bf16 (half the DMA/VMEM, no per-layer cast).
    x2 = x.reshape(M, state).astype(jnp.bfloat16)
    emb2 = embedding.reshape(N, He).astype(jnp.bfloat16)

    # Regime choice:
    #  * small M: weight-stream (HBM) bound -> one row tile, no re-fetch of the
    #    layer weights; raise `weight_buffers` to 3 if a trace shows exposed DMA.
    #  * large M: compute bound -> row-tile over whole batch elements (~256 rows
    #    for the 256-wide v6e/v7x MXU), "parallel" axis feeds both v7x cores and
    #    bounds the h/x/out VMEM footprint.
    if M >= 512 and B > 1:
        nb = min(B, max(1, -(-256 // S_pad)))
        while B % nb:
            nb -= 1
    else:
        nb = B
    R = B // nb
    rows_q = nb * S_pad
    rows_kv = nb * T_pad

    one_buf = 1 if use_buffer_hints else None                  # grid-invariant
    row_buf = 1 if (use_buffer_hints and R == 1) else None     # row-tiled operands
    w_buf = weight_buffers if (use_buffer_hints and weight_buffers != 2) else None

    row_map = lambda r, l: (r, 0)         # x / emb / out: changes with the row tile
    fixed_map = lambda r, l: (0, 0)       # resident across the whole grid
    layer_map = lambda r, l: (l, 0, 0)    # per-layer weight block (pipelined)
    sq = pl.Squeezed()

    kernel = partial(_fused_decoder_kernel, batch=nb, q_len=S_pad,
                     kv_len=T_pad, kv_valid=T, hidden_pad=Hp)

    vmem_limit = _pick_vmem_limit(
        _estimate_vmem_bytes(nb, S_pad, T_pad, state, He, Hp, HHp, Rp,
                             weight_buffers, 1 if R == 1 else 2))

    out = pl.pallas_call(
        kernel,
        out_shape=jax.ShapeDtypeStruct((M, Rp), jnp.float32),
        grid=(R, L),
        in_specs=[
            _spec((rows_q, state), row_map, row_buf),        # x (bf16)
            _spec((rows_kv, He), row_map, row_buf),          # embedding (bf16)
            _spec((state, Hp), fixed_map, one_buf),          # w_in
            _spec((1, Hp), fixed_map, one_buf),              # b_in
            _spec((sq, Hp, Hp), layer_map, w_buf),           # wq (scale folded)
            _spec((sq, 1, Hp), layer_map, w_buf),            # bq
            _spec((sq, He, 2 * Hp), layer_map, w_buf),       # wkv (concat K|V)
            _spec((sq, 1, 2 * Hp), layer_map, w_buf),        # bkv
            _spec((sq, Hp, Hp), layer_map, w_buf),           # wo
            _spec((sq, 1, Hp), layer_map, w_buf),            # bo
            _spec((sq, Hp, Hp), layer_map, w_buf),           # wf1
            _spec((sq, 1, Hp), layer_map, w_buf),            # bf1
            _spec((sq, Hp, Hp), layer_map, w_buf),           # wf2
            _spec((sq, 1, Hp), layer_map, w_buf),            # bf2
            _spec((Hp, HHp), fixed_map, one_buf),            # head w1
            _spec((1, HHp), fixed_map, one_buf),             # head b1
            _spec((HHp, Rp), fixed_map, one_buf),            # head w2
            _spec((1, Rp), fixed_map, one_buf),              # head b2
        ],
        out_specs=_spec((rows_q, Rp), row_map, row_buf),     # lane-dense output
        scratch_shapes=[pltpu.VMEM((rows_q, Hp), jnp.float32)],   # resident h
        compiler_params=pltpu.CompilerParams(
            dimension_semantics=("parallel", "arbitrary"),
            vmem_limit_bytes=vmem_limit,
        ),
    )(x2, emb2,
      packed["w_in"], packed["b_in"],
      packed["wq"], packed["bq"], packed["wkv"], packed["bkv"],
      packed["wo"], packed["bo"],
      packed["wf1"], packed["bf1"], packed["wf2"], packed["bf2"],
      packed["hw1"], packed["hb1"], packed["hw2"], packed["hb2"])

    return out.reshape(B, S_pad, Rp)[:, :S, :res_size]


# ----------------------------------------------------------------------------
# Demo
# ----------------------------------------------------------------------------

if __name__ == "__main__":
    B, S, T = 2, 8, 8
    state_size = 16
    hidden_size = 32
    head_hidden_size = 32
    res_size = 8
    decoder_layers = 2

    key = jax.random.PRNGKey(0)
    kx, kemb, kparams = jax.random.split(key, 3)

    x = jax.random.normal(kx, (B, S, state_size), dtype=jnp.float32)
    embedding = jax.random.normal(kemb, (B, T, hidden_size), dtype=jnp.float32)

    params = init_params(kparams, state_size, hidden_size, head_hidden_size,
                         res_size, decoder_layers)
    packed = pack_params(params, hidden_size)

    def run(use_buffer_hints):
        fwd = jax.jit(partial(pack_decoder_forward, res_size=res_size,
                              use_buffer_hints=use_buffer_hints))
        return jax.block_until_ready(fwd(packed, x, embedding))

    try:
        out = run(True)
    except Exception:
        # Portability guard: on jax builds without per-operand pipeline_mode
        # support, fall back to default double-buffering (identical semantics).
        out = run(False)

    assert out.shape == (B, S, res_size), out.shape
    assert jnp.isfinite(out).all()
    print("KERNEL_OK")
</pallas_src>

<mosaic_0001>
module attributes {stable_mosaic.version = 11 : i64} {
  func.func @_fused_decoder_kernel(%arg0: i32, %arg1: i32, %arg2: memref<16x16xbf16, #tpu.memory_space<vmem>>, %arg3: memref<16x32xbf16, #tpu.memory_space<vmem>>, %arg4: memref<16x128xbf16, #tpu.memory_space<vmem>>, %arg5: memref<1x128xf32, #tpu.memory_space<vmem>>, %arg6: memref<1x128x128xbf16, #tpu.memory_space<vmem>>, %arg7: memref<1x1x128xf32, #tpu.memory_space<vmem>>, %arg8: memref<1x32x256xbf16, #tpu.memory_space<vmem>>, %arg9: memref<1x1x256xf32, #tpu.memory_space<vmem>>, %arg10: memref<1x128x128xbf16, #tpu.memory_space<vmem>>, %arg11: memref<1x1x128xf32, #tpu.memory_space<vmem>>, %arg12: memref<1x128x128xbf16, #tpu.memory_space<vmem>>, %arg13: memref<1x1x128xf32, #tpu.memory_space<vmem>>, %arg14: memref<1x128x128xbf16, #tpu.memory_space<vmem>>, %arg15: memref<1x1x128xf32, #tpu.memory_space<vmem>>, %arg16: memref<128x128xbf16, #tpu.memory_space<vmem>>, %arg17: memref<1x128xf32, #tpu.memory_space<vmem>>, %arg18: memref<128x128xbf16, #tpu.memory_space<vmem>>, %arg19: memref<1x128xf32, #tpu.memory_space<vmem>>, %arg20: memref<16x128xf32, #tpu.memory_space<vmem>>, %arg21: memref<16x128xf32, #tpu.memory_space<vmem>>) attributes {dimension_semantics = [#tpu.dimension_semantics<parallel>, #tpu.dimension_semantics<arbitrary>], iteration_bounds = array<i64: 1, 2>, scalar_prefetch = 0 : i64, scratch_operands = 1 : i64, tpu.core_type = #tpu.core_type<tc>, window_params = [{pipeline_mode = #tpu.pipeline_mode<synchronous>, transform_indices = @transform_0, window_bounds = array<i64: 16, 16>}, {pipeline_mode = #tpu.pipeline_mode<synchronous>, transform_indices = @transform_1, window_bounds = array<i64: 16, 32>}, {pipeline_mode = #tpu.pipeline_mode<synchronous>, transform_indices = @transform_2, window_bounds = array<i64: 16, 128>}, {pipeline_mode = #tpu.pipeline_mode<synchronous>, transform_indices = @transform_3, window_bounds = array<i64: 1, 128>}, {transform_indices = @transform_4, window_bounds = array<i64: 1, 128, 128>}, {transform_indices = @transform_5, window_bounds = array<i64: 1, 1, 128>}, {transform_indices = @transform_6, window_bounds = array<i64: 1, 32, 256>}, {transform_indices = @transform_7, window_bounds = array<i64: 1, 1, 256>}, {transform_indices = @transform_8, window_bounds = array<i64: 1, 128, 128>}, {transform_indices = @transform_9, window_bounds = array<i64: 1, 1, 128>}, {transform_indices = @transform_10, window_bounds = array<i64: 1, 128, 128>}, {transform_indices = @transform_11, window_bounds = array<i64: 1, 1, 128>}, {transform_indices = @transform_12, window_bounds = array<i64: 1, 128, 128>}, {transform_indices = @transform_13, window_bounds = array<i64: 1, 1, 128>}, {pipeline_mode = #tpu.pipeline_mode<synchronous>, transform_indices = @transform_14, window_bounds = array<i64: 128, 128>}, {pipeline_mode = #tpu.pipeline_mode<synchronous>, transform_indices = @transform_15, window_bounds = array<i64: 1, 128>}, {pipeline_mode = #tpu.pipeline_mode<synchronous>, transform_indices = @transform_16, window_bounds = array<i64: 128, 128>}, {pipeline_mode = #tpu.pipeline_mode<synchronous>, transform_indices = @transform_17, window_bounds = array<i64: 1, 128>}, {pipeline_mode = #tpu.pipeline_mode<synchronous>, transform_indices = @transform_18, window_bounds = array<i64: 16, 128>}]} {
    %c0_i32 = arith.constant 0 : i32
    %0 = arith.cmpi eq, %arg1, %c0_i32 : i32
    %1 = arith.extui %0 : i1 to i32
    %c0_i32_0 = arith.constant 0 : i32
    %2 = arith.cmpi ne, %1, %c0_i32_0 : i32
    scf.if %2 {
      %c0_46 = arith.constant 0 : index
      %c0_47 = arith.constant 0 : index
      %73 = vector.load %arg2[%c0_46, %c0_47] : memref<16x16xbf16, #tpu.memory_space<vmem>>, vector<16x16xbf16>
      %c0_48 = arith.constant 0 : index
      %c0_49 = arith.constant 0 : index
      %74 = vector.load %arg4[%c0_48, %c0_49] : memref<16x128xbf16, #tpu.memory_space<vmem>>, vector<16x128xbf16>
      %cst_50 = arith.constant dense<0.000000e+00> : vector<16x128xf32>
      %75 = tpu.matmul %73, %74, %cst_50 {dimension_numbers = #tpu.dot_dimension_numbers<[1], [0], [0], [1], [0, 0, 1, 1], [], []>} : vector<16x16xbf16>, vector<16x128xbf16>, vector<16x128xf32> -> vector<16x128xf32>
      %c0_51 = arith.constant 0 : index
      %c0_52 = arith.constant 0 : index
      %76 = vector.load %arg5[%c0_51, %c0_52] : memref<1x128xf32, #tpu.memory_space<vmem>>, vector<1x128xf32>
      %77 = vector.broadcast %76 : vector<1x128xf32> to vector<16x128xf32>
      %78 = arith.addf %75, %77 : vector<16x128xf32>
      %c0_53 = arith.constant 0 : index
      %c0_54 = arith.constant 0 : index
      %79 = vector.load %arg21[%c0_53, %c0_54] : memref<16x128xf32, #tpu.memory_space<vmem>>, vector<16x128xf32>
      tpu.vector_store %arg21[%c0_53, %c0_54], %78 {strides = array<i32>} : memref<16x128xf32, #tpu.memory_space<vmem>>, vector<16x128xf32>,
    } else {
    }
    %c0 = arith.constant 0 : index
    %c0_1 = arith.constant 0 : index
    %3 = vector.load %arg21[%c0, %c0_1] : memref<16x128xf32, #tpu.memory_space<vmem>>, vector<16x128xf32>
    %c0_2 = arith.constant 0 : index
    %c0_3 = arith.constant 0 : index
    %c0_4 = arith.constant 0 : index
    %4 = vector.load %arg6[%c0_2, %c0_3, %c0_4] : memref<1x128x128xbf16, #tpu.memory_space<vmem>>, vector<1x128x128xbf16>
    %5 = vector.shape_cast %4 : vector<1x128x128xbf16> to vector<128x128xbf16>
    %6 = arith.truncf %3 : vector<16x128xf32> to vector<16x128xbf16>
    %cst = arith.constant dense<0.000000e+00> : vector<16x128xf32>
    %7 = tpu.matmul %6, %5, %cst {dimension_numbers = #tpu.dot_dimension_numbers<[1], [0], [0], [1], [0, 0, 1, 1], [], []>} : vector<16x128xbf16>, vector<128x128xbf16>, vector<16x128xf32> -> vector<16x128xf32>
    %c0_5 = arith.constant 0 : index
    %c0_6 = arith.constant 0 : index
    %c0_7 = arith.constant 0 : index
    %8 = vector.load %arg7[%c0_5, %c0_6, %c0_7] : memref<1x1x128xf32, #tpu.memory_space<vmem>>, vector<1x1x128xf32>
    %9 = vector.shape_cast %8 : vector<1x1x128xf32> to vector<1x128xf32>
    %10 = vector.broadcast %9 : vector<1x128xf32> to vector<16x128xf32>
    %11 = arith.addf %7, %10 : vector<16x128xf32>
    %c0_8 = arith.constant 0 : index
    %c0_9 = arith.constant 0 : index
    %12 = vector.load %arg3[%c0_8, %c0_9] : memref<16x32xbf16, #tpu.memory_space<vmem>>, vector<16x32xbf16>
    %c0_10 = arith.constant 0 : index
    %c0_11 = arith.constant 0 : index
    %c0_12 = arith.constant 0 : index
    %13 = vector.load %arg8[%c0_10, %c0_11, %c0_12] : memref<1x32x256xbf16, #tpu.memory_space<vmem>>, vector<1x32x256xbf16>
    %14 = vector.shape_cast %13 : vector<1x32x256xbf16> to vector<32x256xbf16>
    %cst_13 = arith.constant dense<0.000000e+00> : vector<16x256xf32>
    %15 = tpu.matmul %12, %14, %cst_13 {dimension_numbers = #tpu.dot_dimension_numbers<[1], [0], [0], [1], [0, 0, 1, 1], [], []>} : vector<16x32xbf16>, vector<32x256xbf16>, vector<16x256xf32> -> vector<16x256xf32>
    %c0_14 = arith.constant 0 : index
    %c0_15 = arith.constant 0 : index
    %c0_16 = arith.constant 0 : index
    %16 = vector.load %arg9[%c0_14, %c0_15, %c0_16] : memref<1x1x256xf32, #tpu.memory_space<vmem>>, vector<1x1x256xf32>
    %17 = vector.shape_cast %16 : vector<1x1x256xf32> to vector<1x256xf32>
    %18 = vector.broadcast %17 : vector<1x256xf32> to vector<16x256xf32>
    %19 = arith.addf %15, %18 : vector<16x256xf32>
    %20 = vector.shape_cast %11 : vector<16x128xf32> to vector<2x8x128xf32>
    %21 = vector.shape_cast %19 : vector<16x256xf32> to vector<2x8x256xf32>
    %22 = vector.extract_strided_slice %21 {offsets = [0, 0, 0], sizes = [2, 8, 128], strides = [1, 1, 1]} : vector<2x8x256xf32> to vector<2x8x128xf32>
    %23 = vector.extract_strided_slice %21 {offsets = [0, 0, 128], sizes = [2, 8, 128], strides = [1, 1, 1]} : vector<2x8x256xf32> to vector<2x8x128xf32>
    %24 = arith.truncf %20 : vector<2x8x128xf32> to vector<2x8x128xbf16>
    %25 = arith.truncf %22 : vector<2x8x128xf32> to vector<2x8x128xbf16>
    "tpu.trace_start"() <{level = 10 : i32, message = "bqh,bkh->bqk"}> : () -> ()
    %cst_17 = arith.constant dense<0.000000e+00> : vector<2x8x8xf32>
    %26 = tpu.matmul %24, %25, %cst_17 {dimension_numbers = #tpu.dot_dimension_numbers<[2], [2], [1], [1], [0, 0, 0, 1, 1, 1], [0], [0]>} : vector<2x8x128xbf16>, vector<2x8x128xbf16>, vector<2x8x8xf32> -> vector<2x8x8xf32>
    "tpu.trace_stop"() : () -> ()
    %cst_18 = arith.constant dense<0xFF800000> : vector<2x8xf32>
    %27 = vector.multi_reduction <maximumf>, %26, %cst_18 [2] : vector<2x8x8xf32> to vector<2x8xf32>
    %28 = vector.shape_cast %27 : vector<2x8xf32> to vector<2x8x1xf32>
    %29 = vector.broadcast %28 : vector<2x8x1xf32> to vector<2x8x8xf32>
    %30 = arith.subf %26, %29 : vector<2x8x8xf32>
    %31 = math.exp %30 : vector<2x8x8xf32>
    %cst_19 = arith.constant dense<0.000000e+00> : vector<2x8xf32>
    %32 = vector.multi_reduction <add>, %31, %cst_19 [2] : vector<2x8x8xf32> to vector<2x8xf32>
    %33 = vector.shape_cast %32 : vector<2x8xf32> to vector<2x8x1xf32>
    %34 = tpu.reciprocal %33 {approx = true} : vector<2x8x1xf32> -> vector<2x8x1xf32>
    %35 = vector.broadcast %34 : vector<2x8x1xf32> to vector<2x8x8xf32>
    %36 = arith.mulf %31, %35 : vector<2x8x8xf32>
    %37 = arith.truncf %36 : vector<2x8x8xf32> to vector<2x8x8xbf16>
    %38 = arith.truncf %23 : vector<2x8x128xf32> to vector<2x8x128xbf16>
    "tpu.trace_start"() <{level = 10 : i32, message = "bqk,bkh->bqh"}> : () -> ()
    %cst_20 = arith.constant dense<0.000000e+00> : vector<2x8x128xf32>
    %39 = tpu.matmul %37, %38, %cst_20 {dimension_numbers = #tpu.dot_dimension_numbers<[2], [1], [1], [2], [0, 0, 0, 1, 1, 2], [0], [0]>} : vector<2x8x8xbf16>, vector<2x8x128xbf16>, vector<2x8x128xf32> -> vector<2x8x128xf32>
    "tpu.trace_stop"() : () -> ()
    %40 = vector.shape_cast %39 : vector<2x8x128xf32> to vector<16x128xf32>
    %c0_21 = arith.constant 0 : index
    %c0_22 = arith.constant 0 : index
    %c0_23 = arith.constant 0 : index
    %41 = vector.load %arg10[%c0_21, %c0_22, %c0_23] : memref<1x128x128xbf16, #tpu.memory_space<vmem>>, vector<1x128x128xbf16>
    %42 = vector.shape_cast %41 : vector<1x128x128xbf16> to vector<128x128xbf16>
    %43 = arith.truncf %40 : vector<16x128xf32> to vector<16x128xbf16>
    %cst_24 = arith.constant dense<0.000000e+00> : vector<16x128xf32>
    %44 = tpu.matmul %43, %42, %cst_24 {dimension_numbers = #tpu.dot_dimension_numbers<[1], [0], [0], [1], [0, 0, 1, 1], [], []>} : vector<16x128xbf16>, vector<128x128xbf16>, vector<16x128xf32> -> vector<16x128xf32>
    %c0_25 = arith.constant 0 : index
    %c0_26 = arith.constant 0 : index
    %c0_27 = arith.constant 0 : index
    %45 = vector.load %arg11[%c0_25, %c0_26, %c0_27] : memref<1x1x128xf32, #tpu.memory_space<vmem>>, vector<1x1x128xf32>
    %46 = vector.shape_cast %45 : vector<1x1x128xf32> to vector<1x128xf32>
    %47 = vector.broadcast %46 : vector<1x128xf32> to vector<16x128xf32>
    %48 = arith.addf %44, %47 : vector<16x128xf32>
    %49 = arith.addf %3, %48 : vector<16x128xf32>
    %c0_28 = arith.constant 0 : index
    %c0_29 = arith.constant 0 : index
    %c0_30 = arith.constant 0 : index
    %50 = vector.load %arg12[%c0_28, %c0_29, %c0_30] : memref<1x128x128xbf16, #tpu.memory_space<vmem>>, vector<1x128x128xbf16>
    %51 = vector.shape_cast %50 : vector<1x128x128xbf16> to vector<128x128xbf16>
    %52 = arith.truncf %49 : vector<16x128xf32> to vector<16x128xbf16>
    %cst_31 = arith.constant dense<0.000000e+00> : vector<16x128xf32>
    %53 = tpu.matmul %52, %51, %cst_31 {dimension_numbers = #tpu.dot_dimension_numbers<[1], [0], [0], [1], [0, 0, 1, 1], [], []>} : vector<16x128xbf16>, vector<128x128xbf16>, vector<16x128xf32> -> vector<16x128xf32>
    %c0_32 = arith.constant 0 : index
    %c0_33 = arith.constant 0 : index
    %c0_34 = arith.constant 0 : index
    %54 = vector.load %arg13[%c0_32, %c0_33, %c0_34] : memref<1x1x128xf32, #tpu.memory_space<vmem>>, vector<1x1x128xf32>
    %55 = vector.shape_cast %54 : vector<1x1x128xf32> to vector<1x128xf32>
    %56 = vector.broadcast %55 : vector<1x128xf32> to vector<16x128xf32>
    %57 = arith.addf %53, %56 : vector<16x128xf32>
    %cst_35 = arith.constant 0.000000e+00 : f32
    %58 = vector.broadcast %cst_35 : f32 to vector<16x128xf32>
    %59 = arith.maximumf %57, %58 : vector<16x128xf32>
    %c0_36 = arith.constant 0 : index
    %c0_37 = arith.constant 0 : index
    %c0_38 = arith.constant 0 : index
    %60 = vector.load %arg14[%c0_36, %c0_37, %c0_38] : memref<1x128x128xbf16, #tpu.memory_space<vmem>>, vector<1x128x128xbf16>
    %61 = vector.shape_cast %60 : vector<1x128x128xbf16> to vector<128x128xbf16>
    %62 = arith.truncf %59 : vector<16x128xf32> to vector<16x128xbf16>
    %cst_39 = arith.constant dense<0.000000e+00> : vector<16x128xf32>
    %63 = tpu.matmul %62, %61, %cst_39 {dimension_numbers = #tpu.dot_dimension_numbers<[1], [0], [0], [1], [0, 0, 1, 1], [], []>} : vector<16x128xbf16>, vector<128x128xbf16>, vector<16x128xf32> -> vector<16x128xf32>
    %c0_40 = arith.constant 0 : index
    %c0_41 = arith.constant 0 : index
    %c0_42 = arith.constant 0 : index
    %64 = vector.load %arg15[%c0_40, %c0_41, %c0_42] : memref<1x1x128xf32, #tpu.memory_space<vmem>>, vector<1x1x128xf32>
    %65 = vector.shape_cast %64 : vector<1x1x128xf32> to vector<1x128xf32>
    %66 = vector.broadcast %65 : vector<1x128xf32> to vector<16x128xf32>
    %67 = arith.addf %63, %66 : vector<16x128xf32>
    %68 = arith.addf %49, %67 : vector<16x128xf32>
    %c0_43 = arith.constant 0 : index
    %c0_44 = arith.constant 0 : index
    %69 = vector.load %arg21[%c0_43, %c0_44] : memref<16x128xf32, #tpu.memory_space<vmem>>, vector<16x128xf32>
    tpu.vector_store %arg21[%c0_43, %c0_44], %68 {strides = array<i32>} : memref<16x128xf32, #tpu.memory_space<vmem>>, vector<16x128xf32>,
    %c1_i32 = arith.constant 1 : i32
    %70 = arith.cmpi eq, %arg1, %c1_i32 : i32
    %71 = arith.extui %70 : i1 to i32
    %c0_i32_45 = arith.constant 0 : i32
    %72 = arith.cmpi ne, %71, %c0_i32_45 : i32
    scf.if %72 {
      %c0_46 = arith.constant 0 : index
      %c0_47 = arith.constant 0 : index
      %73 = vector.load %arg16[%c0_46, %c0_47] : memref<128x128xbf16, #tpu.memory_space<vmem>>, vector<128x128xbf16>
      %74 = arith.truncf %68 : vector<16x128xf32> to vector<16x128xbf16>
      %cst_48 = arith.constant dense<0.000000e+00> : vector<16x128xf32>
      %75 = tpu.matmul %74, %73, %cst_48 {dimension_numbers = #tpu.dot_dimension_numbers<[1], [0], [0], [1], [0, 0, 1, 1], [], []>} : vector<16x128xbf16>, vector<128x128xbf16>, vector<16x128xf32> -> vector<16x128xf32>
      %c0_49 = arith.constant 0 : index
      %c0_50 = arith.constant 0 : index
      %76 = vector.load %arg17[%c0_49, %c0_50] : memref<1x128xf32, #tpu.memory_space<vmem>>, vector<1x128xf32>
      %77 = vector.broadcast %76 : vector<1x128xf32> to vector<16x128xf32>
      %78 = arith.addf %75, %77 : vector<16x128xf32>
      %cst_51 = arith.constant 0.000000e+00 : f32
      %79 = vector.broadcast %cst_51 : f32 to vector<16x128xf32>
      %80 = arith.maximumf %78, %79 : vector<16x128xf32>
      %c0_52 = arith.constant 0 : index
      %c0_53 = arith.constant 0 : index
      %81 = vector.load %arg18[%c0_52, %c0_53] : memref<128x128xbf16, #tpu.memory_space<vmem>>, vector<128x128xbf16>
      %82 = arith.truncf %80 : vector<16x128xf32> to vector<16x128xbf16>
      %cst_54 = arith.constant dense<0.000000e+00> : vector<16x128xf32>
      %83 = tpu.matmul %82, %81, %cst_54 {dimension_numbers = #tpu.dot_dimension_numbers<[1], [0], [0], [1], [0, 0, 1, 1], [], []>} : vector<16x128xbf16>, vector<128x128xbf16>, vector<16x128xf32> -> vector<16x128xf32>
      %c0_55 = arith.constant 0 : index
      %c0_56 = arith.constant 0 : index
      %84 = vector.load %arg19[%c0_55, %c0_56] : memref<1x128xf32, #tpu.memory_space<vmem>>, vector<1x128xf32>
      %85 = vector.broadcast %84 : vector<1x128xf32> to vector<16x128xf32>
      %86 = arith.addf %83, %85 : vector<16x128xf32>
      %c0_57 = arith.constant 0 : index
      %c0_58 = arith.constant 0 : index
      %87 = vector.load %arg20[%c0_57, %c0_58] : memref<16x128xf32, #tpu.memory_space<vmem>>, vector<16x128xf32>
      tpu.vector_store %arg20[%c0_57, %c0_58], %86 {strides = array<i32>} : memref<16x128xf32, #tpu.memory_space<vmem>>, vector<16x128xf32>,
    } else {
    }
    return
  }
  func.func @transform_0(%arg0: i32, %arg1: i32) -> (i32, i32) {
    %c0_i32 = arith.constant 0 : i32
    %c0_i32_0 = arith.constant 0 : i32
    return %arg0, %c0_i32 : i32, i32
  }
  func.func @transform_1(%arg0: i32, %arg1: i32) -> (i32, i32) {
    %c0_i32 = arith.constant 0 : i32
    %c0_i32_0 = arith.constant 0 : i32
    return %arg0, %c0_i32 : i32, i32
  }
  func.func @transform_2(%arg0: i32, %arg1: i32) -> (i32, i32) {
    %c0_i32 = arith.constant 0 : i32
    %c0_i32_0 = arith.constant 0 : i32
    %c0_i32_1 = arith.constant 0 : i32
    return %c0_i32, %c0_i32_0 : i32, i32
  }
  func.func @transform_3(%arg0: i32, %arg1: i32) -> (i32, i32) {
    %c0_i32 = arith.constant 0 : i32
    %c0_i32_0 = arith.constant 0 : i32
    %c0_i32_1 = arith.constant 0 : i32
    return %c0_i32, %c0_i32_0 : i32, i32
  }
  func.func @transform_4(%arg0: i32, %arg1: i32) -> (i32, i32, i32) {
    %c0_i32 = arith.constant 0 : i32
    %c0_i32_0 = arith.constant 0 : i32
    %c0_i32_1 = arith.constant 0 : i32
    return %arg1, %c0_i32, %c0_i32_0 : i32, i32, i32
  }
  func.func @transform_5(%arg0: i32, %arg1: i32) -> (i32, i32, i32) {
    %c0_i32 = arith.constant 0 : i32
    %c0_i32_0 = arith.constant 0 : i32
    %c0_i32_1 = arith.constant 0 : i32
    return %arg1, %c0_i32, %c0_i32_0 : i32, i32, i32
  }
  func.func @transform_6(%arg0: i32, %arg1: i32) -> (i32, i32, i32) {
    %c0_i32 = arith.constant 0 : i32
    %c0_i32_0 = arith.constant 0 : i32
    %c0_i32_1 = arith.constant 0 : i32
    return %arg1, %c0_i32, %c0_i32_0 : i32, i32, i32
  }
  func.func @transform_7(%arg0: i32, %arg1: i32) -> (i32, i32, i32) {
    %c0_i32 = arith.constant 0 : i32
    %c0_i32_0 = arith.constant 0 : i32
    %c0_i32_1 = arith.constant 0 : i32
    return %arg1, %c0_i32, %c0_i32_0 : i32, i32, i32
  }
  func.func @transform_8(%arg0: i32, %arg1: i32) -> (i32, i32, i32) {
    %c0_i32 = arith.constant 0 : i32
    %c0_i32_0 = arith.constant 0 : i32
    %c0_i32_1 = arith.constant 0 : i32
    return %arg1, %c0_i32, %c0_i32_0 : i32, i32, i32
  }
  func.func @transform_9(%arg0: i32, %arg1: i32) -> (i32, i32, i32) {
    %c0_i32 = arith.constant 0 : i32
    %c0_i32_0 = arith.constant 0 : i32
    %c0_i32_1 = arith.constant 0 : i32
    return %arg1, %c0_i32, %c0_i32_0 : i32, i32, i32
  }
  func.func @transform_10(%arg0: i32, %arg1: i32) -> (i32, i32, i32) {
    %c0_i32 = arith.constant 0 : i32
    %c0_i32_0 = arith.constant 0 : i32
    %c0_i32_1 = arith.constant 0 : i32
    return %arg1, %c0_i32, %c0_i32_0 : i32, i32, i32
  }
  func.func @transform_11(%arg0: i32, %arg1: i32) -> (i32, i32, i32) {
    %c0_i32 = arith.constant 0 : i32
    %c0_i32_0 = arith.constant 0 : i32
    %c0_i32_1 = arith.constant 0 : i32
    return %arg1, %c0_i32, %c0_i32_0 : i32, i32, i32
  }
  func.func @transform_12(%arg0: i32, %arg1: i32) -> (i32, i32, i32) {
    %c0_i32 = arith.constant 0 : i32
    %c0_i32_0 = arith.constant 0 : i32
    %c0_i32_1 = arith.constant 0 : i32
    return %arg1, %c0_i32, %c0_i32_0 : i32, i32, i32
  }
  func.func @transform_13(%arg0: i32, %arg1: i32) -> (i32, i32, i32) {
    %c0_i32 = arith.constant 0 : i32
    %c0_i32_0 = arith.constant 0 : i32
    %c0_i32_1 = arith.constant 0 : i32
    return %arg1, %c0_i32, %c0_i32_0 : i32, i32, i32
  }
  func.func @transform_14(%arg0: i32, %arg1: i32) -> (i32, i32) {
    %c0_i32 = arith.constant 0 : i32
    %c0_i32_0 = arith.constant 0 : i32
    %c0_i32_1 = arith.constant 0 : i32
    return %c0_i32, %c0_i32_0 : i32, i32
  }
  func.func @transform_15(%arg0: i32, %arg1: i32) -> (i32, i32) {
    %c0_i32 = arith.constant 0 : i32
    %c0_i32_0 = arith.constant 0 : i32
    %c0_i32_1 = arith.constant 0 : i32
    return %c0_i32, %c0_i32_0 : i32, i32
  }
  func.func @transform_16(%arg0: i32, %arg1: i32) -> (i32, i32) {
    %c0_i32 = arith.constant 0 : i32
    %c0_i32_0 = arith.constant 0 : i32
    %c0_i32_1 = arith.constant 0 : i32
    return %c0_i32, %c0_i32_0 : i32, i32
  }
  func.func @transform_17(%arg0: i32, %arg1: i32) -> (i32, i32) {
    %c0_i32 = arith.constant 0 : i32
    %c0_i32_0 = arith.constant 0 : i32
    %c0_i32_1 = arith.constant 0 : i32
    return %c0_i32, %c0_i32_0 : i32, i32
  }
  func.func @transform_18(%arg0: i32, %arg1: i32) -> (i32, i32) {
    %c0_i32 = arith.constant 0 : i32
    %c0_i32_0 = arith.constant 0 : i32
    return %arg0, %c0_i32 : i32, i32
  }
}

module attributes {stable_mosaic.version = 11 : i64} {
  func.func @_fused_decoder_kernel(%arg0: i32, %arg1: i32, %arg2: memref<16x16xbf16, #tpu.memory_space<vmem>>, %arg3: memref<16x32xbf16, #tpu.memory_space<vmem>>, %arg4: memref<16x128xbf16, #tpu.memory_space<vmem>>, %arg5: memref<1x128xf32, #tpu.memory_space<vmem>>, %arg6: memref<1x128x128xbf16, #tpu.memory_space<vmem>>, %arg7: memref<1x1x128xf32, #tpu.memory_space<vmem>>, %arg8: memref<1x32x256xbf16, #tpu.memory_space<vmem>>, %arg9: memref<1x1x256xf32, #tpu.memory_space<vmem>>, %arg10: memref<1x128x128xbf16, #tpu.memory_space<vmem>>, %arg11: memref<1x1x128xf32, #tpu.memory_space<vmem>>, %arg12: memref<1x128x128xbf16, #tpu.memory_space<vmem>>, %arg13: memref<1x1x128xf32, #tpu.memory_space<vmem>>, %arg14: memref<1x128x128xbf16, #tpu.memory_space<vmem>>, %arg15: memref<1x1x128xf32, #tpu.memory_space<vmem>>, %arg16: memref<128x128xbf16, #tpu.memory_space<vmem>>, %arg17: memref<1x128xf32, #tpu.memory_space<vmem>>, %arg18: memref<128x128xbf16, #tpu.memory_space<vmem>>, %arg19: memref<1x128xf32, #tpu.memory_space<vmem>>, %arg20: memref<16x128xf32, #tpu.memory_space<vmem>>, %arg21: memref<16x128xf32, #tpu.memory_space<vmem>>) attributes {dimension_semantics = [#tpu.dimension_semantics<parallel>, #tpu.dimension_semantics<arbitrary>], iteration_bounds = array<i64: 1, 2>, scalar_prefetch = 0 : i64, scratch_operands = 1 : i64, tpu.core_type = #tpu.core_type<tc>, window_params = [{transform_indices = @transform_0, window_bounds = array<i64: 16, 16>}, {transform_indices = @transform_1, window_bounds = array<i64: 16, 32>}, {pipeline_mode = #tpu.pipeline_mode<synchronous>, transform_indices = @transform_2, window_bounds = array<i64: 16, 128>}, {pipeline_mode = #tpu.pipeline_mode<synchronous>, transform_indices = @transform_3, window_bounds = array<i64: 1, 128>}, {transform_indices = @transform_4, window_bounds = array<i64: 1, 128, 128>}, {transform_indices = @transform_5, window_bounds = array<i64: 1, 1, 128>}, {transform_indices = @transform_6, window_bounds = array<i64: 1, 32, 256>}, {transform_indices = @transform_7, window_bounds = array<i64: 1, 1, 256>}, {transform_indices = @transform_8, window_bounds = array<i64: 1, 128, 128>}, {transform_indices = @transform_9, window_bounds = array<i64: 1, 1, 128>}, {transform_indices = @transform_10, window_bounds = array<i64: 1, 128, 128>}, {transform_indices = @transform_11, window_bounds = array<i64: 1, 1, 128>}, {transform_indices = @transform_12, window_bounds = array<i64: 1, 128, 128>}, {transform_indices = @transform_13, window_bounds = array<i64: 1, 1, 128>}, {pipeline_mode = #tpu.pipeline_mode<synchronous>, transform_indices = @transform_14, window_bounds = array<i64: 128, 128>}, {pipeline_mode = #tpu.pipeline_mode<synchronous>, transform_indices = @transform_15, window_bounds = array<i64: 1, 128>}, {pipeline_mode = #tpu.pipeline_mode<synchronous>, transform_indices = @transform_16, window_bounds = array<i64: 128, 128>}, {pipeline_mode = #tpu.pipeline_mode<synchronous>, transform_indices = @transform_17, window_bounds = array<i64: 1, 128>}, {transform_indices = @transform_18, window_bounds = array<i64: 16, 128>}]} {
    %c0_i32 = arith.constant 0 : i32
    %0 = arith.cmpi eq, %arg1, %c0_i32 : i32
    %1 = arith.extui %0 : i1 to i32
    %c0_i32_0 = arith.constant 0 : i32
    %2 = arith.cmpi ne, %1, %c0_i32_0 : i32
    scf.if %2 {
      %c0_46 = arith.constant 0 : index
      %c0_47 = arith.constant 0 : index
      %73 = vector.load %arg2[%c0_46, %c0_47] : memref<16x16xbf16, #tpu.memory_space<vmem>>, vector<16x16xbf16>
      %c0_48 = arith.constant 0 : index
      %c0_49 = arith.constant 0 : index
      %74 = vector.load %arg4[%c0_48, %c0_49] : memref<16x128xbf16, #tpu.memory_space<vmem>>, vector<16x128xbf16>
      %cst_50 = arith.constant dense<0.000000e+00> : vector<16x128xf32>
      %75 = tpu.matmul %73, %74, %cst_50 {dimension_numbers = #tpu.dot_dimension_numbers<[1], [0], [0], [1], [0, 0, 1, 1], [], []>} : vector<16x16xbf16>, vector<16x128xbf16>, vector<16x128xf32> -> vector<16x128xf32>
      %c0_51 = arith.constant 0 : index
      %c0_52 = arith.constant 0 : index
      %76 = vector.load %arg5[%c0_51, %c0_52] : memref<1x128xf32, #tpu.memory_space<vmem>>, vector<1x128xf32>
      %77 = vector.broadcast %76 : vector<1x128xf32> to vector<16x128xf32>
      %78 = arith.addf %75, %77 : vector<16x128xf32>
      %c0_53 = arith.constant 0 : index
      %c0_54 = arith.constant 0 : index
      %79 = vector.load %arg21[%c0_53, %c0_54] : memref<16x128xf32, #tpu.memory_space<vmem>>, vector<16x128xf32>
      tpu.vector_store %arg21[%c0_53, %c0_54], %78 {strides = array<i32>} : memref<16x128xf32, #tpu.memory_space<vmem>>, vector<16x128xf32>,
    } else {
    }
    %c0 = arith.constant 0 : index
    %c0_1 = arith.constant 0 : index
    %3 = vector.load %arg21[%c0, %c0_1] : memref<16x128xf32, #tpu.memory_space<vmem>>, vector<16x128xf32>
    %c0_2 = arith.constant 0 : index
    %c0_3 = arith.constant 0 : index
    %c0_4 = arith.constant 0 : index
    %4 = vector.load %arg6[%c0_2, %c0_3, %c0_4] : memref<1x128x128xbf16, #tpu.memory_space<vmem>>, vector<1x128x128xbf16>
    %5 = vector.shape_cast %4 : vector<1x128x128xbf16> to vector<128x128xbf16>
    %6 = arith.truncf %3 : vector<16x128xf32> to vector<16x128xbf16>
    %cst = arith.constant dense<0.000000e+00> : vector<16x128xf32>
    %7 = tpu.matmul %6, %5, %cst {dimension_numbers = #tpu.dot_dimension_numbers<[1], [0], [0], [1], [0, 0, 1, 1], [], []>} : vector<16x128xbf16>, vector<128x128xbf16>, vector<16x128xf32> -> vector<16x128xf32>
    %c0_5 = arith.constant 0 : index
    %c0_6 = arith.constant 0 : index
    %c0_7 = arith.constant 0 : index
    %8 = vector.load %arg7[%c0_5, %c0_6, %c0_7] : memref<1x1x128xf32, #tpu.memory_space<vmem>>, vector<1x1x128xf32>
    %9 = vector.shape_cast %8 : vector<1x1x128xf32> to vector<1x128xf32>
    %10 = vector.broadcast %9 : vector<1x128xf32> to vector<16x128xf32>
    %11 = arith.addf %7, %10 : vector<16x128xf32>
    %c0_8 = arith.constant 0 : index
    %c0_9 = arith.constant 0 : index
    %12 = vector.load %arg3[%c0_8, %c0_9] : memref<16x32xbf16, #tpu.memory_space<vmem>>, vector<16x32xbf16>
    %c0_10 = arith.constant 0 : index
    %c0_11 = arith.constant 0 : index
    %c0_12 = arith.constant 0 : index
    %13 = vector.load %arg8[%c0_10, %c0_11, %c0_12] : memref<1x32x256xbf16, #tpu.memory_space<vmem>>, vector<1x32x256xbf16>
    %14 = vector.shape_cast %13 : vector<1x32x256xbf16> to vector<32x256xbf16>
    %cst_13 = arith.constant dense<0.000000e+00> : vector<16x256xf32>
    %15 = tpu.matmul %12, %14, %cst_13 {dimension_numbers = #tpu.dot_dimension_numbers<[1], [0], [0], [1], [0, 0, 1, 1], [], []>} : vector<16x32xbf16>, vector<32x256xbf16>, vector<16x256xf32> -> vector<16x256xf32>
    %c0_14 = arith.constant 0 : index
    %c0_15 = arith.constant 0 : index
    %c0_16 = arith.constant 0 : index
    %16 = vector.load %arg9[%c0_14, %c0_15, %c0_16] : memref<1x1x256xf32, #tpu.memory_space<vmem>>, vector<1x1x256xf32>
    %17 = vector.shape_cast %16 : vector<1x1x256xf32> to vector<1x256xf32>
    %18 = vector.broadcast %17 : vector<1x256xf32> to vector<16x256xf32>
    %19 = arith.addf %15, %18 : vector<16x256xf32>
    %20 = vector.shape_cast %11 : vector<16x128xf32> to vector<2x8x128xf32>
    %21 = vector.shape_cast %19 : vector<16x256xf32> to vector<2x8x256xf32>
    %22 = vector.extract_strided_slice %21 {offsets = [0, 0, 0], sizes = [2, 8, 128], strides = [1, 1, 1]} : vector<2x8x256xf32> to vector<2x8x128xf32>
    %23 = vector.extract_strided_slice %21 {offsets = [0, 0, 128], sizes = [2, 8, 128], strides = [1, 1, 1]} : vector<2x8x256xf32> to vector<2x8x128xf32>
    %24 = arith.truncf %20 : vector<2x8x128xf32> to vector<2x8x128xbf16>
    %25 = arith.truncf %22 : vector<2x8x128xf32> to vector<2x8x128xbf16>
    "tpu.trace_start"() <{level = 10 : i32, message = "bqh,bkh->bqk"}> : () -> ()
    %cst_17 = arith.constant dense<0.000000e+00> : vector<2x8x8xf32>
    %26 = tpu.matmul %24, %25, %cst_17 {dimension_numbers = #tpu.dot_dimension_numbers<[2], [2], [1], [1], [0, 0, 0, 1, 1, 1], [0], [0]>} : vector<2x8x128xbf16>, vector<2x8x128xbf16>, vector<2x8x8xf32> -> vector<2x8x8xf32>
    "tpu.trace_stop"() : () -> ()
    %cst_18 = arith.constant dense<0xFF800000> : vector<2x8xf32>
    %27 = vector.multi_reduction <maximumf>, %26, %cst_18 [2] : vector<2x8x8xf32> to vector<2x8xf32>
    %28 = vector.shape_cast %27 : vector<2x8xf32> to vector<2x8x1xf32>
    %29 = vector.broadcast %28 : vector<2x8x1xf32> to vector<2x8x8xf32>
    %30 = arith.subf %26, %29 : vector<2x8x8xf32>
    %31 = math.exp %30 : vector<2x8x8xf32>
    %cst_19 = arith.constant dense<0.000000e+00> : vector<2x8xf32>
    %32 = vector.multi_reduction <add>, %31, %cst_19 [2] : vector<2x8x8xf32> to vector<2x8xf32>
    %33 = vector.shape_cast %32 : vector<2x8xf32> to vector<2x8x1xf32>
    %34 = tpu.reciprocal %33 {approx = true} : vector<2x8x1xf32> -> vector<2x8x1xf32>
    %35 = vector.broadcast %34 : vector<2x8x1xf32> to vector<2x8x8xf32>
    %36 = arith.mulf %31, %35 : vector<2x8x8xf32>
    %37 = arith.truncf %36 : vector<2x8x8xf32> to vector<2x8x8xbf16>
    %38 = arith.truncf %23 : vector<2x8x128xf32> to vector<2x8x128xbf16>
    "tpu.trace_start"() <{level = 10 : i32, message = "bqk,bkh->bqh"}> : () -> ()
    %cst_20 = arith.constant dense<0.000000e+00> : vector<2x8x128xf32>
    %39 = tpu.matmul %37, %38, %cst_20 {dimension_numbers = #tpu.dot_dimension_numbers<[2], [1], [1], [2], [0, 0, 0, 1, 1, 2], [0], [0]>} : vector<2x8x8xbf16>, vector<2x8x128xbf16>, vector<2x8x128xf32> -> vector<2x8x128xf32>
    "tpu.trace_stop"() : () -> ()
    %40 = vector.shape_cast %39 : vector<2x8x128xf32> to vector<16x128xf32>
    %c0_21 = arith.constant 0 : index
    %c0_22 = arith.constant 0 : index
    %c0_23 = arith.constant 0 : index
    %41 = vector.load %arg10[%c0_21, %c0_22, %c0_23] : memref<1x128x128xbf16, #tpu.memory_space<vmem>>, vector<1x128x128xbf16>
    %42 = vector.shape_cast %41 : vector<1x128x128xbf16> to vector<128x128xbf16>
    %43 = arith.truncf %40 : vector<16x128xf32> to vector<16x128xbf16>
    %cst_24 = arith.constant dense<0.000000e+00> : vector<16x128xf32>
    %44 = tpu.matmul %43, %42, %cst_24 {dimension_numbers = #tpu.dot_dimension_numbers<[1], [0], [0], [1], [0, 0, 1, 1], [], []>} : vector<16x128xbf16>, vector<128x128xbf16>, vector<16x128xf32> -> vector<16x128xf32>
    %c0_25 = arith.constant 0 : index
    %c0_26 = arith.constant 0 : index
    %c0_27 = arith.constant 0 : index
    %45 = vector.load %arg11[%c0_25, %c0_26, %c0_27] : memref<1x1x128xf32, #tpu.memory_space<vmem>>, vector<1x1x128xf32>
    %46 = vector.shape_cast %45 : vector<1x1x128xf32> to vector<1x128xf32>
    %47 = vector.broadcast %46 : vector<1x128xf32> to vector<16x128xf32>
    %48 = arith.addf %44, %47 : vector<16x128xf32>
    %49 = arith.addf %3, %48 : vector<16x128xf32>
    %c0_28 = arith.constant 0 : index
    %c0_29 = arith.constant 0 : index
    %c0_30 = arith.constant 0 : index
    %50 = vector.load %arg12[%c0_28, %c0_29, %c0_30] : memref<1x128x128xbf16, #tpu.memory_space<vmem>>, vector<1x128x128xbf16>
    %51 = vector.shape_cast %50 : vector<1x128x128xbf16> to vector<128x128xbf16>
    %52 = arith.truncf %49 : vector<16x128xf32> to vector<16x128xbf16>
    %cst_31 = arith.constant dense<0.000000e+00> : vector<16x128xf32>
    %53 = tpu.matmul %52, %51, %cst_31 {dimension_numbers = #tpu.dot_dimension_numbers<[1], [0], [0], [1], [0, 0, 1, 1], [], []>} : vector<16x128xbf16>, vector<128x128xbf16>, vector<16x128xf32> -> vector<16x128xf32>
    %c0_32 = arith.constant 0 : index
    %c0_33 = arith.constant 0 : index
    %c0_34 = arith.constant 0 : index
    %54 = vector.load %arg13[%c0_32, %c0_33, %c0_34] : memref<1x1x128xf32, #tpu.memory_space<vmem>>, vector<1x1x128xf32>
    %55 = vector.shape_cast %54 : vector<1x1x128xf32> to vector<1x128xf32>
    %56 = vector.broadcast %55 : vector<1x128xf32> to vector<16x128xf32>
    %57 = arith.addf %53, %56 : vector<16x128xf32>
    %cst_35 = arith.constant 0.000000e+00 : f32
    %58 = vector.broadcast %cst_35 : f32 to vector<16x128xf32>
    %59 = arith.maximumf %57, %58 : vector<16x128xf32>
    %c0_36 = arith.constant 0 : index
    %c0_37 = arith.constant 0 : index
    %c0_38 = arith.constant 0 : index
    %60 = vector.load %arg14[%c0_36, %c0_37, %c0_38] : memref<1x128x128xbf16, #tpu.memory_space<vmem>>, vector<1x128x128xbf16>
    %61 = vector.shape_cast %60 : vector<1x128x128xbf16> to vector<128x128xbf16>
    %62 = arith.truncf %59 : vector<16x128xf32> to vector<16x128xbf16>
    %cst_39 = arith.constant dense<0.000000e+00> : vector<16x128xf32>
    %63 = tpu.matmul %62, %61, %cst_39 {dimension_numbers = #tpu.dot_dimension_numbers<[1], [0], [0], [1], [0, 0, 1, 1], [], []>} : vector<16x128xbf16>, vector<128x128xbf16>, vector<16x128xf32> -> vector<16x128xf32>
    %c0_40 = arith.constant 0 : index
    %c0_41 = arith.constant 0 : index
    %c0_42 = arith.constant 0 : index
    %64 = vector.load %arg15[%c0_40, %c0_41, %c0_42] : memref<1x1x128xf32, #tpu.memory_space<vmem>>, vector<1x1x128xf32>
    %65 = vector.shape_cast %64 : vector<1x1x128xf32> to vector<1x128xf32>
    %66 = vector.broadcast %65 : vector<1x128xf32> to vector<16x128xf32>
    %67 = arith.addf %63, %66 : vector<16x128xf32>
    %68 = arith.addf %49, %67 : vector<16x128xf32>
    %c0_43 = arith.constant 0 : index
    %c0_44 = arith.constant 0 : index
    %69 = vector.load %arg21[%c0_43, %c0_44] : memref<16x128xf32, #tpu.memory_space<vmem>>, vector<16x128xf32>
    tpu.vector_store %arg21[%c0_43, %c0_44], %68 {strides = array<i32>} : memref<16x128xf32, #tpu.memory_space<vmem>>, vector<16x128xf32>,
    %c1_i32 = arith.constant 1 : i32
    %70 = arith.cmpi eq, %arg1, %c1_i32 : i32
    %71 = arith.extui %70 : i1 to i32
    %c0_i32_45 = arith.constant 0 : i32
    %72 = arith.cmpi ne, %71, %c0_i32_45 : i32
    scf.if %72 {
      %c0_46 = arith.constant 0 : index
      %c0_47 = arith.constant 0 : index
      %73 = vector.load %arg16[%c0_46, %c0_47] : memref<128x128xbf16, #tpu.memory_space<vmem>>, vector<128x128xbf16>
      %74 = arith.truncf %68 : vector<16x128xf32> to vector<16x128xbf16>
      %cst_48 = arith.constant dense<0.000000e+00> : vector<16x128xf32>
      %75 = tpu.matmul %74, %73, %cst_48 {dimension_numbers = #tpu.dot_dimension_numbers<[1], [0], [0], [1], [0, 0, 1, 1], [], []>} : vector<16x128xbf16>, vector<128x128xbf16>, vector<16x128xf32> -> vector<16x128xf32>
      %c0_49 = arith.constant 0 : index
      %c0_50 = arith.constant 0 : index
      %76 = vector.load %arg17[%c0_49, %c0_50] : memref<1x128xf32, #tpu.memory_space<vmem>>, vector<1x128xf32>
      %77 = vector.broadcast %76 : vector<1x128xf32> to vector<16x128xf32>
      %78 = arith.addf %75, %77 : vector<16x128xf32>
      %cst_51 = arith.constant 0.000000e+00 : f32
      %79 = vector.broadcast %cst_51 : f32 to vector<16x128xf32>
      %80 = arith.maximumf %78, %79 : vector<16x128xf32>
      %c0_52 = arith.constant 0 : index
      %c0_53 = arith.constant 0 : index
      %81 = vector.load %arg18[%c0_52, %c0_53] : memref<128x128xbf16, #tpu.memory_space<vmem>>, vector<128x128xbf16>
      %82 = arith.truncf %80 : vector<16x128xf32> to vector<16x128xbf16>
      %cst_54 = arith.constant dense<0.000000e+00> : vector<16x128xf32>
      %83 = tpu.matmul %82, %81, %cst_54 {dimension_numbers = #tpu.dot_dimension_numbers<[1], [0], [0], [1], [0, 0, 1, 1], [], []>} : vector<16x128xbf16>, vector<128x128xbf16>, vector<16x128xf32> -> vector<16x128xf32>
      %c0_55 = arith.constant 0 : index
      %c0_56 = arith.constant 0 : index
      %84 = vector.load %arg19[%c0_55, %c0_56] : memref<1x128xf32, #tpu.memory_space<vmem>>, vector<1x128xf32>
      %85 = vector.broadcast %84 : vector<1x128xf32> to vector<16x128xf32>
      %86 = arith.addf %83, %85 : vector<16x128xf32>
      %c0_57 = arith.constant 0 : index
      %c0_58 = arith.constant 0 : index
      %87 = vector.load %arg20[%c0_57, %c0_58] : memref<16x128xf32, #tpu.memory_space<vmem>>, vector<16x128xf32>
      tpu.vector_store %arg20[%c0_57, %c0_58], %86 {strides = array<i32>} : memref<16x128xf32, #tpu.memory_space<vmem>>, vector<16x128xf32>,
    } else {
    }
    return
  }
  func.func @transform_0(%arg0: i32, %arg1: i32) -> (i32, i32) {
    %c0_i32 = arith.constant 0 : i32
    %c0_i32_0 = arith.constant 0 : i32
    return %arg0, %c0_i32 : i32, i32
  }
  func.func @transform_1(%arg0: i32, %arg1: i32) -> (i32, i32) {
    %c0_i32 = arith.constant 0 : i32
    %c0_i32_0 = arith.constant 0 : i32
    return %arg0, %c0_i32 : i32, i32
  }
  func.func @transform_2(%arg0: i32, %arg1: i32) -> (i32, i32) {
    %c0_i32 = arith.constant 0 : i32
    %c0_i32_0 = arith.constant 0 : i32
    %c0_i32_1 = arith.constant 0 : i32
    return %c0_i32, %c0_i32_0 : i32, i32
  }
  func.func @transform_3(%arg0: i32, %arg1: i32) -> (i32, i32) {
    %c0_i32 = arith.constant 0 : i32
    %c0_i32_0 = arith.constant 0 : i32
    %c0_i32_1 = arith.constant 0 : i32
    return %c0_i32, %c0_i32_0 : i32, i32
  }
  func.func @transform_4(%arg0: i32, %arg1: i32) -> (i32, i32, i32) {
    %c0_i32 = arith.constant 0 : i32
    %c0_i32_0 = arith.constant 0 : i32
    %c0_i32_1 = arith.constant 0 : i32
    return %arg1, %c0_i32, %c0_i32_0 : i32, i32, i32
  }
  func.func @transform_5(%arg0: i32, %arg1: i32) -> (i32, i32, i32) {
    %c0_i32 = arith.constant 0 : i32
    %c0_i32_0 = arith.constant 0 : i32
    %c0_i32_1 = arith.constant 0 : i32
    return %arg1, %c0_i32, %c0_i32_0 : i32, i32, i32
  }
  func.func @transform_6(%arg0: i32, %arg1: i32) -> (i32, i32, i32) {
    %c0_i32 = arith.constant 0 : i32
    %c0_i32_0 = arith.constant 0 : i32
    %c0_i32_1 = arith.constant 0 : i32
    return %arg1, %c0_i32, %c0_i32_0 : i32, i32, i32
  }
  func.func @transform_7(%arg0: i32, %arg1: i32) -> (i32, i32, i32) {
    %c0_i32 = arith.constant 0 : i32
    %c0_i32_0 = arith.constant 0 : i32
    %c0_i32_1 = arith.constant 0 : i32
    return %arg1, %c0_i32, %c0_i32_0 : i32, i32, i32
  }
  func.func @transform_8(%arg0: i32, %arg1: i32) -> (i32, i32, i32) {
    %c0_i32 = arith.constant 0 : i32
    %c0_i32_0 = arith.constant 0 : i32
    %c0_i32_1 = arith.constant 0 : i32
    return %arg1, %c0_i32, %c0_i32_0 : i32, i32, i32
  }
  func.func @transform_9(%arg0: i32, %arg1: i32) -> (i32, i32, i32) {
    %c0_i32 = arith.constant 0 : i32
    %c0_i32_0 = arith.constant 0 : i32
    %c0_i32_1 = arith.constant 0 : i32
    return %arg1, %c0_i32, %c0_i32_0 : i32, i32, i32
  }
  func.func @transform_10(%arg0: i32, %arg1: i32) -> (i32, i32, i32) {
    %c0_i32 = arith.constant 0 : i32
    %c0_i32_0 = arith.constant 0 : i32
    %c0_i32_1 = arith.constant 0 : i32
    return %arg1, %c0_i32, %c0_i32_0 : i32, i32, i32
  }
  func.func @transform_11(%arg0: i32, %arg1: i32) -> (i32, i32, i32) {
    %c0_i32 = arith.constant 0 : i32
    %c0_i32_0 = arith.constant 0 : i32
    %c0_i32_1 = arith.constant 0 : i32
    return %arg1, %c0_i32, %c0_i32_0 : i32, i32, i32
  }
  func.func @transform_12(%arg0: i32, %arg1: i32) -> (i32, i32, i32) {
    %c0_i32 = arith.constant 0 : i32
    %c0_i32_0 = arith.constant 0 : i32
    %c0_i32_1 = arith.constant 0 : i32
    return %arg1, %c0_i32, %c0_i32_0 : i32, i32, i32
  }
  func.func @transform_13(%arg0: i32, %arg1: i32) -> (i32, i32, i32) {
    %c0_i32 = arith.constant 0 : i32
    %c0_i32_0 = arith.constant 0 : i32
    %c0_i32_1 = arith.constant 0 : i32
    return %arg1, %c0_i32, %c0_i32_0 : i32, i32, i32
  }
  func.func @transform_14(%arg0: i32, %arg1: i32) -> (i32, i32) {
    %c0_i32 = arith.constant 0 : i32
    %c0_i32_0 = arith.constant 0 : i32
    %c0_i32_1 = arith.constant 0 : i32
    return %c0_i32, %c0_i32_0 : i32, i32
  }
  func.func @transform_15(%arg0: i32, %arg1: i32) -> (i32, i32) {
    %c0_i32 = arith.constant 0 : i32
    %c0_i32_0 = arith.constant 0 : i32
    %c0_i32_1 = arith.constant 0 : i32
    return %c0_i32, %c0_i32_0 : i32, i32
  }
  func.func @transform_16(%arg0: i32, %arg1: i32) -> (i32, i32) {
    %c0_i32 = arith.constant 0 : i32
    %c0_i32_0 = arith.constant 0 : i32
    %c0_i32_1 = arith.constant 0 : i32
    return %c0_i32, %c0_i32_0 : i32, i32
  }
  func.func @transform_17(%arg0: i32, %arg1: i32) -> (i32, i32) {
    %c0_i32 = arith.constant 0 : i32
    %c0_i32_0 = arith.constant 0 : i32
    %c0_i32_1 = arith.constant 0 : i32
    return %c0_i32, %c0_i32_0 : i32, i32
  }
  func.func @transform_18(%arg0: i32, %arg1: i32) -> (i32, i32) {
    %c0_i32 = arith.constant 0 : i32
    %c0_i32_0 = arith.constant 0 : i32
    return %arg0, %c0_i32 : i32, i32
  }
}

</mosaic_0001>

<llo_original>
// kernel: pack_decoder_forward.1
$region0: #{pack_decoder_forward.1}
  #allocation0 [shape = 'u32[]', space=smem, size = 0x4, offset = 0x4, fixed_abs, tag = 'smem constant byte address 0x4 - core index']
  #allocation1 [shape = 'u32[144,128]{1,0:T(1,128)}', space=vmem, size = 0x12000, scoped, tag = 'internal scratch']
  #allocation2 [shape = 'f32[16,128]{1,0:T(8,128)}', space=vmem, size = 0x2000, scoped, tag = 'scratch operand']
  %s0 = inlined_call_operand.vmem [shape: bf16[16,16], index: 0, kind: input, shape index: {}]
  %s1 = inlined_call_operand.vmem [shape: bf16[16,32], index: 1, kind: input, shape index: {}]
  %s2 = inlined_call_operand.hbm [shape: bf16[16,128], index: 2, kind: input, shape index: {}]
  %s3 = inlined_call_operand.vmem [shape: f32[1,128], index: 3, kind: input, shape index: {}]
  %s4 = inlined_call_operand.hbm [shape: bf16[2,128,128], index: 4, kind: input, shape index: {}]
  %s5 = inlined_call_operand.hbm [shape: f32[2,1,128], index: 5, kind: input, shape index: {}]
  %s6 = inlined_call_operand.vmem [shape: bf16[2,32,256], index: 6, kind: input, shape index: {}]
  %s7 = inlined_call_operand.vmem [shape: f32[2,1,256], index: 7, kind: input, shape index: {}]
  %s8 = inlined_call_operand.hbm [shape: bf16[2,128,128], index: 8, kind: input, shape index: {}]
  %s9 = inlined_call_operand.hbm [shape: f32[2,1,128], index: 9, kind: input, shape index: {}]
  %s10 = inlined_call_operand.hbm [shape: bf16[2,128,128], index: 10, kind: input, shape index: {}]
  %s11 = inlined_call_operand.hbm [shape: f32[2,1,128], index: 11, kind: input, shape index: {}]
  %s12 = inlined_call_operand.hbm [shape: bf16[2,128,128], index: 12, kind: input, shape index: {}]
  %s13 = inlined_call_operand.hbm [shape: f32[2,1,128], index: 13, kind: input, shape index: {}]
  %s14 = inlined_call_operand.hbm [shape: bf16[128,128], index: 14, kind: input, shape index: {}]
  %s15 = inlined_call_operand.hbm [shape: f32[1,128], index: 15, kind: input, shape index: {}]
  %s16 = inlined_call_operand.hbm [shape: bf16[128,128], index: 16, kind: input, shape index: {}]
  %s17 = inlined_call_operand.hbm [shape: f32[1,128], index: 17, kind: input, shape index: {}]
  %s18 = inlined_call_operand.hbm [shape: f32[16,128], index: 18, kind: output, shape index: {}]
  %s19 = sld [smem:[#allocation0]]
  $region165: #{pack_decoder_forward.1} parent=0
    _
  %s21 = ssub.s32 1, %s19
  %s22 = scalar_select 0, %s21, %s19
  $region1: #{pack_decoder_forward.1} parent=0
    #allocation3 [shape = 'u8[4096]{0}', space=vmem, size = 0x1000, scoped, tag = 'input window, operand 2, single buffered']
    #allocation4 [shape = 's32[2]{0}', space=sflag, size = 0x8, scoped, tag = 'scoped memory for pack_decoder_forward.1']
    #allocation5 [shape = 's32[2]{0}', space=sflag, size = 0x8, scoped, tag = 'scoped memory for pack_decoder_forward.1']
    #allocation6 [shape = 'u8[65536]{0}', space=vmem, size = 0x10000, scoped, tag = 'input window, operand 4']
    #allocation7 [shape = 's32[2]{0}', space=sflag, size = 0x8, scoped, tag = 'scoped memory for pack_decoder_forward.1']
    #allocation8 [shape = 'u8[1024]{0}', space=vmem, size = 0x400, scoped, tag = 'input window, operand 5']
    #allocation9 [shape = 'u8[65536]{0}', space=vmem, size = 0x10000, scoped, tag = 'input window, operand 8']
    #allocation10 [shape = 's32[2]{0}', space=sflag, size = 0x8, scoped, tag = 'scoped memory for pack_decoder_forward.1']
    #allocation11 [shape = 'u8[1024]{0}', space=vmem, size = 0x400, scoped, tag = 'input window, operand 9']
    #allocation12 [shape = 'u8[65536]{0}', space=vmem, size = 0x10000, scoped, tag = 'input window, operand 10']
    #allocation13 [shape = 's32[2]{0}', space=sflag, size = 0x8, scoped, tag = 'scoped memory for pack_decoder_forward.1']
    #allocation14 [shape = 'u8[1024]{0}', space=vmem, size = 0x400, scoped, tag = 'input window, operand 11']
    #allocation15 [shape = 'u8[65536]{0}', space=vmem, size = 0x10000, scoped, tag = 'input window, operand 12']
    #allocation16 [shape = 's32[2]{0}', space=sflag, size = 0x8, scoped, tag = 'scoped memory for pack_decoder_forward.1']
    #allocation17 [shape = 'u8[1024]{0}', space=vmem, size = 0x400, scoped, tag = 'input window, operand 13']
    #allocation18 [shape = 'u8[32768]{0}', space=vmem, size = 0x8000, scoped, tag = 'input window, operand 14, single buffered']
    #allocation19 [shape = 's32[1]{0}', space=sflag, size = 0x4, scoped, tag = 'scoped memory for pack_decoder_forward.1']
    #allocation20 [shape = 'u8[512]{0}', space=vmem, size = 0x400, scoped, tag = 'input window, operand 15, single buffered']
    #allocation21 [shape = 'u8[32768]{0}', space=vmem, size = 0x8000, scoped, tag = 'input window, operand 16, single buffered']
    #allocation22 [shape = 's32[1]{0}', space=sflag, size = 0x4, scoped, tag = 'scoped memory for pack_decoder_forward.1']
    #allocation23 [shape = 'u8[512]{0}', space=vmem, size = 0x400, scoped, tag = 'input window, operand 17, single buffered']
    #allocation24 [shape = 'u8[8192]{0}', space=vmem, size = 0x2000, scoped, tag = 'output window, operand 0, single buffered']
    %23 = vsyncpa [#allocation4], 0
    %24 = vsyncpa [#allocation7], 0
    %s25 = scalar_lea.sflag [#allocation7], 1
    %26 = vsyncpa %s25, 0
    %27 = vsyncpa [#allocation10], 0
    %s28 = scalar_lea.sflag [#allocation10], 1
    %29 = vsyncpa %s28, 0
    %30 = vsyncpa [#allocation13], 0
    %s31 = scalar_lea.sflag [#allocation13], 1
    %32 = vsyncpa %s31, 0
    %33 = vsyncpa [#allocation16], 0
    %s34 = scalar_lea.sflag [#allocation16], 1
    %35 = vsyncpa %s34, 0
    %36 = vsyncpa [#allocation19], 0
    %37 = vsyncpa [#allocation22], 0
    %38 = vsyncpa [#allocation5], 0
    loop: start=0, step=1, limit=4
    $region2: #{pack_decoder_forward.1} parent=1 // loop_pre_header
      _
    $region3: #{pack_decoder_forward.1} parent=1 // loop_header
      %s40 = sphi 0, %s44
      %p41 = scmp.ge.s32.totalorder %s40, 4
      %s47 = sphi 0, %s59
      %s48 = sphi 0, %s55
      %s49 = sphi 0, %s47
      %s50 = sphi 0, %s48
      %s51 = sphi 0, %s49
      %s52 = sphi 0, %s50
      %s62 = sphi 0, %s64
      %s65 = sphi 0, %s62
      %s66 = sphi 0, %s65
      %s82 = sphi 0, %s66
      %s88 = sphi 0, %s90
      %s91 = sphi 0, %s88
      %s92 = sphi 0, %s91
      %s108 = sphi 0, %s92
      %s112 = sphi 0, %s112
      %s114 = sphi 0, %s112
      %s115 = sphi 0, %s114
      %s129 = sphi 0, %s115
      %s133 = sphi 0, %s133
      %s135 = sphi 0, %s133
      %s136 = sphi 0, %s135
      %s150 = sphi 0, %s136
      %s156 = sphi 0, %s158
      %s159 = sphi 0, %s156
      %s160 = sphi 0, %s159
      %s176 = sphi 0, %s160
      %s182 = sphi 0, %s184
      %s185 = sphi 0, %s182
      %s186 = sphi 0, %s185
      %s202 = sphi 0, %s186
      %s208 = sphi 0, %s210
      %s211 = sphi 0, %s208
      %s212 = sphi 0, %s211
      %s228 = sphi 0, %s212
      %s234 = sphi 0, %s236
      %s237 = sphi 0, %s234
      %s238 = sphi 0, %s237
      %s254 = sphi 0, %s238
      %s260 = sphi 0, %s262
      %s263 = sphi 0, %s260
      %s264 = sphi 0, %s263
      %s280 = sphi 0, %s264
      %s286 = sphi 0, %s288
      %s289 = sphi 0, %s286
      %s290 = sphi 0, %s289
      %s306 = sphi 0, %s290
      %s312 = sphi 0, %s314
      %s315 = sphi 0, %s312
      %s316 = sphi 0, %s315
      %s332 = sphi 0, %s316
      %s338 = sphi 0, %s340
      %s341 = sphi 0, %s338
      %s342 = sphi 0, %s341
      %s358 = sphi 0, %s342
      %s364 = sphi 0, %s366
      %s367 = sphi 0, %s364
      %s368 = sphi 0, %s367
      %s384 = sphi 0, %s368
      %s390 = sphi 0, %s392
      %s393 = sphi 0, %s390
      %s394 = sphi 0, %s393
      %s410 = sphi 0, %s394
      %s414 = sphi 0, %s414
      %s416 = sphi 0, %s414
      %s417 = sphi 0, %s416
      %s431 = sphi 0, %s417
      %s435 = sphi 0, %s435
      %s437 = sphi 0, %s435
      %s438 = sphi 0, %s437
      %s452 = sphi 0, %s438
      %s456 = sphi 0, %s456
      %s458 = sphi 0, %s456
      %s459 = sphi 0, %s458
      %s473 = sphi 0, %s459
      %s477 = sphi 0, %s477
      %s479 = sphi 0, %s477
      %s480 = sphi 0, %s479
      %s494 = sphi 0, %s480
      %s500 = sphi 0, %s502
      %s503 = sphi 0, %s500
      %s504 = sphi 0, %s503
      %s520 = sphi 0, %s504
    $region4: #{pack_decoder_forward.1} parent=1 // loop_header_branch
      %43 = sbr.rel (%p41) target = $region8
    $region5: #{pack_decoder_forward.1} parent=1 // loop_body
      %s45 = ssub.s32 %s40, 1
      %s46 = ssub.s32 %s40, 2
      %s53 = sadd.s32 1, %s48
      %p54 = scmp.ge.s32.totalorder %s53, 2
      %s55 = scalar_select %p54, 0, %s53
      %s56 = sadd.s32 1, %s47
      %s57 = scalar_select %p54, %s56, %s47
      %p58 = scmp.ge.s32.totalorder %s57, 1
      %s59 = scalar_select %p58, 0, %s57
      %s60 = ssub.s32 %s47, %s59
      %p61 = scmp.eq.s32.totalorder %s60, 0
      %s63 = sadd.s32 %s62, 1
      %s64 = scalar_select %p61, %s62, %s63
      %p67 = pneg %p61
      %p68 = scmp.eq.s32.totalorder %s40, 1
      %p69 = por %p67, %p68
      %p70 = scmp.ne.s32.totalorder %s62, %s65
      %p71 = scmp.eq.s32.totalorder %s40, 0
      %p72 = por %p70, %p71
      %p73 = scmp.ne.s32.totalorder %s62, %s65
      %p74 = scmp.eq.s32.totalorder %s45, 1
      %p75 = por %p73, %p74
      %p76 = scmp.ne.s32.totalorder %s65, %s66
      %p77 = scmp.eq.s32.totalorder %s45, 0
      %p78 = por %p76, %p77
      %p79 = scmp.ne.s32.totalorder %s65, %s66
      %p80 = scmp.eq.s32.totalorder %s46, 1
      %p81 = por %p79, %p80
      %p83 = scmp.ne.s32.totalorder %s66, %s82
      %p84 = scmp.eq.s32.totalorder %s46, 0
      %p85 = por %p83, %p84
      %s86 = ssub.s32 %s47, %s59
      %p87 = scmp.eq.s32.totalorder %s86, 0
      %s89 = sadd.s32 %s88, 1
      %s90 = scalar_select %p87, %s88, %s89
      %p93 = pneg %p87
      %p94 = scmp.eq.s32.totalorder %s40, 1
      %p95 = por %p93, %p94
      %p96 = scmp.ne.s32.totalorder %s88, %s91
      %p97 = scmp.eq.s32.totalorder %s40, 0
      %p98 = por %p96, %p97
      %p99 = scmp.ne.s32.totalorder %s88, %s91
      %p100 = scmp.eq.s32.totalorder %s45, 1
      %p101 = por %p99, %p100
      %p102 = scmp.ne.s32.totalorder %s91, %s92
      %p103 = scmp.eq.s32.totalorder %s45, 0
      %p104 = por %p102, %p103
      %p105 = scmp.ne.s32.totalorder %s91, %s92
      %p106 = scmp.eq.s32.totalorder %s46, 1
      %p107 = por %p105, %p106
      %p109 = scmp.ne.s32.totalorder %s92, %s108
      %p110 = scmp.eq.s32.totalorder %s46, 0
      %p111 = por %p109, %p110
      %s113 = sadd.s32 %s112, 1
      %p116 = scmp.eq.s32.totalorder %s40, 1
      %p117 = scmp.ne.s32.totalorder %s112, %s114
      %p118 = scmp.eq.s32.totalorder %s40, 0
      %p119 = por %p117, %p118
      %p120 = scmp.ne.s32.totalorder %s112, %s114
      %p121 = scmp.eq.s32.totalorder %s45, 1
      %p122 = por %p120, %p121
      %p123 = scmp.ne.s32.totalorder %s114, %s115
      %p124 = scmp.eq.s32.totalorder %s45, 0
      %p125 = por %p123, %p124
      %p126 = scmp.ne.s32.totalorder %s114, %s115
      %p127 = scmp.eq.s32.totalorder %s46, 1
      %p128 = por %p126, %p127
      %p130 = scmp.ne.s32.totalorder %s115, %s129
      %p131 = scmp.eq.s32.totalorder %s46, 0
      %p132 = por %p130, %p131
      %s134 = sadd.s32 %s133, 1
      %p137 = scmp.eq.s32.totalorder %s40, 1
      %p138 = scmp.ne.s32.totalorder %s133, %s135
      %p139 = scmp.eq.s32.totalorder %s40, 0
      %p140 = por %p138, %p139
      %p141 = scmp.ne.s32.totalorder %s133, %s135
      %p142 = scmp.eq.s32.totalorder %s45, 1
      %p143 = por %p141, %p142
      %p144 = scmp.ne.s32.totalorder %s135, %s136
      %p145 = scmp.eq.s32.totalorder %s45, 0
      %p146 = por %p144, %p145
      %p147 = scmp.ne.s32.totalorder %s135, %s136
      %p148 = scmp.eq.s32.totalorder %s46, 1
      %p149 = por %p147, %p148
      %p151 = scmp.ne.s32.totalorder %s136, %s150
      %p152 = scmp.eq.s32.totalorder %s46, 0
      %p153 = por %p151, %p152
      %s154 = ssub.s32 %s48, %s55
      %p155 = scmp.eq.s32.totalorder %s154, 0
      %s157 = sadd.s32 %s156, 1
      %s158 = scalar_select %p155, %s156, %s157
      %p161 = pneg %p155
      %p162 = scmp.eq.s32.totalorder %s40, 1
      %p163 = por %p161, %p162
      %p164 = scmp.ne.s32.totalorder %s156, %s159
      %p165 = scmp.eq.s32.totalorder %s40, 0
      %p166 = por %p164, %p165
      %p167 = scmp.ne.s32.totalorder %s156, %s159
      %p168 = scmp.eq.s32.totalorder %s45, 1
      %p169 = por %p167, %p168
      %p170 = scmp.ne.s32.totalorder %s159, %s160
      %p171 = scmp.eq.s32.totalorder %s45, 0
      %p172 = por %p170, %p171
      %p173 = scmp.ne.s32.totalorder %s159, %s160
      %p174 = scmp.eq.s32.totalorder %s46, 1
      %p175 = por %p173, %p174
      %p177 = scmp.ne.s32.totalorder %s160, %s176
      %p178 = scmp.eq.s32.totalorder %s46, 0
      %p179 = por %p177, %p178
      %s180 = ssub.s32 %s48, %s55
      %p181 = scmp.eq.s32.totalorder %s180, 0
      %s183 = sadd.s32 %s182, 1
      %s184 = scalar_select %p181, %s182, %s183
      %p187 = pneg %p181
      %p188 = scmp.eq.s32.totalorder %s40, 1
      %p189 = por %p187, %p188
      %p190 = scmp.ne.s32.totalorder %s182, %s185
      %p191 = scmp.eq.s32.totalorder %s40, 0
      %p192 = por %p190, %p191
      %p193 = scmp.ne.s32.totalorder %s182, %s185
      %p194 = scmp.eq.s32.totalorder %s45, 1
      %p195 = por %p193, %p194
      %p196 = scmp.ne.s32.totalorder %s185, %s186
      %p197 = scmp.eq.s32.totalorder %s45, 0
      %p198 = por %p196, %p197
      %p199 = scmp.ne.s32.totalorder %s185, %s186
      %p200 = scmp.eq.s32.totalorder %s46, 1
      %p201 = por %p199, %p200
      %p203 = scmp.ne.s32.totalorder %s186, %s202
      %p204 = scmp.eq.s32.totalorder %s46, 0
      %p205 = por %p203, %p204
      %s206 = ssub.s32 %s48, %s55
      %p207 = scmp.eq.s32.totalorder %s206, 0
      %s209 = sadd.s32 %s208, 1
      %s210 = scalar_select %p207, %s208, %s209
      %p213 = pneg %p207
      %p214 = scmp.eq.s32.totalorder %s40, 1
      %p215 = por %p213, %p214
      %p216 = scmp.ne.s32.totalorder %s208, %s211
      %p217 = scmp.eq.s32.totalorder %s40, 0
      %p218 = por %p216, %p217
      %p219 = scmp.ne.s32.totalorder %s208, %s211
      %p220 = scmp.eq.s32.totalorder %s45, 1
      %p221 = por %p219, %p220
      %p222 = scmp.ne.s32.totalorder %s211, %s212
      %p223 = scmp.eq.s32.totalorder %s45, 0
      %p224 = por %p222, %p223
      %p225 = scmp.ne.s32.totalorder %s211, %s212
      %p226 = scmp.eq.s32.totalorder %s46, 1
      %p227 = por %p225, %p226
      %p229 = scmp.ne.s32.totalorder %s212, %s228
      %p230 = scmp.eq.s32.totalorder %s46, 0
      %p231 = por %p229, %p230
      %s232 = ssub.s32 %s48, %s55
      %p233 = scmp.eq.s32.totalorder %s232, 0
      %s235 = sadd.s32 %s234, 1
      %s236 = scalar_select %p233, %s234, %s235
      %p239 = pneg %p233
      %p240 = scmp.eq.s32.totalorder %s40, 1
      %p241 = por %p239, %p240
      %p242 = scmp.ne.s32.totalorder %s234, %s237
      %p243 = scmp.eq.s32.totalorder %s40, 0
      %p244 = por %p242, %p243
      %p245 = scmp.ne.s32.totalorder %s234, %s237
      %p246 = scmp.eq.s32.totalorder %s45, 1
      %p247 = por %p245, %p246
      %p248 = scmp.ne.s32.totalorder %s237, %s238
      %p249 = scmp.eq.s32.totalorder %s45, 0
      %p250 = por %p248, %p249
      %p251 = scmp.ne.s32.totalorder %s237, %s238
      %p252 = scmp.eq.s32.totalorder %s46, 1
      %p253 = por %p251, %p252
      %p255 = scmp.ne.s32.totalorder %s238, %s254
      %p256 = scmp.eq.s32.totalorder %s46, 0
      %p257 = por %p255, %p256
      %s258 = ssub.s32 %s48, %s55
      %p259 = scmp.eq.s32.totalorder %s258, 0
      %s261 = sadd.s32 %s260, 1
      %s262 = scalar_select %p259, %s260, %s261
      %p265 = pneg %p259
      %p266 = scmp.eq.s32.totalorder %s40, 1
      %p267 = por %p265, %p266
      %p268 = scmp.ne.s32.totalorder %s260, %s263
      %p269 = scmp.eq.s32.totalorder %s40, 0
      %p270 = por %p268, %p269
      %p271 = scmp.ne.s32.totalorder %s260, %s263
      %p272 = scmp.eq.s32.totalorder %s45, 1
      %p273 = por %p271, %p272
      %p274 = scmp.ne.s32.totalorder %s263, %s264
      %p275 = scmp.eq.s32.totalorder %s45, 0
      %p276 = por %p274, %p275
      %p277 = scmp.ne.s32.totalorder %s263, %s264
      %p278 = scmp.eq.s32.totalorder %s46, 1
      %p279 = por %p277, %p278
      %p281 = scmp.ne.s32.totalorder %s264, %s280
      %p282 = scmp.eq.s32.totalorder %s46, 0
      %p283 = por %p281, %p282
      %s284 = ssub.s32 %s48, %s55
      %p285 = scmp.eq.s32.totalorder %s284, 0
      %s287 = sadd.s32 %s286, 1
      %s288 = scalar_select %p285, %s286, %s287
      %p291 = pneg %p285
      %p292 = scmp.eq.s32.totalorder %s40, 1
      %p293 = por %p291, %p292
      %p294 = scmp.ne.s32.totalorder %s286, %s289
      %p295 = scmp.eq.s32.totalorder %s40, 0
      %p296 = por %p294, %p295
      %p297 = scmp.ne.s32.totalorder %s286, %s289
      %p298 = scmp.eq.s32.totalorder %s45, 1
      %p299 = por %p297, %p298
      %p300 = scmp.ne.s32.totalorder %s289, %s290
      %p301 = scmp.eq.s32.totalorder %s45, 0
      %p302 = por %p300, %p301
      %p303 = scmp.ne.s32.totalorder %s289, %s290
      %p304 = scmp.eq.s32.totalorder %s46, 1
      %p305 = por %p303, %p304
      %p307 = scmp.ne.s32.totalorder %s290, %s306
      %p308 = scmp.eq.s32.totalorder %s46, 0
      %p309 = por %p307, %p308
      %s310 = ssub.s32 %s48, %s55
      %p311 = scmp.eq.s32.totalorder %s310, 0
      %s313 = sadd.s32 %s312, 1
      %s314 = scalar_select %p311, %s312, %s313
      %p317 = pneg %p311
      %p318 = scmp.eq.s32.totalorder %s40, 1
      %p319 = por %p317, %p318
      %p320 = scmp.ne.s32.totalorder %s312, %s315
      %p321 = scmp.eq.s32.totalorder %s40, 0
      %p322 = por %p320, %p321
      %p323 = scmp.ne.s32.totalorder %s312, %s315
      %p324 = scmp.eq.s32.totalorder %s45, 1
      %p325 = por %p323, %p324
      %p326 = scmp.ne.s32.totalorder %s315, %s316
      %p327 = scmp.eq.s32.totalorder %s45, 0
      %p328 = por %p326, %p327
      %p329 = scmp.ne.s32.totalorder %s315, %s316
      %p330 = scmp.eq.s32.totalorder %s46, 1
      %p331 = por %p329, %p330
      %p333 = scmp.ne.s32.totalorder %s316, %s332
      %p334 = scmp.eq.s32.totalorder %s46, 0
      %p335 = por %p333, %p334
      %s336 = ssub.s32 %s48, %s55
      %p337 = scmp.eq.s32.totalorder %s336, 0
      %s339 = sadd.s32 %s338, 1
      %s340 = scalar_select %p337, %s338, %s339
      %p343 = pneg %p337
      %p344 = scmp.eq.s32.totalorder %s40, 1
      %p345 = por %p343, %p344
      %p346 = scmp.ne.s32.totalorder %s338, %s341
      %p347 = scmp.eq.s32.totalorder %s40, 0
      %p348 = por %p346, %p347
      %p349 = scmp.ne.s32.totalorder %s338, %s341
      %p350 = scmp.eq.s32.totalorder %s45, 1
      %p351 = por %p349, %p350
      %p352 = scmp.ne.s32.totalorder %s341, %s342
      %p353 = scmp.eq.s32.totalorder %s45, 0
      %p354 = por %p352, %p353
      %p355 = scmp.ne.s32.totalorder %s341, %s342
      %p356 = scmp.eq.s32.totalorder %s46, 1
      %p357 = por %p355, %p356
      %p359 = scmp.ne.s32.totalorder %s342, %s358
      %p360 = scmp.eq.s32.totalorder %s46, 0
      %p361 = por %p359, %p360
      %s362 = ssub.s32 %s48, %s55
      %p363 = scmp.eq.s32.totalorder %s362, 0
      %s365 = sadd.s32 %s364, 1
      %s366 = scalar_select %p363, %s364, %s365
      %p369 = pneg %p363
      %p370 = scmp.eq.s32.totalorder %s40, 1
      %p371 = por %p369, %p370
      %p372 = scmp.ne.s32.totalorder %s364, %s367
      %p373 = scmp.eq.s32.totalorder %s40, 0
      %p374 = por %p372, %p373
      %p375 = scmp.ne.s32.totalorder %s364, %s367
      %p376 = scmp.eq.s32.totalorder %s45, 1
      %p377 = por %p375, %p376
      %p378 = scmp.ne.s32.totalorder %s367, %s368
      %p379 = scmp.eq.s32.totalorder %s45, 0
      %p380 = por %p378, %p379
      %p381 = scmp.ne.s32.totalorder %s367, %s368
      %p382 = scmp.eq.s32.totalorder %s46, 1
      %p383 = por %p381, %p382
      %p385 = scmp.ne.s32.totalorder %s368, %s384
      %p386 = scmp.eq.s32.totalorder %s46, 0
      %p387 = por %p385, %p386
      %s388 = ssub.s32 %s48, %s55
      %p389 = scmp.eq.s32.totalorder %s388, 0
      %s391 = sadd.s32 %s390, 1
      %s392 = scalar_select %p389, %s390, %s391
      %p395 = pneg %p389
      %p396 = scmp.eq.s32.totalorder %s40, 1
      %p397 = por %p395, %p396
      %p398 = scmp.ne.s32.totalorder %s390, %s393
      %p399 = scmp.eq.s32.totalorder %s40, 0
      %p400 = por %p398, %p399
      %p401 = scmp.ne.s32.totalorder %s390, %s393
      %p402 = scmp.eq.s32.totalorder %s45, 1
      %p403 = por %p401, %p402
      %p404 = scmp.ne.s32.totalorder %s393, %s394
      %p405 = scmp.eq.s32.totalorder %s45, 0
      %p406 = por %p404, %p405
      %p407 = scmp.ne.s32.totalorder %s393, %s394
      %p408 = scmp.eq.s32.totalorder %s46, 1
      %p409 = por %p407, %p408
      %p411 = scmp.ne.s32.totalorder %s394, %s410
      %p412 = scmp.eq.s32.totalorder %s46, 0
      %p413 = por %p411, %p412
      %s415 = sadd.s32 %s414, 1
      %p418 = scmp.eq.s32.totalorder %s40, 1
      %p419 = scmp.ne.s32.totalorder %s414, %s416
      %p420 = scmp.eq.s32.totalorder %s40, 0
      %p421 = por %p419, %p420
      %p422 = scmp.ne.s32.totalorder %s414, %s416
      %p423 = scmp.eq.s32.totalorder %s45, 1
      %p424 = por %p422, %p423
      %p425 = scmp.ne.s32.totalorder %s416, %s417
      %p426 = scmp.eq.s32.totalorder %s45, 0
      %p427 = por %p425, %p426
      %p428 = scmp.ne.s32.totalorder %s416, %s417
      %p429 = scmp.eq.s32.totalorder %s46, 1
      %p430 = por %p428, %p429
      %p432 = scmp.ne.s32.totalorder %s417, %s431
      %p433 = scmp.eq.s32.totalorder %s46, 0
      %p434 = por %p432, %p433
      %s436 = sadd.s32 %s435, 1
      %p439 = scmp.eq.s32.totalorder %s40, 1
      %p440 = scmp.ne.s32.totalorder %s435, %s437
      %p441 = scmp.eq.s32.totalorder %s40, 0
      %p442 = por %p440, %p441
      %p443 = scmp.ne.s32.totalorder %s435, %s437
      %p444 = scmp.eq.s32.totalorder %s45, 1
      %p445 = por %p443, %p444
      %p446 = scmp.ne.s32.totalorder %s437, %s438
      %p447 = scmp.eq.s32.totalorder %s45, 0
      %p448 = por %p446, %p447
      %p449 = scmp.ne.s32.totalorder %s437, %s438
      %p450 = scmp.eq.s32.totalorder %s46, 1
      %p451 = por %p449, %p450
      %p453 = scmp.ne.s32.totalorder %s438, %s452
      %p454 = scmp.eq.s32.totalorder %s46, 0
      %p455 = por %p453, %p454
      %s457 = sadd.s32 %s456, 1
      %p460 = scmp.eq.s32.totalorder %s40, 1
      %p461 = scmp.ne.s32.totalorder %s456, %s458
      %p462 = scmp.eq.s32.totalorder %s40, 0
      %p463 = por %p461, %p462
      %p464 = scmp.ne.s32.totalorder %s456, %s458
      %p465 = scmp.eq.s32.totalorder %s45, 1
      %p466 = por %p464, %p465
      %p467 = scmp.ne.s32.totalorder %s458, %s459
      %p468 = scmp.eq.s32.totalorder %s45, 0
      %p469 = por %p467, %p468
      %p470 = scmp.ne.s32.totalorder %s458, %s459
      %p471 = scmp.eq.s32.totalorder %s46, 1
      %p472 = por %p470, %p471
      %p474 = scmp.ne.s32.totalorder %s459, %s473
      %p475 = scmp.eq.s32.totalorder %s46, 0
      %p476 = por %p474, %p475
      %s478 = sadd.s32 %s477, 1
      %p481 = scmp.eq.s32.totalorder %s40, 1
      %p482 = scmp.ne.s32.totalorder %s477, %s479
      %p483 = scmp.eq.s32.totalorder %s40, 0
      %p484 = por %p482, %p483
      %p485 = scmp.ne.s32.totalorder %s477, %s479
      %p486 = scmp.eq.s32.totalorder %s45, 1
      %p487 = por %p485, %p486
      %p488 = scmp.ne.s32.totalorder %s479, %s480
      %p489 = scmp.eq.s32.totalorder %s45, 0
      %p490 = por %p488, %p489
      %p491 = scmp.ne.s32.totalorder %s479, %s480
      %p492 = scmp.eq.s32.totalorder %s46, 1
      %p493 = por %p491, %p492
      %p495 = scmp.ne.s32.totalorder %s480, %s494
      %p496 = scmp.eq.s32.totalorder %s46, 0
      %p497 = por %p495, %p496
      %s498 = ssub.s32 %s47, %s59
      %p499 = scmp.eq.s32.totalorder %s498, 0
      %s501 = sadd.s32 %s500, 1
      %s502 = scalar_select %p499, %s500, %s501
      %p505 = pneg %p499
      %p506 = scmp.eq.s32.totalorder %s40, 1
      %p507 = por %p505, %p506
      %p508 = scmp.ne.s32.totalorder %s500, %s503
      %p509 = scmp.eq.s32.totalorder %s40, 0
      %p510 = por %p508, %p509
      %p511 = scmp.ne.s32.totalorder %s500, %s503
      %p512 = scmp.eq.s32.totalorder %s45, 1
      %p513 = por %p511, %p512
      %p514 = scmp.ne.s32.totalorder %s503, %s504
      %p515 = scmp.eq.s32.totalorder %s45, 0
      %p516 = por %p514, %p515
      %p517 = scmp.ne.s32.totalorder %s503, %s504
      %p518 = scmp.eq.s32.totalorder %s46, 1
      %p519 = por %p517, %p518
      %p521 = scmp.ne.s32.totalorder %s504, %s520
      %p522 = scmp.eq.s32.totalorder %s46, 0
      %p523 = por %p521, %p522
      %p524 = scmp.le.s32.totalorder 1, %s40
      %p525 = scmp.lt.s32.totalorder %s40, 3
      %p526 = pnand %p524, %p525
      %p527 = pneg %p526
      // Predicated region
      $region9: #{pack_decoder_forward.1} parent=5 // pred_check
        _
      $region10: #{pack_decoder_forward.1} parent=5 // pred_check_branch
        %529 = sbr.rel (%p526) target = $region12
      $region11: #{pack_decoder_forward.1} parent=5 // pred_region
        %s530 = ssub.s32 %s40, 1
        // Predicated region
        $region13: #{pack_decoder_forward.1} parent=11 // pred_check
          %p531 = pneg %p78
        $region14: #{pack_decoder_forward.1} parent=11 // pred_check_branch
          %533 = sbr.rel (%p531) target = $region16
        $region15: #{pack_decoder_forward.1} parent=11 // pred_region
          %s534 = smul.u32 2, %s49
          %p535 = scmp.lt.s32.totalorder %s534, 1
          %s536 = scalar_select %p535, %s534, 1
          %s537 = smul.addr %s536, 4
          %s538 = scalar_lea.vmem %s0, %s537
          %s539 = smul.u32 2, %s49
        $region16: #{pack_decoder_forward.1} parent=11 // pred_fallthru
          _
        // Predicated region
        $region17: #{pack_decoder_forward.1} parent=11 // pred_check
          %p540 = pneg %p104
        $region18: #{pack_decoder_forward.1} parent=11 // pred_check_branch
          %542 = sbr.rel (%p540) target = $region20
        $region19: #{pack_decoder_forward.1} parent=11 // pred_region
          %s543 = smul.u32 2, %s49
          %p544 = scmp.lt.s32.totalorder %s543, 1
          %s545 = scalar_select %p544, %s543, 1
          %s546 = smul.addr %s545, 4
          %s547 = scalar_lea.vmem %s1, %s546
          %s548 = smul.u32 2, %s49
        $region20: #{pack_decoder_forward.1} parent=11 // pred_fallthru
          _
        // Predicated region
        $region21: #{pack_decoder_forward.1} parent=11 // pred_check
          %p549 = pneg %p125
        $region22: #{pack_decoder_forward.1} parent=11 // pred_check_branch
          %551 = sbr.rel (%p549) target = $region24
        $region23: #{pack_decoder_forward.1} parent=11 // pred_region
          %s553 = ssub.s32 128, 128
          %554 = vsyncadd [#allocation4], %s553
          %s555 = sshll.u32 [#allocation3], 4
          %s556 = int_to_ptr.vmem [resolvable:$true] %s555
          %561 = dma.hbm_to_vmem [thread:$0]  %s2, 128, %s556, [#allocation4], 64, 64, 4
        $region24: #{pack_decoder_forward.1} parent=11 // pred_fallthru
          _
        // Predicated region
        $region25: #{pack_decoder_forward.1} parent=11 // pred_check
          %p562 = pneg %p146
        $region26: #{pack_decoder_forward.1} parent=11 // pred_check_branch
          %564 = sbr.rel (%p562) target = $region28
        $region27: #{pack_decoder_forward.1} parent=11 // pred_region
          _
        $region28: #{pack_decoder_forward.1} parent=11 // pred_fallthru
          _
        // Predicated region
        $region29: #{pack_decoder_forward.1} parent=11 // pred_check
          %p565 = pneg %p427
        $region30: #{pack_decoder_forward.1} parent=11 // pred_check_branch
          %567 = sbr.rel (%p565) target = $region32
        $region31: #{pack_decoder_forward.1} parent=11 // pred_region
          %s569 = ssub.s32 1024, 1024
          %570 = vsyncadd [#allocation19], %s569
          %s571 = sshll.u32 [#allocation18], 4
          %s572 = int_to_ptr.vmem [resolvable:$true] %s571
          %577 = dma.hbm_to_vmem [thread:$0]  %s14, 1024, %s572, [#allocation19], 64, 64, 4
        $region32: #{pack_decoder_forward.1} parent=11 // pred_fallthru
          _
        // Predicated region
        $region33: #{pack_decoder_forward.1} parent=11 // pred_check
          %p578 = pneg %p448
        $region34: #{pack_decoder_forward.1} parent=11 // pred_check_branch
          %580 = sbr.rel (%p578) target = $region36
        $region35: #{pack_decoder_forward.1} parent=11 // pred_region
          %s582 = ssub.s32 16, 16
          %583 = vsyncadd [#allocation19], %s582
          %s585 = sshll.u32 [#allocation20], 4
          %s586 = int_to_ptr.vmem [resolvable:$true] %s585
          %588 = dma.hbm_to_vmem [thread:$0]  %s15, 16, %s586, [#allocation19]
        $region36: #{pack_decoder_forward.1} parent=11 // pred_fallthru
          _
        // Predicated region
        $region37: #{pack_decoder_forward.1} parent=11 // pred_check
          %p589 = pneg %p469
        $region38: #{pack_decoder_forward.1} parent=11 // pred_check_branch
          %591 = sbr.rel (%p589) target = $region40
        $region39: #{pack_decoder_forward.1} parent=11 // pred_region
          %s593 = ssub.s32 1024, 1024
          %594 = vsyncadd [#allocation22], %s593
          %s595 = sshll.u32 [#allocation21], 4
          %s596 = int_to_ptr.vmem [resolvable:$true] %s595
          %601 = dma.hbm_to_vmem [thread:$0]  %s16, 1024, %s596, [#allocation22], 64, 64, 4
        $region40: #{pack_decoder_forward.1} parent=11 // pred_fallthru
          _
        // Predicated region
        $region41: #{pack_decoder_forward.1} parent=11 // pred_check
          %p602 = pneg %p490
        $region42: #{pack_decoder_forward.1} parent=11 // pred_check_branch
          %604 = sbr.rel (%p602) target = $region44
        $region43: #{pack_decoder_forward.1} parent=11 // pred_region
          %s606 = ssub.s32 16, 16
          %607 = vsyncadd [#allocation22], %s606
          %s609 = sshll.u32 [#allocation23], 4
          %s610 = int_to_ptr.vmem [resolvable:$true] %s609
          %612 = dma.hbm_to_vmem [thread:$0]  %s17, 16, %s610, [#allocation22]
        $region44: #{pack_decoder_forward.1} parent=11 // pred_fallthru
          _
      $region12: #{pack_decoder_forward.1} parent=5 // pred_fallthru
        _
      %p613 = scmp.lt.s32.totalorder %s40, 2
      // Predicated region
      $region45: #{pack_decoder_forward.1} parent=5 // pred_check
        %p614 = pneg %p613
      $region46: #{pack_decoder_forward.1} parent=5 // pred_check_branch
        %616 = sbr.rel (%p614) target = $region48
      $region47: #{pack_decoder_forward.1} parent=5 // pred_region
        // Predicated region
        $region49: #{pack_decoder_forward.1} parent=47 // pred_check
          %p617 = pneg %p166
        $region50: #{pack_decoder_forward.1} parent=47 // pred_check_branch
          %619 = sbr.rel (%p617) target = $region52
        $region51: #{pack_decoder_forward.1} parent=47 // pred_region
          %s620 = sand.u32 %s40, 1
          %s621 = scalar_lea.sflag [#allocation7], %s620
          %s622 = sand.u32 %s156, 1
          %s623 = smul.addr %s622, 64
          %s624 = scalar_lea.vmem [#allocation6], %s623
          %s626 = ssub.s32 1024, 1024
          %627 = vsyncadd %s621, %s626
          %s628 = smul.addr %s48, 16
          %s629 = smul.addr %s628, 64
          %s630 = scalar_lea.hbm %s4, %s629
          %s631 = sshll.u32 %s624, 4
          %s632 = int_to_ptr.vmem [resolvable:$true] %s631
          %637 = dma.hbm_to_vmem [thread:$0]  %s630, 1024, %s632, %s621, 64, 64, 4
        $region52: #{pack_decoder_forward.1} parent=47 // pred_fallthru
          _
        // Predicated region
        $region53: #{pack_decoder_forward.1} parent=47 // pred_check
          %p638 = pneg %p192
        $region54: #{pack_decoder_forward.1} parent=47 // pred_check_branch
          %640 = sbr.rel (%p638) target = $region56
        $region55: #{pack_decoder_forward.1} parent=47 // pred_region
          %s641 = sand.u32 %s40, 1
          %s642 = scalar_lea.sflag [#allocation7], %s641
          %s643 = sand.u32 %s182, 1
          %s644 = scalar_lea.vmem [#allocation8], %s643
          %s646 = ssub.s32 16, 16
          %647 = vsyncadd %s642, %s646
          %s648 = smul.addr %s48, 16
          %s649 = scalar_lea.hbm %s5, %s648
          %s651 = sshll.u32 %s644, 4
          %s652 = int_to_ptr.vmem [resolvable:$true] %s651
          %654 = dma.hbm_to_vmem [thread:$0]  %s649, 16, %s652, %s642
        $region56: #{pack_decoder_forward.1} parent=47 // pred_fallthru
          _
        // Predicated region
        $region57: #{pack_decoder_forward.1} parent=47 // pred_check
          %p655 = pneg %p218
        $region58: #{pack_decoder_forward.1} parent=47 // pred_check_branch
          %657 = sbr.rel (%p655) target = $region60
        $region59: #{pack_decoder_forward.1} parent=47 // pred_region
          %p658 = scmp.lt.s32.totalorder %s48, 1
          %s659 = scalar_select %p658, %s48, 1
          %s660 = smul.addr %s659, 8
          %s661 = smul.addr %s660, 4
          %s662 = scalar_lea.vmem %s6, %s661
        $region60: #{pack_decoder_forward.1} parent=47 // pred_fallthru
          _
        // Predicated region
        $region61: #{pack_decoder_forward.1} parent=47 // pred_check
          %p663 = pneg %p244
        $region62: #{pack_decoder_forward.1} parent=47 // pred_check_branch
          %665 = sbr.rel (%p663) target = $region64
        $region63: #{pack_decoder_forward.1} parent=47 // pred_region
          %p666 = scmp.lt.s32.totalorder %s48, 1
          %s667 = scalar_select %p666, %s48, 1
          %s668 = smul.addr %s667, 2
          %s669 = scalar_lea.vmem %s7, %s668
        $region64: #{pack_decoder_forward.1} parent=47 // pred_fallthru
          _
        // Predicated region
        $region65: #{pack_decoder_forward.1} parent=47 // pred_check
          %p670 = pneg %p270
        $region66: #{pack_decoder_forward.1} parent=47 // pred_check_branch
          %672 = sbr.rel (%p670) target = $region68
        $region67: #{pack_decoder_forward.1} parent=47 // pred_region
          %s673 = sand.u32 %s40, 1
          %s674 = scalar_lea.sflag [#allocation10], %s673
          %s675 = sand.u32 %s260, 1
          %s676 = smul.addr %s675, 64
          %s677 = scalar_lea.vmem [#allocation9], %s676
          %s679 = ssub.s32 1024, 1024
          %680 = vsyncadd %s674, %s679
          %s681 = smul.addr %s48, 16
          %s682 = smul.addr %s681, 64
          %s683 = scalar_lea.hbm %s8, %s682
          %s684 = sshll.u32 %s677, 4
          %s685 = int_to_ptr.vmem [resolvable:$true] %s684
          %690 = dma.hbm_to_vmem [thread:$0]  %s683, 1024, %s685, %s674, 64, 64, 4
        $region68: #{pack_decoder_forward.1} parent=47 // pred_fallthru
          _
        // Predicated region
        $region69: #{pack_decoder_forward.1} parent=47 // pred_check
          %p691 = pneg %p296
        $region70: #{pack_decoder_forward.1} parent=47 // pred_check_branch
          %693 = sbr.rel (%p691) target = $region72
        $region71: #{pack_decoder_forward.1} parent=47 // pred_region
          %s694 = sand.u32 %s40, 1
          %s695 = scalar_lea.sflag [#allocation10], %s694
          %s696 = sand.u32 %s286, 1
          %s697 = scalar_lea.vmem [#allocation11], %s696
          %s699 = ssub.s32 16, 16
          %700 = vsyncadd %s695, %s699
          %s701 = smul.addr %s48, 16
          %s702 = scalar_lea.hbm %s9, %s701
          %s704 = sshll.u32 %s697, 4
          %s705 = int_to_ptr.vmem [resolvable:$true] %s704
          %707 = dma.hbm_to_vmem [thread:$0]  %s702, 16, %s705, %s695
        $region72: #{pack_decoder_forward.1} parent=47 // pred_fallthru
          _
        // Predicated region
        $region73: #{pack_decoder_forward.1} parent=47 // pred_check
          %p708 = pneg %p322
        $region74: #{pack_decoder_forward.1} parent=47 // pred_check_branch
          %710 = sbr.rel (%p708) target = $region76
        $region75: #{pack_decoder_forward.1} parent=47 // pred_region
          %s711 = sand.u32 %s40, 1
          %s712 = scalar_lea.sflag [#allocation13], %s711
          %s713 = sand.u32 %s312, 1
          %s714 = smul.addr %s713, 64
          %s715 = scalar_lea.vmem [#allocation12], %s714
          %s717 = ssub.s32 1024, 1024
          %718 = vsyncadd %s712, %s717
          %s719 = smul.addr %s48, 16
          %s720 = smul.addr %s719, 64
          %s721 = scalar_lea.hbm %s10, %s720
          %s722 = sshll.u32 %s715, 4
          %s723 = int_to_ptr.vmem [resolvable:$true] %s722
          %728 = dma.hbm_to_vmem [thread:$0]  %s721, 1024, %s723, %s712, 64, 64, 4
        $region76: #{pack_decoder_forward.1} parent=47 // pred_fallthru
          _
        // Predicated region
        $region77: #{pack_decoder_forward.1} parent=47 // pred_check
          %p729 = pneg %p348
        $region78: #{pack_decoder_forward.1} parent=47 // pred_check_branch
          %731 = sbr.rel (%p729) target = $region80
        $region79: #{pack_decoder_forward.1} parent=47 // pred_region
          %s732 = sand.u32 %s40, 1
          %s733 = scalar_lea.sflag [#allocation13], %s732
          %s734 = sand.u32 %s338, 1
          %s735 = scalar_lea.vmem [#allocation14], %s734
          %s737 = ssub.s32 16, 16
          %738 = vsyncadd %s733, %s737
          %s739 = smul.addr %s48, 16
          %s740 = scalar_lea.hbm %s11, %s739
          %s742 = sshll.u32 %s735, 4
          %s743 = int_to_ptr.vmem [resolvable:$true] %s742
          %745 = dma.hbm_to_vmem [thread:$0]  %s740, 16, %s743, %s733
        $region80: #{pack_decoder_forward.1} parent=47 // pred_fallthru
          _
        // Predicated region
        $region81: #{pack_decoder_forward.1} parent=47 // pred_check
          %p746 = pneg %p374
        $region82: #{pack_decoder_forward.1} parent=47 // pred_check_branch
          %748 = sbr.rel (%p746) target = $region84
        $region83: #{pack_decoder_forward.1} parent=47 // pred_region
          %s749 = sand.u32 %s40, 1
          %s750 = scalar_lea.sflag [#allocation16], %s749
          %s751 = sand.u32 %s364, 1
          %s752 = smul.addr %s751, 64
          %s753 = scalar_lea.vmem [#allocation15], %s752
          %s755 = ssub.s32 1024, 1024
          %756 = vsyncadd %s750, %s755
          %s757 = smul.addr %s48, 16
          %s758 = smul.addr %s757, 64
          %s759 = scalar_lea.hbm %s12, %s758
          %s760 = sshll.u32 %s753, 4
          %s761 = int_to_ptr.vmem [resolvable:$true] %s760
          %766 = dma.hbm_to_vmem [thread:$0]  %s759, 1024, %s761, %s750, 64, 64, 4
        $region84: #{pack_decoder_forward.1} parent=47 // pred_fallthru
          _
        // Predicated region
        $region85: #{pack_decoder_forward.1} parent=47 // pred_check
          %p767 = pneg %p400
        $region86: #{pack_decoder_forward.1} parent=47 // pred_check_branch
          %769 = sbr.rel (%p767) target = $region88
        $region87: #{pack_decoder_forward.1} parent=47 // pred_region
          %s770 = sand.u32 %s40, 1
          %s771 = scalar_lea.sflag [#allocation16], %s770
          %s772 = sand.u32 %s390, 1
          %s773 = scalar_lea.vmem [#allocation17], %s772
          %s775 = ssub.s32 16, 16
          %776 = vsyncadd %s771, %s775
          %s777 = smul.addr %s48, 16
          %s778 = scalar_lea.hbm %s13, %s777
          %s780 = sshll.u32 %s773, 4
          %s781 = int_to_ptr.vmem [resolvable:$true] %s780
          %783 = dma.hbm_to_vmem [thread:$0]  %s778, 16, %s781, %s771
        $region88: #{pack_decoder_forward.1} parent=47 // pred_fallthru
          _
      $region48: #{pack_decoder_forward.1} parent=5 // pred_fallthru
        _
      %p784 = scmp.le.s32.totalorder 1, %s40
      %p785 = scmp.lt.s32.totalorder %s40, 3
      %p786 = pnand %p784, %p785
      %p787 = pneg %p786
      // Predicated region
      $region89: #{pack_decoder_forward.1} parent=5 // pred_check
        _
      $region90: #{pack_decoder_forward.1} parent=5 // pred_check_branch
        %789 = sbr.rel (%p786) target = $region92
      $region91: #{pack_decoder_forward.1} parent=5 // pred_region
        %s790 = ssub.s32 %s40, 1
        // Predicated region
        $region93: #{pack_decoder_forward.1} parent=91 // pred_check
          %p791 = pneg %p125
        $region94: #{pack_decoder_forward.1} parent=91 // pred_check_branch
          %793 = sbr.rel (%p791) target = $region96
        $region95: #{pack_decoder_forward.1} parent=91 // pred_region
          %794 = dma.done [#allocation4], 128
        $region96: #{pack_decoder_forward.1} parent=91 // pred_fallthru
          _
        %s795 = sand.u32 %s45, 1
        %s796 = scalar_lea.sflag [#allocation7], %s795
        %s797 = sand.u32 %s159, 1
        %s798 = smul.addr %s797, 64
        %s799 = scalar_lea.vmem [#allocation6], %s798
        // Predicated region
        $region97: #{pack_decoder_forward.1} parent=91 // pred_check
          %p800 = pneg %p172
        $region98: #{pack_decoder_forward.1} parent=91 // pred_check_branch
          %802 = sbr.rel (%p800) target = $region100
        $region99: #{pack_decoder_forward.1} parent=91 // pred_region
          %803 = dma.done %s796, 1024
        $region100: #{pack_decoder_forward.1} parent=91 // pred_fallthru
          _
        %s804 = sand.u32 %s45, 1
        %s805 = scalar_lea.sflag [#allocation7], %s804
        %s806 = sand.u32 %s185, 1
        %s807 = scalar_lea.vmem [#allocation8], %s806
        // Predicated region
        $region101: #{pack_decoder_forward.1} parent=91 // pred_check
          %p808 = pneg %p198
        $region102: #{pack_decoder_forward.1} parent=91 // pred_check_branch
          %810 = sbr.rel (%p808) target = $region104
        $region103: #{pack_decoder_forward.1} parent=91 // pred_region
          %811 = dma.done %s805, 16
        $region104: #{pack_decoder_forward.1} parent=91 // pred_fallthru
          _
        %s812 = sand.u32 %s45, 1
        %s813 = scalar_lea.sflag [#allocation10], %s812
        %s814 = sand.u32 %s263, 1
        %s815 = smul.addr %s814, 64
        %s816 = scalar_lea.vmem [#allocation9], %s815
        // Predicated region
        $region105: #{pack_decoder_forward.1} parent=91 // pred_check
          %p817 = pneg %p276
        $region106: #{pack_decoder_forward.1} parent=91 // pred_check_branch
          %819 = sbr.rel (%p817) target = $region108
        $region107: #{pack_decoder_forward.1} parent=91 // pred_region
          %820 = dma.done %s813, 1024
        $region108: #{pack_decoder_forward.1} parent=91 // pred_fallthru
          _
        %s821 = sand.u32 %s45, 1
        %s822 = scalar_lea.sflag [#allocation10], %s821
        %s823 = sand.u32 %s289, 1
        %s824 = scalar_lea.vmem [#allocation11], %s823
        // Predicated region
        $region109: #{pack_decoder_forward.1} parent=91 // pred_check
          %p825 = pneg %p302
        $region110: #{pack_decoder_forward.1} parent=91 // pred_check_branch
          %827 = sbr.rel (%p825) target = $region112
        $region111: #{pack_decoder_forward.1} parent=91 // pred_region
          %828 = dma.done %s822, 16
        $region112: #{pack_decoder_forward.1} parent=91 // pred_fallthru
          _
        %s829 = sand.u32 %s45, 1
        %s830 = scalar_lea.sflag [#allocation13], %s829
        %s831 = sand.u32 %s315, 1
        %s832 = smul.addr %s831, 64
        %s833 = scalar_lea.vmem [#allocation12], %s832
        // Predicated region
        $region113: #{pack_decoder_forward.1} parent=91 // pred_check
          %p834 = pneg %p328
        $region114: #{pack_decoder_forward.1} parent=91 // pred_check_branch
          %836 = sbr.rel (%p834) target = $region116
        $region115: #{pack_decoder_forward.1} parent=91 // pred_region
          %837 = dma.done %s830, 1024
        $region116: #{pack_decoder_forward.1} parent=91 // pred_fallthru
          _
        %s838 = sand.u32 %s45, 1
        %s839 = scalar_lea.sflag [#allocation13], %s838
        %s840 = sand.u32 %s341, 1
        %s841 = scalar_lea.vmem [#allocation14], %s840
        // Predicated region
        $region117: #{pack_decoder_forward.1} parent=91 // pred_check
          %p842 = pneg %p354
        $region118: #{pack_decoder_forward.1} parent=91 // pred_check_branch
          %844 = sbr.rel (%p842) target = $region120
        $region119: #{pack_decoder_forward.1} parent=91 // pred_region
          %845 = dma.done %s839, 16
        $region120: #{pack_decoder_forward.1} parent=91 // pred_fallthru
          _
        %s846 = sand.u32 %s45, 1
        %s847 = scalar_lea.sflag [#allocation16], %s846
        %s848 = sand.u32 %s367, 1
        %s849 = smul.addr %s848, 64
        %s850 = scalar_lea.vmem [#allocation15], %s849
        // Predicated region
        $region121: #{pack_decoder_forward.1} parent=91 // pred_check
          %p851 = pneg %p380
        $region122: #{pack_decoder_forward.1} parent=91 // pred_check_branch
          %853 = sbr.rel (%p851) target = $region124
        $region123: #{pack_decoder_forward.1} parent=91 // pred_region
          %854 = dma.done %s847, 1024
        $region124: #{pack_decoder_forward.1} parent=91 // pred_fallthru
          _
        %s855 = sand.u32 %s45, 1
        %s856 = scalar_lea.sflag [#allocation16], %s855
        %s857 = sand.u32 %s393, 1
        %s858 = scalar_lea.vmem [#allocation17], %s857
        // Predicated region
        $region125: #{pack_decoder_forward.1} parent=91 // pred_check
          %p859 = pneg %p406
        $region126: #{pack_decoder_forward.1} parent=91 // pred_check_branch
          %861 = sbr.rel (%p859) target = $region128
        $region127: #{pack_decoder_forward.1} parent=91 // pred_region
          %862 = dma.done %s856, 16
        $region128: #{pack_decoder_forward.1} parent=91 // pred_fallthru
          _
        // Predicated region
        $region129: #{pack_decoder_forward.1} parent=91 // pred_check
          %p863 = pneg %p427
        $region130: #{pack_decoder_forward.1} parent=91 // pred_check_branch
          %865 = sbr.rel (%p863) target = $region132
        $region131: #{pack_decoder_forward.1} parent=91 // pred_region
          %866 = dma.done [#allocation19], 1024
        $region132: #{pack_decoder_forward.1} parent=91 // pred_fallthru
          _
        // Predicated region
        $region133: #{pack_decoder_forward.1} parent=91 // pred_check
          %p867 = pneg %p448
        $region134: #{pack_decoder_forward.1} parent=91 // pred_check_branch
          %869 = sbr.rel (%p867) target = $region136
        $region135: #{pack_decoder_forward.1} parent=91 // pred_region
          %870 = dma.done [#allocation19], 16
        $region136: #{pack_decoder_forward.1} parent=91 // pred_fallthru
          _
        // Predicated region
        $region137: #{pack_decoder_forward.1} parent=91 // pred_check
          %p871 = pneg %p469
        $region138: #{pack_decoder_forward.1} parent=91 // pred_check_branch
          %873 = sbr.rel (%p871) target = $region140
        $region139: #{pack_decoder_forward.1} parent=91 // pred_region
          %874 = dma.done [#allocation22], 1024
        $region140: #{pack_decoder_forward.1} parent=91 // pred_fallthru
          _
        // Predicated region
        $region141: #{pack_decoder_forward.1} parent=91 // pred_check
          %p875 = pneg %p490
        $region142: #{pack_decoder_forward.1} parent=91 // pred_check_branch
          %877 = sbr.rel (%p875) target = $region144
        $region143: #{pack_decoder_forward.1} parent=91 // pred_region
          %878 = dma.done [#allocation22], 16
        $region144: #{pack_decoder_forward.1} parent=91 // pred_fallthru
          _
        %s879 = smul.u32 2, %s49
        %p880 = scmp.lt.s32.totalorder %s879, 1
        %s881 = scalar_select %p880, %s879, 1
        %s882 = smul.addr %s881, 4
        %s883 = scalar_lea.vmem %s0, %s882
        %p884 = pneg %p78
        %p885 = pneg %p75
        %s886 = smul.u32 2, %s49
        %p887 = scmp.lt.s32.totalorder %s886, 1
        %s888 = scalar_select %p887, %s886, 1
        %s889 = smul.addr %s888, 4
        %s890 = scalar_lea.vmem %s1, %s889
        %p891 = pneg %p104
        %p892 = pneg %p101
        %p893 = pneg %p125
        %p894 = pneg %p122
        %p895 = pneg %p146
        %p896 = pneg %p143
        %s897 = sand.u32 %s45, 1
        %s898 = scalar_lea.sflag [#allocation7], %s897
        %s899 = sand.u32 %s159, 1
        %s900 = smul.addr %s899, 64
        %s901 = scalar_lea.vmem [#allocation6], %s900
        %p902 = pneg %p172
        %p903 = pneg %p169
        %s904 = sand.u32 %s45, 1
        %s905 = scalar_lea.sflag [#allocation7], %s904
        %s906 = sand.u32 %s185, 1
        %s907 = scalar_lea.vmem [#allocation8], %s906
        %p908 = pneg %p198
        %p909 = pneg %p195
        %p910 = scmp.lt.s32.totalorder %s50, 1
        %s911 = scalar_select %p910, %s50, 1
        %s912 = smul.addr %s911, 8
        %s913 = smul.addr %s912, 4
        %s914 = scalar_lea.vmem %s6, %s913
        %p915 = pneg %p224
        %p916 = pneg %p221
        %p917 = scmp.lt.s32.totalorder %s50, 1
        %s918 = scalar_select %p917, %s50, 1
        %s919 = smul.addr %s918, 2
        %s920 = scalar_lea.vmem %s7, %s919
        %p921 = pneg %p250
        %p922 = pneg %p247
        %s923 = sand.u32 %s45, 1
        %s924 = scalar_lea.sflag [#allocation10], %s923
        %s925 = sand.u32 %s263, 1
        %s926 = smul.addr %s925, 64
        %s927 = scalar_lea.vmem [#allocation9], %s926
        %p928 = pneg %p276
        %p929 = pneg %p273
        %s930 = sand.u32 %s45, 1
        %s931 = scalar_lea.sflag [#allocation10], %s930
        %s932 = sand.u32 %s289, 1
        %s933 = scalar_lea.vmem [#allocation11], %s932
        %p934 = pneg %p302
        %p935 = pneg %p299
        %s936 = sand.u32 %s45, 1
        %s937 = scalar_lea.sflag [#allocation13], %s936
        %s938 = sand.u32 %s315, 1
        %s939 = smul.addr %s938, 64
        %s940 = scalar_lea.vmem [#allocation12], %s939
        %p941 = pneg %p328
        %p942 = pneg %p325
        %s943 = sand.u32 %s45, 1
        %s944 = scalar_lea.sflag [#allocation13], %s943
        %s945 = sand.u32 %s341, 1
        %s946 = scalar_lea.vmem [#allocation14], %s945
        %p947 = pneg %p354
        %p948 = pneg %p351
        %s949 = sand.u32 %s45, 1
        %s950 = scalar_lea.sflag [#allocation16], %s949
        %s951 = sand.u32 %s367, 1
        %s952 = smul.addr %s951, 64
        %s953 = scalar_lea.vmem [#allocation15], %s952
        %p954 = pneg %p380
        %p955 = pneg %p377
        %s956 = sand.u32 %s45, 1
        %s957 = scalar_lea.sflag [#allocation16], %s956
        %s958 = sand.u32 %s393, 1
        %s959 = scalar_lea.vmem [#allocation17], %s958
        %p960 = pneg %p406
        %p961 = pneg %p403
        %p962 = pneg %p427
        %p963 = pneg %p424
        %p964 = pneg %p448
        %p965 = pneg %p445
        %p966 = pneg %p469
        %p967 = pneg %p466
        %p968 = pneg %p490
        %p969 = pneg %p487
        %p970 = pneg %p516
        %p971 = pneg %p513
        %s972 = smul.u32 2, %s49
        %p973 = scmp.lt.s32.totalorder %s972, 1
        %s974 = scalar_select %p973, %s972, 1
        %s975 = smul.addr %s974, 4
        %s976 = scalar_lea.vmem %s0, %s975
        %s977 = smul.u32 2, %s49
        %s978 = smul.u32 2, %s49
        %p979 = scmp.lt.s32.totalorder %s978, 1
        %s980 = scalar_select %p979, %s978, 1
        %s981 = smul.addr %s980, 4
        %s982 = scalar_lea.vmem %s1, %s981
        %s983 = smul.u32 2, %s49
        %p984 = scmp.lt.s32.totalorder %s50, 1
        %s985 = scalar_select %p984, %s50, 1
        %s986 = smul.addr %s985, 8
        %s987 = smul.addr %s986, 4
        %s988 = scalar_lea.vmem %s6, %s987
        %p989 = scmp.lt.s32.totalorder %s50, 1
        %s990 = scalar_select %p989, %s50, 1
        %s991 = smul.addr %s990, 2
        %s992 = scalar_lea.vmem %s7, %s991
        %s993 = smul.u32 2, %s49
        %p995 = scmp.eq.s32.totalorder %s50, 0
        // Predicated region
        $region145: #{pack_decoder_forward.1} parent=91 // pred_check
          %p996 = pneg %p995
        $region146: #{pack_decoder_forward.1} parent=91 // pred_check_branch
          %998 = sbr.rel (%p996) target = $region148
        $region147: #{pack_decoder_forward.1} parent=91 // pred_region
          %v999 = vld [vmem:[%s976] sm:$0xf]
          %v1000 = vld [vmem:[%s976 + $0x4] sm:$0xf]
          %v1001 = vld [vmem:[#allocation3] sm:$0xf]
          %v1002 = vld [vmem:[#allocation3 + $0x4] sm:$0xf]
          %v1003 = vld [vmem:[%s3] sm:$0x1]
          %v1005 = vlaneseq
          %v1006 = vshrl.u32 %v1005, 7
          %v1007 = vsub.s32 0, %v1006
          %v1008 = vrot.slane %v1003, %v1007
          %v1012 = vunpack.c.l.b16 %v999
          %v1013 = vunpack.c.l.b16 %v1000
          %v1014 = vpack.c.b16 %v1013, %v1012
          %v1017 = vunpack.c.l.b16 %v1001
          %v1018 = vunpack.c.l.b16 %v1002
          %v1019 = vpack.c.b16 %v1018, %v1017
          %vm1021 = vcmask 130048
          %v1023 = vsel %vm1021, %v1014, 0
          %1025 = vmatprep.subr.bf16.mxu0 0
          %1026 = vmatpush1.bf16.msra.mxu0 %v1019
          %1027 = vmatprep.subr.bf16.mxu0 0
          %1028 = vmatpush1.bf16.msra.mxu0 0
          %1029 = vmatprep.subr.bf16.mxu0 0
          %1030 = vmatpush1.bf16.msra.mxu0 0
          %1031 = vmatprep.subr.bf16.mxu0 0
          %1032 = vmatpush1.bf16.msra.mxu0 0
          %1033 = vmatprep.subr.bf16.mxu0 0
          %1034 = vmatpush1.bf16.msra.mxu0 0
          %1035 = vmatprep.subr.bf16.mxu0 0
          %1036 = vmatpush1.bf16.msra.mxu0 0
          %1037 = vmatprep.subr.bf16.mxu0 0
          %1038 = vmatpush1.bf16.msra.mxu0 0
          %1039 = vmatprep.subr.bf16.mxu0 0
          %1040 = vmatpush1.bf16.msra.mxu0 0
          %1041 = vmatprep.subr.bf16.mxu0 0
          %1042 = vmatpush1.bf16.msra.mxu0 0
          %1043 = vmatprep.subr.bf16.mxu0 0
          %1044 = vmatpush1.bf16.msra.mxu0 0
          %1045 = vmatprep.subr.bf16.mxu0 0
          %1046 = vmatpush1.bf16.msra.mxu0 0
          %1047 = vmatprep.subr.bf16.mxu0 0
          %1048 = vmatpush1.bf16.msra.mxu0 0
          %1049 = vmatprep.subr.bf16.mxu0 0
          %1050 = vmatpush1.bf16.msra.mxu0 0
          %1051 = vmatprep.subr.bf16.mxu0 0
          %1052 = vmatpush1.bf16.msra.mxu0 0
          %1053 = vmatprep.subr.bf16.mxu0 0
          %1054 = vmatpush1.bf16.msra.mxu0 0
          %1055 = vmatprep.subr.bf16.mxu0 0
          %1056 = vmatpush1.bf16.msra.mxu0 0
          %1057 = vmatprep.mubr.bf16.mxu0 0
          %1058 = vmatmul.mubr.bf16.gmra.mrb[0].mxu0 %v1023
          %v1059 = vpop.f32.mrb[0].mxu0
          %v1060 = vadd.f32 %v1008, %v1059
          %v1061 = vpop.f32.mrb[0].mxu0
          %v1062 = vpop.f32.mrb[0].mxu0
          %v1063 = vadd.f32 %v1008, %v1062
          %v1064 = vpop.f32.mrb[0].mxu0
          %1065 = vdwg.mxu0
          %1066 = vst [vmem:[#allocation2] sm:$0xff] %v1060
          %1067 = vst [vmem:[#allocation2 + $0x8] sm:$0xff] %v1063
        $region148: #{pack_decoder_forward.1} parent=91 // pred_fallthru
          _
        %v1068 = vld [vmem:[#allocation2] sm:$0xff]
        %v1069 = vld [vmem:[#allocation2 + $0x8] sm:$0xff]
        %v1070 = vld [vmem:[%s799] sm:$0xf]
        %v1071 = vld [vmem:[%s799 + $0x4] sm:$0xf]
        %v1072 = vld [vmem:[%s799 + $0x8] sm:$0xf]
        %v1073 = vld [vmem:[%s799 + $0xc] sm:$0xf]
        %v1074 = vld [vmem:[%s799 + $0x10] sm:$0xf]
        %v1075 = vld [vmem:[%s799 + $0x14] sm:$0xf]
        %v1076 = vld [vmem:[%s799 + $0x18] sm:$0xf]
        %v1077 = vld [vmem:[%s799 + $0x1c] sm:$0xf]
        %v1078 = vld [vmem:[%s799 + $0x20] sm:$0xf]
        %v1079 = vld [vmem:[%s799 + $0x24] sm:$0xf]
        %v1080 = vld [vmem:[%s799 + $0x28] sm:$0xf]
        %v1081 = vld [vmem:[%s799 + $0x2c] sm:$0xf]
        %v1082 = vld [vmem:[%s799 + $0x30] sm:$0xf]
        %v1083 = vld [vmem:[%s799 + $0x34] sm:$0xf]
        %v1084 = vld [vmem:[%s799 + $0x38] sm:$0xf]
        %v1085 = vld [vmem:[%s799 + $0x3c] sm:$0xf]
        %v1086 = vpack.c.bf16 %v1069, %v1068
        %v1087 = vld [vmem:[%s807] sm:$0x1]
        %v1089 = vlaneseq
        %v1090 = vshrl.u32 %v1089, 7
        %v1091 = vsub.s32 0, %v1090
        %v1092 = vrot.slane %v1087, %v1091
        %v1110 = vunpack.c.l.b16 %v1070
        %v1111 = vunpack.c.l.b16 %v1071
        %v1112 = vunpack.c.l.b16 %v1072
        %v1113 = vunpack.c.l.b16 %v1073
        %v1114 = vunpack.c.l.b16 %v1074
        %v1115 = vunpack.c.l.b16 %v1075
        %v1116 = vunpack.c.l.b16 %v1076
        %v1117 = vunpack.c.l.b16 %v1077
        %v1118 = vunpack.c.l.b16 %v1078
        %v1119 = vunpack.c.l.b16 %v1079
        %v1120 = vunpack.c.l.b16 %v1080
        %v1121 = vunpack.c.l.b16 %v1081
        %v1122 = vunpack.c.l.b16 %v1082
        %v1123 = vunpack.c.l.b16 %v1083
        %v1124 = vunpack.c.l.b16 %v1084
        %v1125 = vunpack.c.l.b16 %v1085
        %v1126 = vpack.c.b16 %v1111, %v1110
        %v1127 = vpack.c.b16 %v1113, %v1112
        %v1128 = vpack.c.b16 %v1115, %v1114
        %v1129 = vpack.c.b16 %v1117, %v1116
        %v1130 = vpack.c.b16 %v1119, %v1118
        %v1131 = vpack.c.b16 %v1121, %v1120
        %v1132 = vpack.c.b16 %v1123, %v1122
        %v1133 = vpack.c.b16 %v1125, %v1124
        %1142 = vmatprep.subr.bf16.mxu0 0
        %1143 = vmatpush1.bf16.msra.mxu0 %v1126
        %1144 = vmatprep.subr.bf16.mxu0 0
        %1145 = vmatpush1.bf16.msra.mxu0 %v1127
        %1146 = vmatprep.subr.bf16.mxu0 0
        %1147 = vmatpush1.bf16.msra.mxu0 %v1128
        %1148 = vmatprep.subr.bf16.mxu0 0
        %1149 = vmatpush1.bf16.msra.mxu0 %v1129
        %1150 = vmatprep.subr.bf16.mxu0 0
        %1151 = vmatpush1.bf16.msra.mxu0 %v1130
        %1152 = vmatprep.subr.bf16.mxu0 0
        %1153 = vmatpush1.bf16.msra.mxu0 %v1131
        %1154 = vmatprep.subr.bf16.mxu0 0
        %1155 = vmatpush1.bf16.msra.mxu0 %v1132
        %1156 = vmatprep.subr.bf16.mxu0 0
        %1157 = vmatpush1.bf16.msra.mxu0 %v1133
        %1158 = vmatprep.subr.bf16.mxu0 0
        %1159 = vmatpush1.bf16.msra.mxu0 0
        %1160 = vmatprep.subr.bf16.mxu0 0
        %1161 = vmatpush1.bf16.msra.mxu0 0
        %1162 = vmatprep.subr.bf16.mxu0 0
        %1163 = vmatpush1.bf16.msra.mxu0 0
        %1164 = vmatprep.subr.bf16.mxu0 0
        %1165 = vmatpush1.bf16.msra.mxu0 0
        %1166 = vmatprep.subr.bf16.mxu0 0
        %1167 = vmatpush1.bf16.msra.mxu0 0
        %1168 = vmatprep.subr.bf16.mxu0 0
        %1169 = vmatpush1.bf16.msra.mxu0 0
        %1170 = vmatprep.subr.bf16.mxu0 0
        %1171 = vmatpush1.bf16.msra.mxu0 0
        %1172 = vmatprep.subr.bf16.mxu0 0
        %1173 = vmatpush1.bf16.msra.mxu0 0
        %1174 = vmatprep.mubr.bf16.mxu0 0
        %1175 = vmatmul.mubr.bf16.gmra.mrb[0].mxu0 %v1086
        %v1176 = vpop.f32.mrb[0].mxu0
        %v1177 = vadd.f32 %v1092, %v1176
        %v1178 = vpop.f32.mrb[0].mxu0
        %v1179 = vpop.f32.mrb[0].mxu0
        %v1180 = vadd.f32 %v1092, %v1179
        %v1181 = vpop.f32.mrb[0].mxu0
        %1182 = vdwg.mxu0
        %v1183 = vld [vmem:[%s982] sm:$0xf]
        %v1184 = vld [vmem:[%s982 + $0x4] sm:$0xf]
        %v1185 = vld [vmem:[%s988] sm:$0xff]
        %v1186 = vld [vmem:[%s988 + $0x8] sm:$0xff]
        %v1187 = vld [vmem:[%s988 + $0x10] sm:$0xff]
        %v1188 = vld [vmem:[%s988 + $0x18] sm:$0xff]
        %v1189 = vld [vmem:[%s992] sm:$0x3]
        %v1191 = vlaneseq
        %v1192 = vshrl.u32 %v1191, 7
        %v1193 = vsub.s32 0, %v1192
        %v1194 = vrot.slane %v1189, %v1193
        %v1195 = vlaneseq
        %v1196 = vshrl.u32 %v1195, 7
        %v1197 = vsub.s32 1, %v1196
        %v1198 = vrot.slane %v1189, %v1197
        %v1203 = vunpack.c.l.b16 %v1183
        %v1204 = vunpack.c.l.b16 %v1184
        %v1205 = vpack.c.b16 %v1204, %v1203
        %v1210 = vunpack.c.l.b16 %v1185
        %v1211 = vunpack.c.h.b16 %v1185
        %v1212 = vunpack.c.l.b16 %v1186
        %v1213 = vunpack.c.h.b16 %v1186
        %v1214 = vunpack.c.l.b16 %v1187
        %v1215 = vunpack.c.h.b16 %v1187
        %v1216 = vunpack.c.l.b16 %v1188
        %v1217 = vunpack.c.h.b16 %v1188
        %v1218 = vpack.c.b16 %v1212, %v1210
        %v1219 = vpack.c.b16 %v1213, %v1211
        %v1220 = vpack.c.b16 %v1216, %v1214
        %v1221 = vpack.c.b16 %v1217, %v1215
        %vm1226 = vcmask 261120
        %v1228 = vsel %vm1226, %v1205, 0
        %1230 = vmatprep.subr.bf16.mxu0 %v1219
        %1231 = vmatpush1.bf16.msra.mxu0 %v1218
        %1232 = vmatprep.subr.bf16.mxu0 %v1221
        %1233 = vmatpush1.bf16.msra.mxu0 %v1220
        %1234 = vmatprep.subr.bf16.mxu0 0
        %1235 = vmatpush1.bf16.msra.mxu0 0
        %1236 = vmatprep.subr.bf16.mxu0 0
        %1237 = vmatpush1.bf16.msra.mxu0 0
        %1238 = vmatprep.subr.bf16.mxu0 0
        %1239 = vmatpush1.bf16.msra.mxu0 0
        %1240 = vmatprep.subr.bf16.mxu0 0
        %1241 = vmatpush1.bf16.msra.mxu0 0
        %1242 = vmatprep.subr.bf16.mxu0 0
        %1243 = vmatpush1.bf16.msra.mxu0 0
        %1244 = vmatprep.subr.bf16.mxu0 0
        %1245 = vmatpush1.bf16.msra.mxu0 0
        %1246 = vmatprep.subr.bf16.mxu0 0
        %1247 = vmatpush1.bf16.msra.mxu0 0
        %1248 = vmatprep.subr.bf16.mxu0 0
        %1249 = vmatpush1.bf16.msra.mxu0 0
        %1250 = vmatprep.subr.bf16.mxu0 0
        %1251 = vmatpush1.bf16.msra.mxu0 0
        %1252 = vmatprep.subr.bf16.mxu0 0
        %1253 = vmatpush1.bf16.msra.mxu0 0
        %1254 = vmatprep.subr.bf16.mxu0 0
        %1255 = vmatpush1.bf16.msra.mxu0 0
        %1256 = vmatprep.subr.bf16.mxu0 0
        %1257 = vmatpush1.bf16.msra.mxu0 0
        %1258 = vmatprep.subr.bf16.mxu0 0
        %1259 = vmatpush1.bf16.msra.mxu0 0
        %1260 = vmatprep.subr.bf16.mxu0 0
        %1261 = vmatpush1.bf16.msra.mxu0 0
        %1262 = vmatprep.mubr.bf16.mxu0 0
        %1263 = vmatmul.mubr.bf16.gmra.mrb[0].mxu0 %v1228
        %v1264 = vpop.f32.mrb[0].mxu0
        %v1265 = vadd.f32 %v1194, %v1264
        %v1266 = vpop.f32.mrb[0].mxu0
        %v1267 = vadd.f32 %v1198, %v1266
        %v1268 = vpop.f32.mrb[0].mxu0
        %v1269 = vadd.f32 %v1194, %v1268
        %v1270 = vpop.f32.mrb[0].mxu0
        %v1271 = vadd.f32 %v1198, %v1270
        %1272 = vdwg.mxu0
        %v1273 = vpack.c.bf16 %v1177, %v1177
        %v1274 = vpack.c.bf16 %v1180, %v1180
        %v1275 = vpack.c.bf16 %v1265, %v1265
        %v1276 = vpack.c.bf16 %v1269, %v1269
        %1277 = vmatprep.subr.bf16.mxu0 0
        %1278 = vmatpush1.bf16.xpose.msra.mxu0 %v1275
        %1279 = vmatprep.subr.bf16.mxu0 0
        %1280 = vmatpush1.bf16.xpose.msra.mxu0 0
        %1281 = vmatprep.subr.bf16.mxu0 0
        %1282 = vmatpush1.bf16.xpose.msra.mxu0 0
        %1283 = vmatprep.subr.bf16.mxu0 0
        %1284 = vmatpush1.bf16.xpose.msra.mxu0 0
        %1285 = vmatprep.subr.bf16.mxu0 0
        %1286 = vmatpush1.bf16.xpose.msra.mxu0 0
        %1287 = vmatprep.subr.bf16.mxu0 0
        %1288 = vmatpush1.bf16.xpose.msra.mxu0 0
        %1289 = vmatprep.subr.bf16.mxu0 0
        %1290 = vmatpush1.bf16.xpose.msra.mxu0 0
        %1291 = vmatprep.subr.bf16.mxu0 0
        %1292 = vmatpush1.bf16.xpose.msra.mxu0 0
        %1293 = vmatprep.subr.bf16.mxu0 0
        %1294 = vmatpush1.bf16.xpose.msra.mxu0 0
        %1295 = vmatprep.subr.bf16.mxu0 0
        %1296 = vmatpush1.bf16.xpose.msra.mxu0 0
        %1297 = vmatprep.subr.bf16.mxu0 0
        %1298 = vmatpush1.bf16.xpose.msra.mxu0 0
        %1299 = vmatprep.subr.bf16.mxu0 0
        %1300 = vmatpush1.bf16.xpose.msra.mxu0 0
        %1301 = vmatprep.subr.bf16.mxu0 0
        %1302 = vmatpush1.bf16.xpose.msra.mxu0 0
        %1303 = vmatprep.subr.bf16.mxu0 0
        %1304 = vmatpush1.bf16.xpose.msra.mxu0 0
        %1305 = vmatprep.subr.bf16.mxu0 0
        %1306 = vmatpush1.bf16.xpose.msra.mxu0 0
        %1307 = vmatprep.subr.bf16.mxu0 0
        %1308 = vmatpush1.bf16.xpose.msra.mxu0 0
        %1309 = vmatprep.mubr.bf16.mxu0 0
        %1310 = vmatmul.mubr.bf16.gmra.mrb[0].mxu0 %v1273
        %v1311 = vpop.f32.mrb[0].mxu0
        %v1312 = vadd.f32 0.0, %v1311
        %v1313 = vpop.f32.mrb[0].mxu0
        %v1314 = vpop.f32.mrb[0].mxu0
        %v1315 = vpop.f32.mrb[0].mxu0
        %1316 = vdwg.mxu0
        %1317 = vmatprep.subr.bf16.mxu0 0
        %1318 = vmatpush1.bf16.xpose.msra.mxu0 %v1276
        %1319 = vmatprep.subr.bf16.mxu0 0
        %1320 = vmatpush1.bf16.xpose.msra.mxu0 0
        %1321 = vmatprep.subr.bf16.mxu0 0
        %1322 = vmatpush1.bf16.xpose.msra.mxu0 0
        %1323 = vmatprep.subr.bf16.mxu0 0
        %1324 = vmatpush1.bf16.xpose.msra.mxu0 0
        %1325 = vmatprep.subr.bf16.mxu0 0
        %1326 = vmatpush1.bf16.xpose.msra.mxu0 0
        %1327 = vmatprep.subr.bf16.mxu0 0
        %1328 = vmatpush1.bf16.xpose.msra.mxu0 0
        %1329 = vmatprep.subr.bf16.mxu0 0
        %1330 = vmatpush1.bf16.xpose.msra.mxu0 0
        %1331 = vmatprep.subr.bf16.mxu0 0
        %1332 = vmatpush1.bf16.xpose.msra.mxu0 0
        %1333 = vmatprep.subr.bf16.mxu0 0
        %1334 = vmatpush1.bf16.xpose.msra.mxu0 0
        %1335 = vmatprep.subr.bf16.mxu0 0
        %1336 = vmatpush1.bf16.xpose.msra.mxu0 0
        %1337 = vmatprep.subr.bf16.mxu0 0
        %1338 = vmatpush1.bf16.xpose.msra.mxu0 0
        %1339 = vmatprep.subr.bf16.mxu0 0
        %1340 = vmatpush1.bf16.xpose.msra.mxu0 0
        %1341 = vmatprep.subr.bf16.mxu0 0
        %1342 = vmatpush1.bf16.xpose.msra.mxu0 0
        %1343 = vmatprep.subr.bf16.mxu0 0
        %1344 = vmatpush1.bf16.xpose.msra.mxu0 0
        %1345 = vmatprep.subr.bf16.mxu0 0
        %1346 = vmatpush1.bf16.xpose.msra.mxu0 0
        %1347 = vmatprep.subr.bf16.mxu0 0
        %1348 = vmatpush1.bf16.xpose.msra.mxu0 0
        %1349 = vmatprep.mubr.bf16.mxu0 0
        %1350 = vmatmul.mubr.bf16.gmra.mrb[0].mxu0 %v1274
        %v1351 = vpop.f32.mrb[0].mxu0
        %v1352 = vadd.f32 0.0, %v1351
        %v1353 = vpop.f32.mrb[0].mxu0
        %v1354 = vpop.f32.mrb[0].mxu0
        %v1355 = vpop.f32.mrb[0].mxu0
        %1356 = vdwg.mxu0
        %vm1357 = vcmask 64512
        %v1358 = vsel %vm1357, %v1312, -inf
        %1359 = vmax.xlane.f32.xlu0 %v1358
        %v1360 = vpop.xlane.xlu0 %1359
        %v1361 = vsel %vm1357, %v1352, -inf
        %1362 = vmax.xlane.f32.xlu0 %v1361
        %v1363 = vpop.xlane.xlu0 %1362
        %v1364 = vsub.f32 %v1312, %v1360
        %v1365 = vsub.f32 %v1352, %v1363
        %v1366 = vmul.f32 %v1364, 1.442695
        %v1367 = vpow.pop %v1366
        %v1368 = vmul.f32 %v1365, 1.442695
        %v1369 = vpow.pop %v1368
        %v1370 = vsel %vm1357, %v1367, 0.0
        %1371 = vadd.xlane.f32.xlu0 %v1370
        %v1372 = vpop.xlane.xlu0 %1371
        %v1373 = vsel %vm1357, %v1369, 0.0
        %1374 = vadd.xlane.f32.xlu0 %v1373
        %v1375 = vpop.xlane.xlu0 %1374
        %v1376 = vrcp.pop %v1372
        %v1377 = vrcp.pop %v1375
        %v1378 = vmul.f32 %v1367, %v1376
        %v1379 = vmul.f32 %v1369, %v1377
        %v1380 = vpack.c.bf16 %v1378, %v1378
        %v1381 = vpack.c.bf16 %v1379, %v1379
        %v1382 = vpack.c.bf16 %v1267, %v1267
        %v1383 = vpack.c.bf16 %v1271, %v1271
        %v1385 = vsel %vm1357, %v1380, 0
        %vm1387 = vcmask 1043456
        %v1389 = vsel %vm1387, %v1382, 0
        %1391 = vmatprep.subr.bf16.mxu0 0
        %1392 = vmatpush1.bf16.msra.mxu0 %v1389
        %1393 = vmatprep.subr.bf16.mxu0 0
        %1394 = vmatpush1.bf16.msra.mxu0 0
        %1395 = vmatprep.subr.bf16.mxu0 0
        %1396 = vmatpush1.bf16.msra.mxu0 0
        %1397 = vmatprep.subr.bf16.mxu0 0
        %1398 = vmatpush1.bf16.msra.mxu0 0
        %1399 = vmatprep.subr.bf16.mxu0 0
        %1400 = vmatpush1.bf16.msra.mxu0 0
        %1401 = vmatprep.subr.bf16.mxu0 0
        %1402 = vmatpush1.bf16.msra.mxu0 0
        %1403 = vmatprep.subr.bf16.mxu0 0
        %1404 = vmatpush1.bf16.msra.mxu0 0
        %1405 = vmatprep.subr.bf16.mxu0 0
        %1406 = vmatpush1.bf16.msra.mxu0 0
        %1407 = vmatprep.subr.bf16.mxu0 0
        %1408 = vmatpush1.bf16.msra.mxu0 0
        %1409 = vmatprep.subr.bf16.mxu0 0
        %1410 = vmatpush1.bf16.msra.mxu0 0
        %1411 = vmatprep.subr.bf16.mxu0 0
        %1412 = vmatpush1.bf16.msra.mxu0 0
        %1413 = vmatprep.subr.bf16.mxu0 0
        %1414 = vmatpush1.bf16.msra.mxu0 0
        %1415 = vmatprep.subr.bf16.mxu0 0
        %1416 = vmatpush1.bf16.msra.mxu0 0
        %1417 = vmatprep.subr.bf16.mxu0 0
        %1418 = vmatpush1.bf16.msra.mxu0 0
        %1419 = vmatprep.subr.bf16.mxu0 0
        %1420 = vmatpush1.bf16.msra.mxu0 0
        %1421 = vmatprep.subr.bf16.mxu0 0
        %1422 = vmatpush1.bf16.msra.mxu0 0
        %1423 = vmatprep.mubr.bf16.mxu0 0
        %1424 = vmatmul.mubr.bf16.gmra.mrb[0].mxu0 %v1385
        %v1425 = vpop.f32.mrb[0].mxu0
        %v1426 = vadd.f32 0.0, %v1425
        %v1427 = vpop.f32.mrb[0].mxu0
        %v1428 = vpop.f32.mrb[0].mxu0
        %v1429 = vpop.f32.mrb[0].mxu0
        %1430 = vdwg.mxu0
        %v1432 = vsel %vm1357, %v1381, 0
        %v1435 = vsel %vm1387, %v1383, 0
        %1437 = vmatprep.subr.bf16.mxu0 0
        %1438 = vmatpush1.bf16.msra.mxu0 %v1435
        %1439 = vmatprep.subr.bf16.mxu0 0
        %1440 = vmatpush1.bf16.msra.mxu0 0
        %1441 = vmatprep.subr.bf16.mxu0 0
        %1442 = vmatpush1.bf16.msra.mxu0 0
        %1443 = vmatprep.subr.bf16.mxu0 0
        %1444 = vmatpush1.bf16.msra.mxu0 0
        %1445 = vmatprep.subr.bf16.mxu0 0
        %1446 = vmatpush1.bf16.msra.mxu0 0
        %1447 = vmatprep.subr.bf16.mxu0 0
        %1448 = vmatpush1.bf16.msra.mxu0 0
        %1449 = vmatprep.subr.bf16.mxu0 0
        %1450 = vmatpush1.bf16.msra.mxu0 0
        %1451 = vmatprep.subr.bf16.mxu0 0
        %1452 = vmatpush1.bf16.msra.mxu0 0
        %1453 = vmatprep.subr.bf16.mxu0 0
        %1454 = vmatpush1.bf16.msra.mxu0 0
        %1455 = vmatprep.subr.bf16.mxu0 0
        %1456 = vmatpush1.bf16.msra.mxu0 0
        %1457 = vmatprep.subr.bf16.mxu0 0
        %1458 = vmatpush1.bf16.msra.mxu0 0
        %1459 = vmatprep.subr.bf16.mxu0 0
        %1460 = vmatpush1.bf16.msra.mxu0 0
        %1461 = vmatprep.subr.bf16.mxu0 0
        %1462 = vmatpush1.bf16.msra.mxu0 0
        %1463 = vmatprep.subr.bf16.mxu0 0
        %1464 = vmatpush1.bf16.msra.mxu0 0
        %1465 = vmatprep.subr.bf16.mxu0 0
        %1466 = vmatpush1.bf16.msra.mxu0 0
        %1467 = vmatprep.subr.bf16.mxu0 0
        %1468 = vmatpush1.bf16.msra.mxu0 0
        %1469 = vmatprep.mubr.bf16.mxu0 0
        %1470 = vmatmul.mubr.bf16.gmra.mrb[0].mxu0 %v1432
        %v1471 = vpop.f32.mrb[0].mxu0
        %v1472 = vadd.f32 0.0, %v1471
        %v1473 = vpop.f32.mrb[0].mxu0
        %v1474 = vpop.f32.mrb[0].mxu0
        %v1475 = vpop.f32.mrb[0].mxu0
        %1476 = vdwg.mxu0
        %v1477 = vld [vmem:[%s816] sm:$0xf]
        %v1478 = vld [vmem:[%s816 + $0x4] sm:$0xf]
        %v1479 = vld [vmem:[%s816 + $0x8] sm:$0xf]
        %v1480 = vld [vmem:[%s816 + $0xc] sm:$0xf]
        %v1481 = vld [vmem:[%s816 + $0x10] sm:$0xf]
        %v1482 = vld [vmem:[%s816 + $0x14] sm:$0xf]
        %v1483 = vld [vmem:[%s816 + $0x18] sm:$0xf]
        %v1484 = vld [vmem:[%s816 + $0x1c] sm:$0xf]
        %v1485 = vld [vmem:[%s816 + $0x20] sm:$0xf]
        %v1486 = vld [vmem:[%s816 + $0x24] sm:$0xf]
        %v1487 = vld [vmem:[%s816 + $0x28] sm:$0xf]
        %v1488 = vld [vmem:[%s816 + $0x2c] sm:$0xf]
        %v1489 = vld [vmem:[%s816 + $0x30] sm:$0xf]
        %v1490 = vld [vmem:[%s816 + $0x34] sm:$0xf]
        %v1491 = vld [vmem:[%s816 + $0x38] sm:$0xf]
        %v1492 = vld [vmem:[%s816 + $0x3c] sm:$0xf]
        %v1493 = vpack.c.bf16 %v1472, %v1426
        %v1494 = vld [vmem:[%s824] sm:$0x1]
        %v1496 = vlaneseq
        %v1497 = vshrl.u32 %v1496, 7
        %v1498 = vsub.s32 0, %v1497
        %v1499 = vrot.slane %v1494, %v1498
        %v1517 = vunpack.c.l.b16 %v1477
        %v1518 = vunpack.c.l.b16 %v1478
        %v1519 = vunpack.c.l.b16 %v1479
        %v1520 = vunpack.c.l.b16 %v1480
        %v1521 = vunpack.c.l.b16 %v1481
        %v1522 = vunpack.c.l.b16 %v1482
        %v1523 = vunpack.c.l.b16 %v1483
        %v1524 = vunpack.c.l.b16 %v1484
        %v1525 = vunpack.c.l.b16 %v1485
        %v1526 = vunpack.c.l.b16 %v1486
        %v1527 = vunpack.c.l.b16 %v1487
        %v1528 = vunpack.c.l.b16 %v1488
        %v1529 = vunpack.c.l.b16 %v1489
        %v1530 = vunpack.c.l.b16 %v1490
        %v1531 = vunpack.c.l.b16 %v1491
        %v1532 = vunpack.c.l.b16 %v1492
        %v1533 = vpack.c.b16 %v1518, %v1517
        %v1534 = vpack.c.b16 %v1520, %v1519
        %v1535 = vpack.c.b16 %v1522, %v1521
        %v1536 = vpack.c.b16 %v1524, %v1523
        %v1537 = vpack.c.b16 %v1526, %v1525
        %v1538 = vpack.c.b16 %v1528, %v1527
        %v1539 = vpack.c.b16 %v1530, %v1529
        %v1540 = vpack.c.b16 %v1532, %v1531
        %1549 = vmatprep.subr.bf16.mxu0 0
        %1550 = vmatpush1.bf16.msra.mxu0 %v1533
        %1551 = vmatprep.subr.bf16.mxu0 0
        %1552 = vmatpush1.bf16.msra.mxu0 %v1534
        %1553 = vmatprep.subr.bf16.mxu0 0
        %1554 = vmatpush1.bf16.msra.mxu0 %v1535
        %1555 = vmatprep.subr.bf16.mxu0 0
        %1556 = vmatpush1.bf16.msra.mxu0 %v1536
        %1557 = vmatprep.subr.bf16.mxu0 0
        %1558 = vmatpush1.bf16.msra.mxu0 %v1537
        %1559 = vmatprep.subr.bf16.mxu0 0
        %1560 = vmatpush1.bf16.msra.mxu0 %v1538
        %1561 = vmatprep.subr.bf16.mxu0 0
        %1562 = vmatpush1.bf16.msra.mxu0 %v1539
        %1563 = vmatprep.subr.bf16.mxu0 0
        %1564 = vmatpush1.bf16.msra.mxu0 %v1540
        %1565 = vmatprep.subr.bf16.mxu0 0
        %1566 = vmatpush1.bf16.msra.mxu0 0
        %1567 = vmatprep.subr.bf16.mxu0 0
        %1568 = vmatpush1.bf16.msra.mxu0 0
        %1569 = vmatprep.subr.bf16.mxu0 0
        %1570 = vmatpush1.bf16.msra.mxu0 0
        %1571 = vmatprep.subr.bf16.mxu0 0
        %1572 = vmatpush1.bf16.msra.mxu0 0
        %1573 = vmatprep.subr.bf16.mxu0 0
        %1574 = vmatpush1.bf16.msra.mxu0 0
        %1575 = vmatprep.subr.bf16.mxu0 0
        %1576 = vmatpush1.bf16.msra.mxu0 0
        %1577 = vmatprep.subr.bf16.mxu0 0
        %1578 = vmatpush1.bf16.msra.mxu0 0
        %1579 = vmatprep.subr.bf16.mxu0 0
        %1580 = vmatpush1.bf16.msra.mxu0 0
        %1581 = vmatprep.mubr.bf16.mxu0 0
        %1582 = vmatmul.mubr.bf16.gmra.mrb[0].mxu0 %v1493
        %v1583 = vpop.f32.mrb[0].mxu0
        %v1584 = vadd.f32 %v1499, %v1583
        %v1585 = vpop.f32.mrb[0].mxu0
        %v1586 = vpop.f32.mrb[0].mxu0
        %v1587 = vadd.f32 %v1499, %v1586
        %v1588 = vpop.f32.mrb[0].mxu0
        %1589 = vdwg.mxu0
        %v1590 = vadd.f32 %v1068, %v1584
        %v1591 = vadd.f32 %v1069, %v1587
        %v1592 = vld [vmem:[%s833] sm:$0xf]
        %v1593 = vld [vmem:[%s833 + $0x4] sm:$0xf]
        %v1594 = vld [vmem:[%s833 + $0x8] sm:$0xf]
        %v1595 = vld [vmem:[%s833 + $0xc] sm:$0xf]
        %v1596 = vld [vmem:[%s833 + $0x10] sm:$0xf]
        %v1597 = vld [vmem:[%s833 + $0x14] sm:$0xf]
        %v1598 = vld [vmem:[%s833 + $0x18] sm:$0xf]
        %v1599 = vld [vmem:[%s833 + $0x1c] sm:$0xf]
        %v1600 = vld [vmem:[%s833 + $0x20] sm:$0xf]
        %v1601 = vld [vmem:[%s833 + $0x24] sm:$0xf]
        %v1602 = vld [vmem:[%s833 + $0x28] sm:$0xf]
        %v1603 = vld [vmem:[%s833 + $0x2c] sm:$0xf]
        %v1604 = vld [vmem:[%s833 + $0x30] sm:$0xf]
        %v1605 = vld [vmem:[%s833 + $0x34] sm:$0xf]
        %v1606 = vld [vmem:[%s833 + $0x38] sm:$0xf]
        %v1607 = vld [vmem:[%s833 + $0x3c] sm:$0xf]
        %v1608 = vpack.c.bf16 %v1591, %v1590
        %v1609 = vld [vmem:[%s841] sm:$0x1]
        %v1611 = vlaneseq
        %v1612 = vshrl.u32 %v1611, 7
        %v1613 = vsub.s32 0, %v1612
        %v1614 = vrot.slane %v1609, %v1613
        %v1632 = vunpack.c.l.b16 %v1592
        %v1633 = vunpack.c.l.b16 %v1593
        %v1634 = vunpack.c.l.b16 %v1594
        %v1635 = vunpack.c.l.b16 %v1595
        %v1636 = vunpack.c.l.b16 %v1596
        %v1637 = vunpack.c.l.b16 %v1597
        %v1638 = vunpack.c.l.b16 %v1598
        %v1639 = vunpack.c.l.b16 %v1599
        %v1640 = vunpack.c.l.b16 %v1600
        %v1641 = vunpack.c.l.b16 %v1601
        %v1642 = vunpack.c.l.b16 %v1602
        %v1643 = vunpack.c.l.b16 %v1603
        %v1644 = vunpack.c.l.b16 %v1604
        %v1645 = vunpack.c.l.b16 %v1605
        %v1646 = vunpack.c.l.b16 %v1606
        %v1647 = vunpack.c.l.b16 %v1607
        %v1648 = vpack.c.b16 %v1633, %v1632
        %v1649 = vpack.c.b16 %v1635, %v1634
        %v1650 = vpack.c.b16 %v1637, %v1636
        %v1651 = vpack.c.b16 %v1639, %v1638
        %v1652 = vpack.c.b16 %v1641, %v1640
        %v1653 = vpack.c.b16 %v1643, %v1642
        %v1654 = vpack.c.b16 %v1645, %v1644
        %v1655 = vpack.c.b16 %v1647, %v1646
        %1664 = vmatprep.subr.bf16.mxu0 0
        %1665 = vmatpush1.bf16.msra.mxu0 %v1648
        %1666 = vmatprep.subr.bf16.mxu0 0
        %1667 = vmatpush1.bf16.msra.mxu0 %v1649
        %1668 = vmatprep.subr.bf16.mxu0 0
        %1669 = vmatpush1.bf16.msra.mxu0 %v1650
        %1670 = vmatprep.subr.bf16.mxu0 0
        %1671 = vmatpush1.bf16.msra.mxu0 %v1651
        %1672 = vmatprep.subr.bf16.mxu0 0
        %1673 = vmatpush1.bf16.msra.mxu0 %v1652
        %1674 = vmatprep.subr.bf16.mxu0 0
        %1675 = vmatpush1.bf16.msra.mxu0 %v1653
        %1676 = vmatprep.subr.bf16.mxu0 0
        %1677 = vmatpush1.bf16.msra.mxu0 %v1654
        %1678 = vmatprep.subr.bf16.mxu0 0
        %1679 = vmatpush1.bf16.msra.mxu0 %v1655
        %1680 = vmatprep.subr.bf16.mxu0 0
        %1681 = vmatpush1.bf16.msra.mxu0 0
        %1682 = vmatprep.subr.bf16.mxu0 0
        %1683 = vmatpush1.bf16.msra.mxu0 0
        %1684 = vmatprep.subr.bf16.mxu0 0
        %1685 = vmatpush1.bf16.msra.mxu0 0
        %1686 = vmatprep.subr.bf16.mxu0 0
        %1687 = vmatpush1.bf16.msra.mxu0 0
        %1688 = vmatprep.subr.bf16.mxu0 0
        %1689 = vmatpush1.bf16.msra.mxu0 0
        %1690 = vmatprep.subr.bf16.mxu0 0
        %1691 = vmatpush1.bf16.msra.mxu0 0
        %1692 = vmatprep.subr.bf16.mxu0 0
        %1693 = vmatpush1.bf16.msra.mxu0 0
        %1694 = vmatprep.subr.bf16.mxu0 0
        %1695 = vmatpush1.bf16.msra.mxu0 0
        %1696 = vmatprep.mubr.bf16.mxu0 0
        %1697 = vmatmul.mubr.bf16.gmra.mrb[0].mxu0 %v1608
        %v1698 = vpop.f32.mrb[0].mxu0
        %v1699 = vadd.f32 %v1614, %v1698
        %v1700 = vpop.f32.mrb[0].mxu0
        %v1701 = vpop.f32.mrb[0].mxu0
        %v1702 = vadd.f32 %v1614, %v1701
        %v1703 = vpop.f32.mrb[0].mxu0
        %1704 = vdwg.mxu0
        %v1705 = vmax.f32 %v1699, 0.0
        %v1706 = vmax.f32 %v1702, 0.0
        %v1707 = vld [vmem:[%s850] sm:$0xf]
        %v1708 = vld [vmem:[%s850 + $0x4] sm:$0xf]
        %v1709 = vld [vmem:[%s850 + $0x8] sm:$0xf]
        %v1710 = vld [vmem:[%s850 + $0xc] sm:$0xf]
        %v1711 = vld [vmem:[%s850 + $0x10] sm:$0xf]
        %v1712 = vld [vmem:[%s850 + $0x14] sm:$0xf]
        %v1713 = vld [vmem:[%s850 + $0x18] sm:$0xf]
        %v1714 = vld [vmem:[%s850 + $0x1c] sm:$0xf]
        %v1715 = vld [vmem:[%s850 + $0x20] sm:$0xf]
        %v1716 = vld [vmem:[%s850 + $0x24] sm:$0xf]
        %v1717 = vld [vmem:[%s850 + $0x28] sm:$0xf]
        %v1718 = vld [vmem:[%s850 + $0x2c] sm:$0xf]
        %v1719 = vld [vmem:[%s850 + $0x30] sm:$0xf]
        %v1720 = vld [vmem:[%s850 + $0x34] sm:$0xf]
        %v1721 = vld [vmem:[%s850 + $0x38] sm:$0xf]
        %v1722 = vld [vmem:[%s850 + $0x3c] sm:$0xf]
        %v1723 = vpack.c.bf16 %v1706, %v1705
        %v1724 = vld [vmem:[%s858] sm:$0x1]
        %v1726 = vlaneseq
        %v1727 = vshrl.u32 %v1726, 7
        %v1728 = vsub.s32 0, %v1727
        %v1729 = vrot.slane %v1724, %v1728
        %v1747 = vunpack.c.l.b16 %v1707
        %v1748 = vunpack.c.l.b16 %v1708
        %v1749 = vunpack.c.l.b16 %v1709
        %v1750 = vunpack.c.l.b16 %v1710
        %v1751 = vunpack.c.l.b16 %v1711
        %v1752 = vunpack.c.l.b16 %v1712
        %v1753 = vunpack.c.l.b16 %v1713
        %v1754 = vunpack.c.l.b16 %v1714
        %v1755 = vunpack.c.l.b16 %v1715
        %v1756 = vunpack.c.l.b16 %v1716
        %v1757 = vunpack.c.l.b16 %v1717
        %v1758 = vunpack.c.l.b16 %v1718
        %v1759 = vunpack.c.l.b16 %v1719
        %v1760 = vunpack.c.l.b16 %v1720
        %v1761 = vunpack.c.l.b16 %v1721
        %v1762 = vunpack.c.l.b16 %v1722
        %v1763 = vpack.c.b16 %v1748, %v1747
        %v1764 = vpack.c.b16 %v1750, %v1749
        %v1765 = vpack.c.b16 %v1752, %v1751
        %v1766 = vpack.c.b16 %v1754, %v1753
        %v1767 = vpack.c.b16 %v1756, %v1755
        %v1768 = vpack.c.b16 %v1758, %v1757
        %v1769 = vpack.c.b16 %v1760, %v1759
        %v1770 = vpack.c.b16 %v1762, %v1761
        %1779 = vmatprep.subr.bf16.mxu0 0
        %1780 = vmatpush1.bf16.msra.mxu0 %v1763
        %1781 = vmatprep.subr.bf16.mxu0 0
        %1782 = vmatpush1.bf16.msra.mxu0 %v1764
        %1783 = vmatprep.subr.bf16.mxu0 0
        %1784 = vmatpush1.bf16.msra.mxu0 %v1765
        %1785 = vmatprep.subr.bf16.mxu0 0
        %1786 = vmatpush1.bf16.msra.mxu0 %v1766
        %1787 = vmatprep.subr.bf16.mxu0 0
        %1788 = vmatpush1.bf16.msra.mxu0 %v1767
        %1789 = vmatprep.subr.bf16.mxu0 0
        %1790 = vmatpush1.bf16.msra.mxu0 %v1768
        %1791 = vmatprep.subr.bf16.mxu0 0
        %1792 = vmatpush1.bf16.msra.mxu0 %v1769
        %1793 = vmatprep.subr.bf16.mxu0 0
        %1794 = vmatpush1.bf16.msra.mxu0 %v1770
        %1795 = vmatprep.subr.bf16.mxu0 0
        %1796 = vmatpush1.bf16.msra.mxu0 0
        %1797 = vmatprep.subr.bf16.mxu0 0
        %1798 = vmatpush1.bf16.msra.mxu0 0
        %1799 = vmatprep.subr.bf16.mxu0 0
        %1800 = vmatpush1.bf16.msra.mxu0 0
        %1801 = vmatprep.subr.bf16.mxu0 0
        %1802 = vmatpush1.bf16.msra.mxu0 0
        %1803 = vmatprep.subr.bf16.mxu0 0
        %1804 = vmatpush1.bf16.msra.mxu0 0
        %1805 = vmatprep.subr.bf16.mxu0 0
        %1806 = vmatpush1.bf16.msra.mxu0 0
        %1807 = vmatprep.subr.bf16.mxu0 0
        %1808 = vmatpush1.bf16.msra.mxu0 0
        %1809 = vmatprep.subr.bf16.mxu0 0
        %1810 = vmatpush1.bf16.msra.mxu0 0
        %1811 = vmatprep.mubr.bf16.mxu0 0
        %1812 = vmatmul.mubr.bf16.gmra.mrb[0].mxu0 %v1723
        %v1813 = vpop.f32.mrb[0].mxu0
        %v1814 = vadd.f32 %v1729, %v1813
        %v1815 = vpop.f32.mrb[0].mxu0
        %v1816 = vpop.f32.mrb[0].mxu0
        %v1817 = vadd.f32 %v1729, %v1816
        %v1818 = vpop.f32.mrb[0].mxu0
        %1819 = vdwg.mxu0
        %v1820 = vadd.f32 %v1590, %v1814
        %v1821 = vadd.f32 %v1591, %v1817
        %1822 = vst [vmem:[#allocation2] sm:$0xff] %v1820
        %1823 = vst [vmem:[#allocation2 + $0x8] sm:$0xff] %v1821
        %p1824 = scmp.eq.s32.totalorder %s50, 1
        // Predicated region
        $region149: #{pack_decoder_forward.1} parent=91 // pred_check
          %p1825 = pneg %p1824
        $region150: #{pack_decoder_forward.1} parent=91 // pred_check_branch
          %1827 = sbr.rel (%p1825) target = $region152
        $region151: #{pack_decoder_forward.1} parent=91 // pred_region
          %v1828 = vld [vmem:[#allocation18] sm:$0xf]
          %v1829 = vld [vmem:[#allocation18 + $0x4] sm:$0xf]
          %v1830 = vld [vmem:[#allocation18 + $0x8] sm:$0xf]
          %v1831 = vld [vmem:[#allocation18 + $0xc] sm:$0xf]
          %v1832 = vld [vmem:[#allocation18 + $0x10] sm:$0xf]
          %v1833 = vld [vmem:[#allocation18 + $0x14] sm:$0xf]
          %v1834 = vld [vmem:[#allocation18 + $0x18] sm:$0xf]
          %v1835 = vld [vmem:[#allocation18 + $0x1c] sm:$0xf]
          %v1836 = vld [vmem:[#allocation18 + $0x20] sm:$0xf]
          %v1837 = vld [vmem:[#allocation18 + $0x24] sm:$0xf]
          %v1838 = vld [vmem:[#allocation18 + $0x28] sm:$0xf]
          %v1839 = vld [vmem:[#allocation18 + $0x2c] sm:$0xf]
          %v1840 = vld [vmem:[#allocation18 + $0x30] sm:$0xf]
          %v1841 = vld [vmem:[#allocation18 + $0x34] sm:$0xf]
          %v1842 = vld [vmem:[#allocation18 + $0x38] sm:$0xf]
          %v1843 = vld [vmem:[#allocation18 + $0x3c] sm:$0xf]
          %v1844 = vpack.c.bf16 %v1821, %v1820
          %v1845 = vld [vmem:[#allocation20] sm:$0x1]
          %v1847 = vlaneseq
          %v1848 = vshrl.u32 %v1847, 7
          %v1849 = vsub.s32 0, %v1848
          %v1850 = vrot.slane %v1845, %v1849
          %v1868 = vunpack.c.l.b16 %v1828
          %v1869 = vunpack.c.l.b16 %v1829
          %v1870 = vunpack.c.l.b16 %v1830
          %v1871 = vunpack.c.l.b16 %v1831
          %v1872 = vunpack.c.l.b16 %v1832
          %v1873 = vunpack.c.l.b16 %v1833
          %v1874 = vunpack.c.l.b16 %v1834
          %v1875 = vunpack.c.l.b16 %v1835
          %v1876 = vunpack.c.l.b16 %v1836
          %v1877 = vunpack.c.l.b16 %v1837
          %v1878 = vunpack.c.l.b16 %v1838
          %v1879 = vunpack.c.l.b16 %v1839
          %v1880 = vunpack.c.l.b16 %v1840
          %v1881 = vunpack.c.l.b16 %v1841
          %v1882 = vunpack.c.l.b16 %v1842
          %v1883 = vunpack.c.l.b16 %v1843
          %v1884 = vpack.c.b16 %v1869, %v1868
          %v1885 = vpack.c.b16 %v1871, %v1870
          %v1886 = vpack.c.b16 %v1873, %v1872
          %v1887 = vpack.c.b16 %v1875, %v1874
          %v1888 = vpack.c.b16 %v1877, %v1876
          %v1889 = vpack.c.b16 %v1879, %v1878
          %v1890 = vpack.c.b16 %v1881, %v1880
          %v1891 = vpack.c.b16 %v1883, %v1882
          %1900 = vmatprep.subr.bf16.mxu0 0
          %1901 = vmatpush1.bf16.msra.mxu0 %v1884
          %1902 = vmatprep.subr.bf16.mxu0 0
          %1903 = vmatpush1.bf16.msra.mxu0 %v1885
          %1904 = vmatprep.subr.bf16.mxu0 0
          %1905 = vmatpush1.bf16.msra.mxu0 %v1886
          %1906 = vmatprep.subr.bf16.mxu0 0
          %1907 = vmatpush1.bf16.msra.mxu0 %v1887
          %1908 = vmatprep.subr.bf16.mxu0 0
          %1909 = vmatpush1.bf16.msra.mxu0 %v1888
          %1910 = vmatprep.subr.bf16.mxu0 0
          %1911 = vmatpush1.bf16.msra.mxu0 %v1889
          %1912 = vmatprep.subr.bf16.mxu0 0
          %1913 = vmatpush1.bf16.msra.mxu0 %v1890
          %1914 = vmatprep.subr.bf16.mxu0 0
          %1915 = vmatpush1.bf16.msra.mxu0 %v1891
          %1916 = vmatprep.subr.bf16.mxu0 0
          %1917 = vmatpush1.bf16.msra.mxu0 0
          %1918 = vmatprep.subr.bf16.mxu0 0
          %1919 = vmatpush1.bf16.msra.mxu0 0
          %1920 = vmatprep.subr.bf16.mxu0 0
          %1921 = vmatpush1.bf16.msra.mxu0 0
          %1922 = vmatprep.subr.bf16.mxu0 0
          %1923 = vmatpush1.bf16.msra.mxu0 0
          %1924 = vmatprep.subr.bf16.mxu0 0
          %1925 = vmatpush1.bf16.msra.mxu0 0
          %1926 = vmatprep.subr.bf16.mxu0 0
          %1927 = vmatpush1.bf16.msra.mxu0 0
          %1928 = vmatprep.subr.bf16.mxu0 0
          %1929 = vmatpush1.bf16.msra.mxu0 0
          %1930 = vmatprep.subr.bf16.mxu0 0
          %1931 = vmatpush1.bf16.msra.mxu0 0
          %1932 = vmatprep.mubr.bf16.mxu0 0
          %1933 = vmatmul.mubr.bf16.gmra.mrb[0].mxu0 %v1844
          %v1934 = vpop.f32.mrb[0].mxu0
          %v1935 = vadd.f32 %v1850, %v1934
          %v1936 = vpop.f32.mrb[0].mxu0
          %v1937 = vpop.f32.mrb[0].mxu0
          %v1938 = vadd.f32 %v1850, %v1937
          %v1939 = vpop.f32.mrb[0].mxu0
          %1940 = vdwg.mxu0
          %v1941 = vmax.f32 %v1935, 0.0
          %v1942 = vmax.f32 %v1938, 0.0
          %v1943 = vld [vmem:[#allocation21] sm:$0xf]
          %v1944 = vld [vmem:[#allocation21 + $0x4] sm:$0xf]
          %v1945 = vld [vmem:[#allocation21 + $0x8] sm:$0xf]
          %v1946 = vld [vmem:[#allocation21 + $0xc] sm:$0xf]
          %v1947 = vld [vmem:[#allocation21 + $0x10] sm:$0xf]
          %v1948 = vld [vmem:[#allocation21 + $0x14] sm:$0xf]
          %v1949 = vld [vmem:[#allocation21 + $0x18] sm:$0xf]
          %v1950 = vld [vmem:[#allocation21 + $0x1c] sm:$0xf]
          %v1951 = vld [vmem:[#allocation21 + $0x20] sm:$0xf]
          %v1952 = vld [vmem:[#allocation21 + $0x24] sm:$0xf]
          %v1953 = vld [vmem:[#allocation21 + $0x28] sm:$0xf]
          %v1954 = vld [vmem:[#allocation21 + $0x2c] sm:$0xf]
          %v1955 = vld [vmem:[#allocation21 + $0x30] sm:$0xf]
          %v1956 = vld [vmem:[#allocation21 + $0x34] sm:$0xf]
          %v1957 = vld [vmem:[#allocation21 + $0x38] sm:$0xf]
          %v1958 = vld [vmem:[#allocation21 + $0x3c] sm:$0xf]
          %v1959 = vpack.c.bf16 %v1942, %v1941
          %v1960 = vld [vmem:[#allocation23] sm:$0x1]
          %v1962 = vlaneseq
          %v1963 = vshrl.u32 %v1962, 7
          %v1964 = vsub.s32 0, %v1963
          %v1965 = vrot.slane %v1960, %v1964
          %v1983 = vunpack.c.l.b16 %v1943
          %v1984 = vunpack.c.l.b16 %v1944
          %v1985 = vunpack.c.l.b16 %v1945
          %v1986 = vunpack.c.l.b16 %v1946
          %v1987 = vunpack.c.l.b16 %v1947
          %v1988 = vunpack.c.l.b16 %v1948
          %v1989 = vunpack.c.l.b16 %v1949
          %v1990 = vunpack.c.l.b16 %v1950
          %v1991 = vunpack.c.l.b16 %v1951
          %v1992 = vunpack.c.l.b16 %v1952
          %v1993 = vunpack.c.l.b16 %v1953
          %v1994 = vunpack.c.l.b16 %v1954
          %v1995 = vunpack.c.l.b16 %v1955
          %v1996 = vunpack.c.l.b16 %v1956
          %v1997 = vunpack.c.l.b16 %v1957
          %v1998 = vunpack.c.l.b16 %v1958
          %v1999 = vpack.c.b16 %v1984, %v1983
          %v2000 = vpack.c.b16 %v1986, %v1985
          %v2001 = vpack.c.b16 %v1988, %v1987
          %v2002 = vpack.c.b16 %v1990, %v1989
          %v2003 = vpack.c.b16 %v1992, %v1991
          %v2004 = vpack.c.b16 %v1994, %v1993
          %v2005 = vpack.c.b16 %v1996, %v1995
          %v2006 = vpack.c.b16 %v1998, %v1997
          %2015 = vmatprep.subr.bf16.mxu0 0
          %2016 = vmatpush1.bf16.msra.mxu0 %v1999
          %2017 = vmatprep.subr.bf16.mxu0 0
          %2018 = vmatpush1.bf16.msra.mxu0 %v2000
          %2019 = vmatprep.subr.bf16.mxu0 0
          %2020 = vmatpush1.bf16.msra.mxu0 %v2001
          %2021 = vmatprep.subr.bf16.mxu0 0
          %2022 = vmatpush1.bf16.msra.mxu0 %v2002
          %2023 = vmatprep.subr.bf16.mxu0 0
          %2024 = vmatpush1.bf16.msra.mxu0 %v2003
          %2025 = vmatprep.subr.bf16.mxu0 0
          %2026 = vmatpush1.bf16.msra.mxu0 %v2004
          %2027 = vmatprep.subr.bf16.mxu0 0
          %2028 = vmatpush1.bf16.msra.mxu0 %v2005
          %2029 = vmatprep.subr.bf16.mxu0 0
          %2030 = vmatpush1.bf16.msra.mxu0 %v2006
          %2031 = vmatprep.subr.bf16.mxu0 0
          %2032 = vmatpush1.bf16.msra.mxu0 0
          %2033 = vmatprep.subr.bf16.mxu0 0
          %2034 = vmatpush1.bf16.msra.mxu0 0
          %2035 = vmatprep.subr.bf16.mxu0 0
          %2036 = vmatpush1.bf16.msra.mxu0 0
          %2037 = vmatprep.subr.bf16.mxu0 0
          %2038 = vmatpush1.bf16.msra.mxu0 0
          %2039 = vmatprep.subr.bf16.mxu0 0
          %2040 = vmatpush1.bf16.msra.mxu0 0
          %2041 = vmatprep.subr.bf16.mxu0 0
          %2042 = vmatpush1.bf16.msra.mxu0 0
          %2043 = vmatprep.subr.bf16.mxu0 0
          %2044 = vmatpush1.bf16.msra.mxu0 0
          %2045 = vmatprep.subr.bf16.mxu0 0
          %2046 = vmatpush1.bf16.msra.mxu0 0
          %2047 = vmatprep.mubr.bf16.mxu0 0
          %2048 = vmatmul.mubr.bf16.gmra.mrb[0].mxu0 %v1959
          %v2049 = vpop.f32.mrb[0].mxu0
          %v2050 = vadd.f32 %v1965, %v2049
          %v2051 = vpop.f32.mrb[0].mxu0
          %v2052 = vpop.f32.mrb[0].mxu0
          %v2053 = vadd.f32 %v1965, %v2052
          %v2054 = vpop.f32.mrb[0].mxu0
          %2055 = vdwg.mxu0
          %2056 = vst [vmem:[#allocation24] sm:$0xff] %v2050
          %2057 = vst [vmem:[#allocation24 + $0x8] sm:$0xff] %v2053
        $region152: #{pack_decoder_forward.1} parent=91 // pred_fallthru
          _
        // Predicated region
        $region153: #{pack_decoder_forward.1} parent=91 // pred_check
          %p2058 = pneg %p513
        $region154: #{pack_decoder_forward.1} parent=91 // pred_check_branch
          %2060 = sbr.rel (%p2058) target = $region156
        $region155: #{pack_decoder_forward.1} parent=91 // pred_region
          %s2061 = smul.u32 2, %s49
          %s2063 = ssub.s32 256, 256
          %2064 = vsyncadd [#allocation5], %s2063
          %s2065 = smul.addr %s2061, 128
          %s2066 = scalar_lea.hbm %s18, %s2065
          %s2067 = sshll.u32 [#allocation24], 4
          %s2068 = int_to_ptr.vmem [resolvable:$true] %s2067
          %2073 = dma.vmem_to_hbm [thread:$0]  %s2068, 256, %s2066, [#allocation5], 128, 128, 8
        $region156: #{pack_decoder_forward.1} parent=91 // pred_fallthru
          _
        // Predicated region
        $region157: #{pack_decoder_forward.1} parent=91 // pred_check
          %p2074 = pneg %p513
        $region158: #{pack_decoder_forward.1} parent=91 // pred_check_branch
          %2076 = sbr.rel (%p2074) target = $region160
        $region159: #{pack_decoder_forward.1} parent=91 // pred_region
          %2077 = dma.done [#allocation5], 256
        $region160: #{pack_decoder_forward.1} parent=91 // pred_fallthru
          _
      $region92: #{pack_decoder_forward.1} parent=5 // pred_fallthru
        _
      %p2078 = scmp.le.s32.totalorder 2, %s40
      // Predicated region
      $region161: #{pack_decoder_forward.1} parent=5 // pred_check
        %p2079 = pneg %p2078
      $region162: #{pack_decoder_forward.1} parent=5 // pred_check_branch
        %2081 = sbr.rel (%p2079) target = $region164
      $region163: #{pack_decoder_forward.1} parent=5 // pred_region
        %s2082 = ssub.s32 %s40, 2
      $region164: #{pack_decoder_forward.1} parent=5 // pred_fallthru
        _
    $region6: #{pack_decoder_forward.1} parent=1 // loop_footer
      %s44 = sadd.s32 1, %s40
    $region7: #{pack_decoder_forward.1} parent=1 // loop_footer_branch
      %39 = sbr.rel target = $region3
    $region8: #{pack_decoder_forward.1} parent=1 // loop_exit
      _
    %2083 = vsyncpa [#allocation4], 1
    %s2084 = scalar_lea.sflag [#allocation4], 1
    %2085 = vsyncpa %s2084, 1
    %2086 = vsyncpa [#allocation7], 1
    %s2087 = scalar_lea.sflag [#allocation7], 1
    %2088 = vsyncpa %s2087, 1
    %2089 = vsyncpa [#allocation10], 1
    %s2090 = scalar_lea.sflag [#allocation10], 1
    %2091 = vsyncpa %s2090, 1
    %2092 = vsyncpa [#allocation13], 1
    %s2093 = scalar_lea.sflag [#allocation13], 1
    %2094 = vsyncpa %s2093, 1
    %2095 = vsyncpa [#allocation16], 1
    %s2096 = scalar_lea.sflag [#allocation16], 1
    %2097 = vsyncpa %s2096, 1
    %2098 = vsyncpa [#allocation19], 1
    %2099 = vsyncpa [#allocation22], 1
    %2100 = vsyncpa [#allocation5], 1
    %s2101 = scalar_lea.sflag [#allocation5], 1
    %2102 = vsyncpa %s2101, 1

// kernel: pack_decoder_forward.1
$region0: #{pack_decoder_forward.1}
  #allocation0 [shape = 'u32[]', space=smem, size = 0x4, offset = 0x4, fixed_abs, tag = 'smem constant byte address 0x4 - core index']
  #allocation1 [shape = 'u32[144,128]{1,0:T(1,128)}', space=vmem, size = 0x12000, scoped, tag = 'internal scratch']
  #allocation2 [shape = 'f32[16,128]{1,0:T(8,128)}', space=vmem, size = 0x2000, scoped, tag = 'scratch operand']
  %s0 = inlined_call_operand.vmem [shape: bf16[16,16], index: 0, kind: input, shape index: {}]
  %s1 = inlined_call_operand.vmem [shape: bf16[16,32], index: 1, kind: input, shape index: {}]
  %s2 = inlined_call_operand.hbm [shape: bf16[16,128], index: 2, kind: input, shape index: {}]
  %s3 = inlined_call_operand.vmem [shape: f32[1,128], index: 3, kind: input, shape index: {}]
  %s4 = inlined_call_operand.hbm [shape: bf16[2,128,128], index: 4, kind: input, shape index: {}]
  %s5 = inlined_call_operand.hbm [shape: f32[2,1,128], index: 5, kind: input, shape index: {}]
  %s6 = inlined_call_operand.vmem [shape: bf16[2,32,256], index: 6, kind: input, shape index: {}]
  %s7 = inlined_call_operand.vmem [shape: f32[2,1,256], index: 7, kind: input, shape index: {}]
  %s8 = inlined_call_operand.hbm [shape: bf16[2,128,128], index: 8, kind: input, shape index: {}]
  %s9 = inlined_call_operand.hbm [shape: f32[2,1,128], index: 9, kind: input, shape index: {}]
  %s10 = inlined_call_operand.hbm [shape: bf16[2,128,128], index: 10, kind: input, shape index: {}]
  %s11 = inlined_call_operand.hbm [shape: f32[2,1,128], index: 11, kind: input, shape index: {}]
  %s12 = inlined_call_operand.hbm [shape: bf16[2,128,128], index: 12, kind: input, shape index: {}]
  %s13 = inlined_call_operand.hbm [shape: f32[2,1,128], index: 13, kind: input, shape index: {}]
  %s14 = inlined_call_operand.hbm [shape: bf16[128,128], index: 14, kind: input, shape index: {}]
  %s15 = inlined_call_operand.hbm [shape: f32[1,128], index: 15, kind: input, shape index: {}]
  %s16 = inlined_call_operand.hbm [shape: bf16[128,128], index: 16, kind: input, shape index: {}]
  %s17 = inlined_call_operand.hbm [shape: f32[1,128], index: 17, kind: input, shape index: {}]
  %s18 = inlined_call_operand.hbm [shape: f32[16,128], index: 18, kind: output, shape index: {}]
  %s19 = sld [smem:[#allocation0]]
  $region165: #{pack_decoder_forward.1} parent=0
    _
  %s21 = ssub.s32 1, %s19
  %s22 = scalar_select 0, %s21, %s19
  $region1: #{pack_decoder_forward.1} parent=0
    #allocation3 [shape = 'u8[4096]{0}', space=vmem, size = 0x1000, scoped, tag = 'input window, operand 2, single buffered']
    #allocation4 [shape = 's32[2]{0}', space=sflag, size = 0x8, scoped, tag = 'scoped memory for pack_decoder_forward.1']
    #allocation5 [shape = 's32[2]{0}', space=sflag, size = 0x8, scoped, tag = 'scoped memory for pack_decoder_forward.1']
    #allocation6 [shape = 'u8[65536]{0}', space=vmem, size = 0x10000, scoped, tag = 'input window, operand 4']
    #allocation7 [shape = 's32[2]{0}', space=sflag, size = 0x8, scoped, tag = 'scoped memory for pack_decoder_forward.1']
    #allocation8 [shape = 'u8[1024]{0}', space=vmem, size = 0x400, scoped, tag = 'input window, operand 5']
    #allocation9 [shape = 'u8[65536]{0}', space=vmem, size = 0x10000, scoped, tag = 'input window, operand 8']
    #allocation10 [shape = 's32[2]{0}', space=sflag, size = 0x8, scoped, tag = 'scoped memory for pack_decoder_forward.1']
    #allocation11 [shape = 'u8[1024]{0}', space=vmem, size = 0x400, scoped, tag = 'input window, operand 9']
    #allocation12 [shape = 'u8[65536]{0}', space=vmem, size = 0x10000, scoped, tag = 'input window, operand 10']
    #allocation13 [shape = 's32[2]{0}', space=sflag, size = 0x8, scoped, tag = 'scoped memory for pack_decoder_forward.1']
    #allocation14 [shape = 'u8[1024]{0}', space=vmem, size = 0x400, scoped, tag = 'input window, operand 11']
    #allocation15 [shape = 'u8[65536]{0}', space=vmem, size = 0x10000, scoped, tag = 'input window, operand 12']
    #allocation16 [shape = 's32[2]{0}', space=sflag, size = 0x8, scoped, tag = 'scoped memory for pack_decoder_forward.1']
    #allocation17 [shape = 'u8[1024]{0}', space=vmem, size = 0x400, scoped, tag = 'input window, operand 13']
    #allocation18 [shape = 'u8[32768]{0}', space=vmem, size = 0x8000, scoped, tag = 'input window, operand 14, single buffered']
    #allocation19 [shape = 's32[1]{0}', space=sflag, size = 0x4, scoped, tag = 'scoped memory for pack_decoder_forward.1']
    #allocation20 [shape = 'u8[512]{0}', space=vmem, size = 0x400, scoped, tag = 'input window, operand 15, single buffered']
    #allocation21 [shape = 'u8[32768]{0}', space=vmem, size = 0x8000, scoped, tag = 'input window, operand 16, single buffered']
    #allocation22 [shape = 's32[1]{0}', space=sflag, size = 0x4, scoped, tag = 'scoped memory for pack_decoder_forward.1']
    #allocation23 [shape = 'u8[512]{0}', space=vmem, size = 0x400, scoped, tag = 'input window, operand 17, single buffered']
    #allocation24 [shape = 'u8[8192]{0}', space=vmem, size = 0x2000, scoped, tag = 'output window, operand 0, single buffered']
    %23 = vsyncpa [#allocation4], 0
    %24 = vsyncpa [#allocation7], 0
    %s25 = scalar_lea.sflag [#allocation7], 1
    %26 = vsyncpa %s25, 0
    %27 = vsyncpa [#allocation10], 0
    %s28 = scalar_lea.sflag [#allocation10], 1
    %29 = vsyncpa %s28, 0
    %30 = vsyncpa [#allocation13], 0
    %s31 = scalar_lea.sflag [#allocation13], 1
    %32 = vsyncpa %s31, 0
    %33 = vsyncpa [#allocation16], 0
    %s34 = scalar_lea.sflag [#allocation16], 1
    %35 = vsyncpa %s34, 0
    %36 = vsyncpa [#allocation19], 0
    %37 = vsyncpa [#allocation22], 0
    %38 = vsyncpa [#allocation5], 0
    loop: start=0, step=1, limit=4
    $region2: #{pack_decoder_forward.1} parent=1 // loop_pre_header
      _
    $region3: #{pack_decoder_forward.1} parent=1 // loop_header
      %s40 = sphi 0, %s44
      %p41 = scmp.ge.s32.totalorder %s40, 4
      %s47 = sphi 0, %s59
      %s48 = sphi 0, %s55
      %s49 = sphi 0, %s47
      %s50 = sphi 0, %s48
      %s51 = sphi 0, %s49
      %s52 = sphi 0, %s50
      %s62 = sphi 0, %s64
      %s65 = sphi 0, %s62
      %s66 = sphi 0, %s65
      %s82 = sphi 0, %s66
      %s88 = sphi 0, %s90
      %s91 = sphi 0, %s88
      %s92 = sphi 0, %s91
      %s108 = sphi 0, %s92
      %s112 = sphi 0, %s112
      %s114 = sphi 0, %s112
      %s115 = sphi 0, %s114
      %s129 = sphi 0, %s115
      %s133 = sphi 0, %s133
      %s135 = sphi 0, %s133
      %s136 = sphi 0, %s135
      %s150 = sphi 0, %s136
      %s156 = sphi 0, %s158
      %s159 = sphi 0, %s156
      %s160 = sphi 0, %s159
      %s176 = sphi 0, %s160
      %s182 = sphi 0, %s184
      %s185 = sphi 0, %s182
      %s186 = sphi 0, %s185
      %s202 = sphi 0, %s186
      %s208 = sphi 0, %s210
      %s211 = sphi 0, %s208
      %s212 = sphi 0, %s211
      %s228 = sphi 0, %s212
      %s234 = sphi 0, %s236
      %s237 = sphi 0, %s234
      %s238 = sphi 0, %s237
      %s254 = sphi 0, %s238
      %s260 = sphi 0, %s262
      %s263 = sphi 0, %s260
      %s264 = sphi 0, %s263
      %s280 = sphi 0, %s264
      %s286 = sphi 0, %s288
      %s289 = sphi 0, %s286
      %s290 = sphi 0, %s289
      %s306 = sphi 0, %s290
      %s312 = sphi 0, %s314
      %s315 = sphi 0, %s312
      %s316 = sphi 0, %s315
      %s332 = sphi 0, %s316
      %s338 = sphi 0, %s340
      %s341 = sphi 0, %s338
      %s342 = sphi 0, %s341
      %s358 = sphi 0, %s342
      %s364 = sphi 0, %s366
      %s367 = sphi 0, %s364
      %s368 = sphi 0, %s367
      %s384 = sphi 0, %s368
      %s390 = sphi 0, %s392
      %s393 = sphi 0, %s390
      %s394 = sphi 0, %s393
      %s410 = sphi 0, %s394
      %s414 = sphi 0, %s414
      %s416 = sphi 0, %s414
      %s417 = sphi 0, %s416
      %s431 = sphi 0, %s417
      %s435 = sphi 0, %s435
      %s437 = sphi 0, %s435
      %s438 = sphi 0, %s437
      %s452 = sphi 0, %s438
      %s456 = sphi 0, %s456
      %s458 = sphi 0, %s456
      %s459 = sphi 0, %s458
      %s473 = sphi 0, %s459
      %s477 = sphi 0, %s477
      %s479 = sphi 0, %s477
      %s480 = sphi 0, %s479
      %s494 = sphi 0, %s480
      %s500 = sphi 0, %s502
      %s503 = sphi 0, %s500
      %s504 = sphi 0, %s503
      %s520 = sphi 0, %s504
    $region4: #{pack_decoder_forward.1} parent=1 // loop_header_branch
      %43 = sbr.rel (%p41) target = $region8
    $region5: #{pack_decoder_forward.1} parent=1 // loop_body
      %s45 = ssub.s32 %s40, 1
      %s46 = ssub.s32 %s40, 2
      %s53 = sadd.s32 1, %s48
      %p54 = scmp.ge.s32.totalorder %s53, 2
      %s55 = scalar_select %p54, 0, %s53
      %s56 = sadd.s32 1, %s47
      %s57 = scalar_select %p54, %s56, %s47
      %p58 = scmp.ge.s32.totalorder %s57, 1
      %s59 = scalar_select %p58, 0, %s57
      %s60 = ssub.s32 %s47, %s59
      %p61 = scmp.eq.s32.totalorder %s60, 0
      %s63 = sadd.s32 %s62, 1
      %s64 = scalar_select %p61, %s62, %s63
      %p67 = pneg %p61
      %p68 = scmp.eq.s32.totalorder %s40, 1
      %p69 = por %p67, %p68
      %p70 = scmp.ne.s32.totalorder %s62, %s65
      %p71 = scmp.eq.s32.totalorder %s40, 0
      %p72 = por %p70, %p71
      %p73 = scmp.ne.s32.totalorder %s62, %s65
      %p74 = scmp.eq.s32.totalorder %s45, 1
      %p75 = por %p73, %p74
      %p76 = scmp.ne.s32.totalorder %s65, %s66
      %p77 = scmp.eq.s32.totalorder %s45, 0
      %p78 = por %p76, %p77
      %p79 = scmp.ne.s32.totalorder %s65, %s66
      %p80 = scmp.eq.s32.totalorder %s46, 1
      %p81 = por %p79, %p80
      %p83 = scmp.ne.s32.totalorder %s66, %s82
      %p84 = scmp.eq.s32.totalorder %s46, 0
      %p85 = por %p83, %p84
      %s86 = ssub.s32 %s47, %s59
      %p87 = scmp.eq.s32.totalorder %s86, 0
      %s89 = sadd.s32 %s88, 1
      %s90 = scalar_select %p87, %s88, %s89
      %p93 = pneg %p87
      %p94 = scmp.eq.s32.totalorder %s40, 1
      %p95 = por %p93, %p94
      %p96 = scmp.ne.s32.totalorder %s88, %s91
      %p97 = scmp.eq.s32.totalorder %s40, 0
      %p98 = por %p96, %p97
      %p99 = scmp.ne.s32.totalorder %s88, %s91
      %p100 = scmp.eq.s32.totalorder %s45, 1
      %p101 = por %p99, %p100
      %p102 = scmp.ne.s32.totalorder %s91, %s92
      %p103 = scmp.eq.s32.totalorder %s45, 0
      %p104 = por %p102, %p103
      %p105 = scmp.ne.s32.totalorder %s91, %s92
      %p106 = scmp.eq.s32.totalorder %s46, 1
      %p107 = por %p105, %p106
      %p109 = scmp.ne.s32.totalorder %s92, %s108
      %p110 = scmp.eq.s32.totalorder %s46, 0
      %p111 = por %p109, %p110
      %s113 = sadd.s32 %s112, 1
      %p116 = scmp.eq.s32.totalorder %s40, 1
      %p117 = scmp.ne.s32.totalorder %s112, %s114
      %p118 = scmp.eq.s32.totalorder %s40, 0
      %p119 = por %p117, %p118
      %p120 = scmp.ne.s32.totalorder %s112, %s114
      %p121 = scmp.eq.s32.totalorder %s45, 1
      %p122 = por %p120, %p121
      %p123 = scmp.ne.s32.totalorder %s114, %s115
      %p124 = scmp.eq.s32.totalorder %s45, 0
      %p125 = por %p123, %p124
      %p126 = scmp.ne.s32.totalorder %s114, %s115
      %p127 = scmp.eq.s32.totalorder %s46, 1
      %p128 = por %p126, %p127
      %p130 = scmp.ne.s32.totalorder %s115, %s129
      %p131 = scmp.eq.s32.totalorder %s46, 0
      %p132 = por %p130, %p131
      %s134 = sadd.s32 %s133, 1
      %p137 = scmp.eq.s32.totalorder %s40, 1
      %p138 = scmp.ne.s32.totalorder %s133, %s135
      %p139 = scmp.eq.s32.totalorder %s40, 0
      %p140 = por %p138, %p139
      %p141 = scmp.ne.s32.totalorder %s133, %s135
      %p142 = scmp.eq.s32.totalorder %s45, 1
      %p143 = por %p141, %p142
      %p144 = scmp.ne.s32.totalorder %s135, %s136
      %p145 = scmp.eq.s32.totalorder %s45, 0
      %p146 = por %p144, %p145
      %p147 = scmp.ne.s32.totalorder %s135, %s136
      %p148 = scmp.eq.s32.totalorder %s46, 1
      %p149 = por %p147, %p148
      %p151 = scmp.ne.s32.totalorder %s136, %s150
      %p152 = scmp.eq.s32.totalorder %s46, 0
      %p153 = por %p151, %p152
      %s154 = ssub.s32 %s48, %s55
      %p155 = scmp.eq.s32.totalorder %s154, 0
      %s157 = sadd.s32 %s156, 1
      %s158 = scalar_select %p155, %s156, %s157
      %p161 = pneg %p155
      %p162 = scmp.eq.s32.totalorder %s40, 1
      %p163 = por %p161, %p162
      %p164 = scmp.ne.s32.totalorder %s156, %s159
      %p165 = scmp.eq.s32.totalorder %s40, 0
      %p166 = por %p164, %p165
      %p167 = scmp.ne.s32.totalorder %s156, %s159
      %p168 = scmp.eq.s32.totalorder %s45, 1
      %p169 = por %p167, %p168
      %p170 = scmp.ne.s32.totalorder %s159, %s160
      %p171 = scmp.eq.s32.totalorder %s45, 0
      %p172 = por %p170, %p171
      %p173 = scmp.ne.s32.totalorder %s159, %s160
      %p174 = scmp.eq.s32.totalorder %s46, 1
      %p175 = por %p173, %p174
      %p177 = scmp.ne.s32.totalorder %s160, %s176
      %p178 = scmp.eq.s32.totalorder %s46, 0
      %p179 = por %p177, %p178
      %s180 = ssub.s32 %s48, %s55
      %p181 = scmp.eq.s32.totalorder %s180, 0
      %s183 = sadd.s32 %s182, 1
      %s184 = scalar_select %p181, %s182, %s183
      %p187 = pneg %p181
      %p188 = scmp.eq.s32.totalorder %s40, 1
      %p189 = por %p187, %p188
      %p190 = scmp.ne.s32.totalorder %s182, %s185
      %p191 = scmp.eq.s32.totalorder %s40, 0
      %p192 = por %p190, %p191
      %p193 = scmp.ne.s32.totalorder %s182, %s185
      %p194 = scmp.eq.s32.totalorder %s45, 1
      %p195 = por %p193, %p194
      %p196 = scmp.ne.s32.totalorder %s185, %s186
      %p197 = scmp.eq.s32.totalorder %s45, 0
      %p198 = por %p196, %p197
      %p199 = scmp.ne.s32.totalorder %s185, %s186
      %p200 = scmp.eq.s32.totalorder %s46, 1
      %p201 = por %p199, %p200
      %p203 = scmp.ne.s32.totalorder %s186, %s202
      %p204 = scmp.eq.s32.totalorder %s46, 0
      %p205 = por %p203, %p204
      %s206 = ssub.s32 %s48, %s55
      %p207 = scmp.eq.s32.totalorder %s206, 0
      %s209 = sadd.s32 %s208, 1
      %s210 = scalar_select %p207, %s208, %s209
      %p213 = pneg %p207
      %p214 = scmp.eq.s32.totalorder %s40, 1
      %p215 = por %p213, %p214
      %p216 = scmp.ne.s32.totalorder %s208, %s211
      %p217 = scmp.eq.s32.totalorder %s40, 0
      %p218 = por %p216, %p217
      %p219 = scmp.ne.s32.totalorder %s208, %s211
      %p220 = scmp.eq.s32.totalorder %s45, 1
      %p221 = por %p219, %p220
      %p222 = scmp.ne.s32.totalorder %s211, %s212
      %p223 = scmp.eq.s32.totalorder %s45, 0
      %p224 = por %p222, %p223
      %p225 = scmp.ne.s32.totalorder %s211, %s212
      %p226 = scmp.eq.s32.totalorder %s46, 1
      %p227 = por %p225, %p226
      %p229 = scmp.ne.s32.totalorder %s212, %s228
      %p230 = scmp.eq.s32.totalorder %s46, 0
      %p231 = por %p229, %p230
      %s232 = ssub.s32 %s48, %s55
      %p233 = scmp.eq.s32.totalorder %s232, 0
      %s235 = sadd.s32 %s234, 1
      %s236 = scalar_select %p233, %s234, %s235
      %p239 = pneg %p233
      %p240 = scmp.eq.s32.totalorder %s40, 1
      %p241 = por %p239, %p240
      %p242 = scmp.ne.s32.totalorder %s234, %s237
      %p243 = scmp.eq.s32.totalorder %s40, 0
      %p244 = por %p242, %p243
      %p245 = scmp.ne.s32.totalorder %s234, %s237
      %p246 = scmp.eq.s32.totalorder %s45, 1
      %p247 = por %p245, %p246
      %p248 = scmp.ne.s32.totalorder %s237, %s238
      %p249 = scmp.eq.s32.totalorder %s45, 0
      %p250 = por %p248, %p249
      %p251 = scmp.ne.s32.totalorder %s237, %s238
      %p252 = scmp.eq.s32.totalorder %s46, 1
      %p253 = por %p251, %p252
      %p255 = scmp.ne.s32.totalorder %s238, %s254
      %p256 = scmp.eq.s32.totalorder %s46, 0
      %p257 = por %p255, %p256
      %s258 = ssub.s32 %s48, %s55
      %p259 = scmp.eq.s32.totalorder %s258, 0
      %s261 = sadd.s32 %s260, 1
      %s262 = scalar_select %p259, %s260, %s261
      %p265 = pneg %p259
      %p266 = scmp.eq.s32.totalorder %s40, 1
      %p267 = por %p265, %p266
      %p268 = scmp.ne.s32.totalorder %s260, %s263
      %p269 = scmp.eq.s32.totalorder %s40, 0
      %p270 = por %p268, %p269
      %p271 = scmp.ne.s32.totalorder %s260, %s263
      %p272 = scmp.eq.s32.totalorder %s45, 1
      %p273 = por %p271, %p272
      %p274 = scmp.ne.s32.totalorder %s263, %s264
      %p275 = scmp.eq.s32.totalorder %s45, 0
      %p276 = por %p274, %p275
      %p277 = scmp.ne.s32.totalorder %s263, %s264
      %p278 = scmp.eq.s32.totalorder %s46, 1
      %p279 = por %p277, %p278
      %p281 = scmp.ne.s32.totalorder %s264, %s280
      %p282 = scmp.eq.s32.totalorder %s46, 0
      %p283 = por %p281, %p282
      %s284 = ssub.s32 %s48, %s55
      %p285 = scmp.eq.s32.totalorder %s284, 0
      %s287 = sadd.s32 %s286, 1
      %s288 = scalar_select %p285, %s286, %s287
      %p291 = pneg %p285
      %p292 = scmp.eq.s32.totalorder %s40, 1
      %p293 = por %p291, %p292
      %p294 = scmp.ne.s32.totalorder %s286, %s289
      %p295 = scmp.eq.s32.totalorder %s40, 0
      %p296 = por %p294, %p295
      %p297 = scmp.ne.s32.totalorder %s286, %s289
      %p298 = scmp.eq.s32.totalorder %s45, 1
      %p299 = por %p297, %p298
      %p300 = scmp.ne.s32.totalorder %s289, %s290
      %p301 = scmp.eq.s32.totalorder %s45, 0
      %p302 = por %p300, %p301
      %p303 = scmp.ne.s32.totalorder %s289, %s290
      %p304 = scmp.eq.s32.totalorder %s46, 1
      %p305 = por %p303, %p304
      %p307 = scmp.ne.s32.totalorder %s290, %s306
      %p308 = scmp.eq.s32.totalorder %s46, 0
      %p309 = por %p307, %p308
      %s310 = ssub.s32 %s48, %s55
      %p311 = scmp.eq.s32.totalorder %s310, 0
      %s313 = sadd.s32 %s312, 1
      %s314 = scalar_select %p311, %s312, %s313
      %p317 = pneg %p311
      %p318 = scmp.eq.s32.totalorder %s40, 1
      %p319 = por %p317, %p318
      %p320 = scmp.ne.s32.totalorder %s312, %s315
      %p321 = scmp.eq.s32.totalorder %s40, 0
      %p322 = por %p320, %p321
      %p323 = scmp.ne.s32.totalorder %s312, %s315
      %p324 = scmp.eq.s32.totalorder %s45, 1
      %p325 = por %p323, %p324
      %p326 = scmp.ne.s32.totalorder %s315, %s316
      %p327 = scmp.eq.s32.totalorder %s45, 0
      %p328 = por %p326, %p327
      %p329 = scmp.ne.s32.totalorder %s315, %s316
      %p330 = scmp.eq.s32.totalorder %s46, 1
      %p331 = por %p329, %p330
      %p333 = scmp.ne.s32.totalorder %s316, %s332
      %p334 = scmp.eq.s32.totalorder %s46, 0
      %p335 = por %p333, %p334
      %s336 = ssub.s32 %s48, %s55
      %p337 = scmp.eq.s32.totalorder %s336, 0
      %s339 = sadd.s32 %s338, 1
      %s340 = scalar_select %p337, %s338, %s339
      %p343 = pneg %p337
      %p344 = scmp.eq.s32.totalorder %s40, 1
      %p345 = por %p343, %p344
      %p346 = scmp.ne.s32.totalorder %s338, %s341
      %p347 = scmp.eq.s32.totalorder %s40, 0
      %p348 = por %p346, %p347
      %p349 = scmp.ne.s32.totalorder %s338, %s341
      %p350 = scmp.eq.s32.totalorder %s45, 1
      %p351 = por %p349, %p350
      %p352 = scmp.ne.s32.totalorder %s341, %s342
      %p353 = scmp.eq.s32.totalorder %s45, 0
      %p354 = por %p352, %p353
      %p355 = scmp.ne.s32.totalorder %s341, %s342
      %p356 = scmp.eq.s32.totalorder %s46, 1
      %p357 = por %p355, %p356
      %p359 = scmp.ne.s32.totalorder %s342, %s358
      %p360 = scmp.eq.s32.totalorder %s46, 0
      %p361 = por %p359, %p360
      %s362 = ssub.s32 %s48, %s55
      %p363 = scmp.eq.s32.totalorder %s362, 0
      %s365 = sadd.s32 %s364, 1
      %s366 = scalar_select %p363, %s364, %s365
      %p369 = pneg %p363
      %p370 = scmp.eq.s32.totalorder %s40, 1
      %p371 = por %p369, %p370
      %p372 = scmp.ne.s32.totalorder %s364, %s367
      %p373 = scmp.eq.s32.totalorder %s40, 0
      %p374 = por %p372, %p373
      %p375 = scmp.ne.s32.totalorder %s364, %s367
      %p376 = scmp.eq.s32.totalorder %s45, 1
      %p377 = por %p375, %p376
      %p378 = scmp.ne.s32.totalorder %s367, %s368
      %p379 = scmp.eq.s32.totalorder %s45, 0
      %p380 = por %p378, %p379
      %p381 = scmp.ne.s32.totalorder %s367, %s368
      %p382 = scmp.eq.s32.totalorder %s46, 1
      %p383 = por %p381, %p382
      %p385 = scmp.ne.s32.totalorder %s368, %s384
      %p386 = scmp.eq.s32.totalorder %s46, 0
      %p387 = por %p385, %p386
      %s388 = ssub.s32 %s48, %s55
      %p389 = scmp.eq.s32.totalorder %s388, 0
      %s391 = sadd.s32 %s390, 1
      %s392 = scalar_select %p389, %s390, %s391
      %p395 = pneg %p389
      %p396 = scmp.eq.s32.totalorder %s40, 1
      %p397 = por %p395, %p396
      %p398 = scmp.ne.s32.totalorder %s390, %s393
      %p399 = scmp.eq.s32.totalorder %s40, 0
      %p400 = por %p398, %p399
      %p401 = scmp.ne.s32.totalorder %s390, %s393
      %p402 = scmp.eq.s32.totalorder %s45, 1
      %p403 = por %p401, %p402
      %p404 = scmp.ne.s32.totalorder %s393, %s394
      %p405 = scmp.eq.s32.totalorder %s45, 0
      %p406 = por %p404, %p405
      %p407 = scmp.ne.s32.totalorder %s393, %s394
      %p408 = scmp.eq.s32.totalorder %s46, 1
      %p409 = por %p407, %p408
      %p411 = scmp.ne.s32.totalorder %s394, %s410
      %p412 = scmp.eq.s32.totalorder %s46, 0
      %p413 = por %p411, %p412
      %s415 = sadd.s32 %s414, 1
      %p418 = scmp.eq.s32.totalorder %s40, 1
      %p419 = scmp.ne.s32.totalorder %s414, %s416
      %p420 = scmp.eq.s32.totalorder %s40, 0
      %p421 = por %p419, %p420
      %p422 = scmp.ne.s32.totalorder %s414, %s416
      %p423 = scmp.eq.s32.totalorder %s45, 1
      %p424 = por %p422, %p423
      %p425 = scmp.ne.s32.totalorder %s416, %s417
      %p426 = scmp.eq.s32.totalorder %s45, 0
      %p427 = por %p425, %p426
      %p428 = scmp.ne.s32.totalorder %s416, %s417
      %p429 = scmp.eq.s32.totalorder %s46, 1
      %p430 = por %p428, %p429
      %p432 = scmp.ne.s32.totalorder %s417, %s431
      %p433 = scmp.eq.s32.totalorder %s46, 0
      %p434 = por %p432, %p433
      %s436 = sadd.s32 %s435, 1
      %p439 = scmp.eq.s32.totalorder %s40, 1
      %p440 = scmp.ne.s32.totalorder %s435, %s437
      %p441 = scmp.eq.s32.totalorder %s40, 0
      %p442 = por %p440, %p441
      %p443 = scmp.ne.s32.totalorder %s435, %s437
      %p444 = scmp.eq.s32.totalorder %s45, 1
      %p445 = por %p443, %p444
      %p446 = scmp.ne.s32.totalorder %s437, %s438
      %p447 = scmp.eq.s32.totalorder %s45, 0
      %p448 = por %p446, %p447
      %p449 = scmp.ne.s32.totalorder %s437, %s438
      %p450 = scmp.eq.s32.totalorder %s46, 1
      %p451 = por %p449, %p450
      %p453 = scmp.ne.s32.totalorder %s438, %s452
      %p454 = scmp.eq.s32.totalorder %s46, 0
      %p455 = por %p453, %p454
      %s457 = sadd.s32 %s456, 1
      %p460 = scmp.eq.s32.totalorder %s40, 1
      %p461 = scmp.ne.s32.totalorder %s456, %s458
      %p462 = scmp.eq.s32.totalorder %s40, 0
      %p463 = por %p461, %p462
      %p464 = scmp.ne.s32.totalorder %s456, %s458
      %p465 = scmp.eq.s32.totalorder %s45, 1
      %p466 = por %p464, %p465
      %p467 = scmp.ne.s32.totalorder %s458, %s459
      %p468 = scmp.eq.s32.totalorder %s45, 0
      %p469 = por %p467, %p468
      %p470 = scmp.ne.s32.totalorder %s458, %s459
      %p471 = scmp.eq.s32.totalorder %s46, 1
      %p472 = por %p470, %p471
      %p474 = scmp.ne.s32.totalorder %s459, %s473
      %p475 = scmp.eq.s32.totalorder %s46, 0
      %p476 = por %p474, %p475
      %s478 = sadd.s32 %s477, 1
      %p481 = scmp.eq.s32.totalorder %s40, 1
      %p482 = scmp.ne.s32.totalorder %s477, %s479
      %p483 = scmp.eq.s32.totalorder %s40, 0
      %p484 = por %p482, %p483
      %p485 = scmp.ne.s32.totalorder %s477, %s479
      %p486 = scmp.eq.s32.totalorder %s45, 1
      %p487 = por %p485, %p486
      %p488 = scmp.ne.s32.totalorder %s479, %s480
      %p489 = scmp.eq.s32.totalorder %s45, 0
      %p490 = por %p488, %p489
      %p491 = scmp.ne.s32.totalorder %s479, %s480
      %p492 = scmp.eq.s32.totalorder %s46, 1
      %p493 = por %p491, %p492
      %p495 = scmp.ne.s32.totalorder %s480, %s494
      %p496 = scmp.eq.s32.totalorder %s46, 0
      %p497 = por %p495, %p496
      %s498 = ssub.s32 %s47, %s59
      %p499 = scmp.eq.s32.totalorder %s498, 0
      %s501 = sadd.s32 %s500, 1
      %s502 = scalar_select %p499, %s500, %s501
      %p505 = pneg %p499
      %p506 = scmp.eq.s32.totalorder %s40, 1
      %p507 = por %p505, %p506
      %p508 = scmp.ne.s32.totalorder %s500, %s503
      %p509 = scmp.eq.s32.totalorder %s40, 0
      %p510 = por %p508, %p509
      %p511 = scmp.ne.s32.totalorder %s500, %s503
      %p512 = scmp.eq.s32.totalorder %s45, 1
      %p513 = por %p511, %p512
      %p514 = scmp.ne.s32.totalorder %s503, %s504
      %p515 = scmp.eq.s32.totalorder %s45, 0
      %p516 = por %p514, %p515
      %p517 = scmp.ne.s32.totalorder %s503, %s504
      %p518 = scmp.eq.s32.totalorder %s46, 1
      %p519 = por %p517, %p518
      %p521 = scmp.ne.s32.totalorder %s504, %s520
      %p522 = scmp.eq.s32.totalorder %s46, 0
      %p523 = por %p521, %p522
      %p524 = scmp.le.s32.totalorder 1, %s40
      %p525 = scmp.lt.s32.totalorder %s40, 3
      %p526 = pnand %p524, %p525
      %p527 = pneg %p526
      // Predicated region
      $region9: #{pack_decoder_forward.1} parent=5 // pred_check
        _
      $region10: #{pack_decoder_forward.1} parent=5 // pred_check_branch
        %529 = sbr.rel (%p526) target = $region12
      $region11: #{pack_decoder_forward.1} parent=5 // pred_region
        %s530 = ssub.s32 %s40, 1
        // Predicated region
        $region13: #{pack_decoder_forward.1} parent=11 // pred_check
          %p531 = pneg %p78
        $region14: #{pack_decoder_forward.1} parent=11 // pred_check_branch
          %533 = sbr.rel (%p531) target = $region16
        $region15: #{pack_decoder_forward.1} parent=11 // pred_region
          %s534 = smul.u32 2, %s49
          %p535 = scmp.lt.s32.totalorder %s534, 1
          %s536 = scalar_select %p535, %s534, 1
          %s537 = smul.addr %s536, 4
          %s538 = scalar_lea.vmem %s0, %s537
          %s539 = smul.u32 2, %s49
        $region16: #{pack_decoder_forward.1} parent=11 // pred_fallthru
          _
        // Predicated region
        $region17: #{pack_decoder_forward.1} parent=11 // pred_check
          %p540 = pneg %p104
        $region18: #{pack_decoder_forward.1} parent=11 // pred_check_branch
          %542 = sbr.rel (%p540) target = $region20
        $region19: #{pack_decoder_forward.1} parent=11 // pred_region
          %s543 = smul.u32 2, %s49
          %p544 = scmp.lt.s32.totalorder %s543, 1
          %s545 = scalar_select %p544, %s543, 1
          %s546 = smul.addr %s545, 4
          %s547 = scalar_lea.vmem %s1, %s546
          %s548 = smul.u32 2, %s49
        $region20: #{pack_decoder_forward.1} parent=11 // pred_fallthru
          _
        // Predicated region
        $region21: #{pack_decoder_forward.1} parent=11 // pred_check
          %p549 = pneg %p125
        $region22: #{pack_decoder_forward.1} parent=11 // pred_check_branch
          %551 = sbr.rel (%p549) target = $region24
        $region23: #{pack_decoder_forward.1} parent=11 // pred_region
          %s553 = ssub.s32 128, 128
          %554 = vsyncadd [#allocation4], %s553
          %s555 = sshll.u32 [#allocation3], 4
          %s556 = int_to_ptr.vmem [resolvable:$true] %s555
          %561 = dma.hbm_to_vmem [thread:$0]  %s2, 128, %s556, [#allocation4], 64, 64, 4
        $region24: #{pack_decoder_forward.1} parent=11 // pred_fallthru
          _
        // Predicated region
        $region25: #{pack_decoder_forward.1} parent=11 // pred_check
          %p562 = pneg %p146
        $region26: #{pack_decoder_forward.1} parent=11 // pred_check_branch
          %564 = sbr.rel (%p562) target = $region28
        $region27: #{pack_decoder_forward.1} parent=11 // pred_region
          _
        $region28: #{pack_decoder_forward.1} parent=11 // pred_fallthru
          _
        // Predicated region
        $region29: #{pack_decoder_forward.1} parent=11 // pred_check
          %p565 = pneg %p427
        $region30: #{pack_decoder_forward.1} parent=11 // pred_check_branch
          %567 = sbr.rel (%p565) target = $region32
        $region31: #{pack_decoder_forward.1} parent=11 // pred_region
          %s569 = ssub.s32 1024, 1024
          %570 = vsyncadd [#allocation19], %s569
          %s571 = sshll.u32 [#allocation18], 4
          %s572 = int_to_ptr.vmem [resolvable:$true] %s571
          %577 = dma.hbm_to_vmem [thread:$0]  %s14, 1024, %s572, [#allocation19], 64, 64, 4
        $region32: #{pack_decoder_forward.1} parent=11 // pred_fallthru
          _
        // Predicated region
        $region33: #{pack_decoder_forward.1} parent=11 // pred_check
          %p578 = pneg %p448
        $region34: #{pack_decoder_forward.1} parent=11 // pred_check_branch
          %580 = sbr.rel (%p578) target = $region36
        $region35: #{pack_decoder_forward.1} parent=11 // pred_region
          %s582 = ssub.s32 16, 16
          %583 = vsyncadd [#allocation19], %s582
          %s585 = sshll.u32 [#allocation20], 4
          %s586 = int_to_ptr.vmem [resolvable:$true] %s585
          %588 = dma.hbm_to_vmem [thread:$0]  %s15, 16, %s586, [#allocation19]
        $region36: #{pack_decoder_forward.1} parent=11 // pred_fallthru
          _
        // Predicated region
        $region37: #{pack_decoder_forward.1} parent=11 // pred_check
          %p589 = pneg %p469
        $region38: #{pack_decoder_forward.1} parent=11 // pred_check_branch
          %591 = sbr.rel (%p589) target = $region40
        $region39: #{pack_decoder_forward.1} parent=11 // pred_region
          %s593 = ssub.s32 1024, 1024
          %594 = vsyncadd [#allocation22], %s593
          %s595 = sshll.u32 [#allocation21], 4
          %s596 = int_to_ptr.vmem [resolvable:$true] %s595
          %601 = dma.hbm_to_vmem [thread:$0]  %s16, 1024, %s596, [#allocation22], 64, 64, 4
        $region40: #{pack_decoder_forward.1} parent=11 // pred_fallthru
          _
        // Predicated region
        $region41: #{pack_decoder_forward.1} parent=11 // pred_check
          %p602 = pneg %p490
        $region42: #{pack_decoder_forward.1} parent=11 // pred_check_branch
          %604 = sbr.rel (%p602) target = $region44
        $region43: #{pack_decoder_forward.1} parent=11 // pred_region
          %s606 = ssub.s32 16, 16
          %607 = vsyncadd [#allocation22], %s606
          %s609 = sshll.u32 [#allocation23], 4
          %s610 = int_to_ptr.vmem [resolvable:$true] %s609
          %612 = dma.hbm_to_vmem [thread:$0]  %s17, 16, %s610, [#allocation22]
        $region44: #{pack_decoder_forward.1} parent=11 // pred_fallthru
          _
      $region12: #{pack_decoder_forward.1} parent=5 // pred_fallthru
        _
      %p613 = scmp.lt.s32.totalorder %s40, 2
      // Predicated region
      $region45: #{pack_decoder_forward.1} parent=5 // pred_check
        %p614 = pneg %p613
      $region46: #{pack_decoder_forward.1} parent=5 // pred_check_branch
        %616 = sbr.rel (%p614) target = $region48
      $region47: #{pack_decoder_forward.1} parent=5 // pred_region
        // Predicated region
        $region49: #{pack_decoder_forward.1} parent=47 // pred_check
          %p617 = pneg %p166
        $region50: #{pack_decoder_forward.1} parent=47 // pred_check_branch
          %619 = sbr.rel (%p617) target = $region52
        $region51: #{pack_decoder_forward.1} parent=47 // pred_region
          %s620 = sand.u32 %s40, 1
          %s621 = scalar_lea.sflag [#allocation7], %s620
          %s622 = sand.u32 %s156, 1
          %s623 = smul.addr %s622, 64
          %s624 = scalar_lea.vmem [#allocation6], %s623
          %s626 = ssub.s32 1024, 1024
          %627 = vsyncadd %s621, %s626
          %s628 = smul.addr %s48, 16
          %s629 = smul.addr %s628, 64
          %s630 = scalar_lea.hbm %s4, %s629
          %s631 = sshll.u32 %s624, 4
          %s632 = int_to_ptr.vmem [resolvable:$true] %s631
          %637 = dma.hbm_to_vmem [thread:$0]  %s630, 1024, %s632, %s621, 64, 64, 4
        $region52: #{pack_decoder_forward.1} parent=47 // pred_fallthru
          _
        // Predicated region
        $region53: #{pack_decoder_forward.1} parent=47 // pred_check
          %p638 = pneg %p192
        $region54: #{pack_decoder_forward.1} parent=47 // pred_check_branch
          %640 = sbr.rel (%p638) target = $region56
        $region55: #{pack_decoder_forward.1} parent=47 // pred_region
          %s641 = sand.u32 %s40, 1
          %s642 = scalar_lea.sflag [#allocation7], %s641
          %s643 = sand.u32 %s182, 1
          %s644 = scalar_lea.vmem [#allocation8], %s643
          %s646 = ssub.s32 16, 16
          %647 = vsyncadd %s642, %s646
          %s648 = smul.addr %s48, 16
          %s649 = scalar_lea.hbm %s5, %s648
          %s651 = sshll.u32 %s644, 4
          %s652 = int_to_ptr.vmem [resolvable:$true] %s651
          %654 = dma.hbm_to_vmem [thread:$0]  %s649, 16, %s652, %s642
        $region56: #{pack_decoder_forward.1} parent=47 // pred_fallthru
          _
        // Predicated region
        $region57: #{pack_decoder_forward.1} parent=47 // pred_check
          %p655 = pneg %p218
        $region58: #{pack_decoder_forward.1} parent=47 // pred_check_branch
          %657 = sbr.rel (%p655) target = $region60
        $region59: #{pack_decoder_forward.1} parent=47 // pred_region
          %p658 = scmp.lt.s32.totalorder %s48, 1
          %s659 = scalar_select %p658, %s48, 1
          %s660 = smul.addr %s659, 8
          %s661 = smul.addr %s660, 4
          %s662 = scalar_lea.vmem %s6, %s661
        $region60: #{pack_decoder_forward.1} parent=47 // pred_fallthru
          _
        // Predicated region
        $region61: #{pack_decoder_forward.1} parent=47 // pred_check
          %p663 = pneg %p244
        $region62: #{pack_decoder_forward.1} parent=47 // pred_check_branch
          %665 = sbr.rel (%p663) target = $region64
        $region63: #{pack_decoder_forward.1} parent=47 // pred_region
          %p666 = scmp.lt.s32.totalorder %s48, 1
          %s667 = scalar_select %p666, %s48, 1
          %s668 = smul.addr %s667, 2
          %s669 = scalar_lea.vmem %s7, %s668
        $region64: #{pack_decoder_forward.1} parent=47 // pred_fallthru
          _
        // Predicated region
        $region65: #{pack_decoder_forward.1} parent=47 // pred_check
          %p670 = pneg %p270
        $region66: #{pack_decoder_forward.1} parent=47 // pred_check_branch
          %672 = sbr.rel (%p670) target = $region68
        $region67: #{pack_decoder_forward.1} parent=47 // pred_region
          %s673 = sand.u32 %s40, 1
          %s674 = scalar_lea.sflag [#allocation10], %s673
          %s675 = sand.u32 %s260, 1
          %s676 = smul.addr %s675, 64
          %s677 = scalar_lea.vmem [#allocation9], %s676
          %s679 = ssub.s32 1024, 1024
          %680 = vsyncadd %s674, %s679
          %s681 = smul.addr %s48, 16
          %s682 = smul.addr %s681, 64
          %s683 = scalar_lea.hbm %s8, %s682
          %s684 = sshll.u32 %s677, 4
          %s685 = int_to_ptr.vmem [resolvable:$true] %s684
          %690 = dma.hbm_to_vmem [thread:$0]  %s683, 1024, %s685, %s674, 64, 64, 4
        $region68: #{pack_decoder_forward.1} parent=47 // pred_fallthru
          _
        // Predicated region
        $region69: #{pack_decoder_forward.1} parent=47 // pred_check
          %p691 = pneg %p296
        $region70: #{pack_decoder_forward.1} parent=47 // pred_check_branch
          %693 = sbr.rel (%p691) target = $region72
        $region71: #{pack_decoder_forward.1} parent=47 // pred_region
          %s694 = sand.u32 %s40, 1
          %s695 = scalar_lea.sflag [#allocation10], %s694
          %s696 = sand.u32 %s286, 1
          %s697 = scalar_lea.vmem [#allocation11], %s696
          %s699 = ssub.s32 16, 16
          %700 = vsyncadd %s695, %s699
          %s701 = smul.addr %s48, 16
          %s702 = scalar_lea.hbm %s9, %s701
          %s704 = sshll.u32 %s697, 4
          %s705 = int_to_ptr.vmem [resolvable:$true] %s704
          %707 = dma.hbm_to_vmem [thread:$0]  %s702, 16, %s705, %s695
        $region72: #{pack_decoder_forward.1} parent=47 // pred_fallthru
          _
        // Predicated region
        $region73: #{pack_decoder_forward.1} parent=47 // pred_check
          %p708 = pneg %p322
        $region74: #{pack_decoder_forward.1} parent=47 // pred_check_branch
          %710 = sbr.rel (%p708) target = $region76
        $region75: #{pack_decoder_forward.1} parent=47 // pred_region
          %s711 = sand.u32 %s40, 1
          %s712 = scalar_lea.sflag [#allocation13], %s711
          %s713 = sand.u32 %s312, 1
          %s714 = smul.addr %s713, 64
          %s715 = scalar_lea.vmem [#allocation12], %s714
          %s717 = ssub.s32 1024, 1024
          %718 = vsyncadd %s712, %s717
          %s719 = smul.addr %s48, 16
          %s720 = smul.addr %s719, 64
          %s721 = scalar_lea.hbm %s10, %s720
          %s722 = sshll.u32 %s715, 4
          %s723 = int_to_ptr.vmem [resolvable:$true] %s722
          %728 = dma.hbm_to_vmem [thread:$0]  %s721, 1024, %s723, %s712, 64, 64, 4
        $region76: #{pack_decoder_forward.1} parent=47 // pred_fallthru
          _
        // Predicated region
        $region77: #{pack_decoder_forward.1} parent=47 // pred_check
          %p729 = pneg %p348
        $region78: #{pack_decoder_forward.1} parent=47 // pred_check_branch
          %731 = sbr.rel (%p729) target = $region80
        $region79: #{pack_decoder_forward.1} parent=47 // pred_region
          %s732 = sand.u32 %s40, 1
          %s733 = scalar_lea.sflag [#allocation13], %s732
          %s734 = sand.u32 %s338, 1
          %s735 = scalar_lea.vmem [#allocation14], %s734
          %s737 = ssub.s32 16, 16
          %738 = vsyncadd %s733, %s737
          %s739 = smul.addr %s48, 16
          %s740 = scalar_lea.hbm %s11, %s739
          %s742 = sshll.u32 %s735, 4
          %s743 = int_to_ptr.vmem [resolvable:$true] %s742
          %745 = dma.hbm_to_vmem [thread:$0]  %s740, 16, %s743, %s733
        $region80: #{pack_decoder_forward.1} parent=47 // pred_fallthru
          _
        // Predicated region
        $region81: #{pack_decoder_forward.1} parent=47 // pred_check
          %p746 = pneg %p374
        $region82: #{pack_decoder_forward.1} parent=47 // pred_check_branch
          %748 = sbr.rel (%p746) target = $region84
        $region83: #{pack_decoder_forward.1} parent=47 // pred_region
          %s749 = sand.u32 %s40, 1
          %s750 = scalar_lea.sflag [#allocation16], %s749
          %s751 = sand.u32 %s364, 1
          %s752 = smul.addr %s751, 64
          %s753 = scalar_lea.vmem [#allocation15], %s752
          %s755 = ssub.s32 1024, 1024
          %756 = vsyncadd %s750, %s755
          %s757 = smul.addr %s48, 16
          %s758 = smul.addr %s757, 64
          %s759 = scalar_lea.hbm %s12, %s758
          %s760 = sshll.u32 %s753, 4
          %s761 = int_to_ptr.vmem [resolvable:$true] %s760
          %766 = dma.hbm_to_vmem [thread:$0]  %s759, 1024, %s761, %s750, 64, 64, 4
        $region84: #{pack_decoder_forward.1} parent=47 // pred_fallthru
          _
        // Predicated region
        $region85: #{pack_decoder_forward.1} parent=47 // pred_check
          %p767 = pneg %p400
        $region86: #{pack_decoder_forward.1} parent=47 // pred_check_branch
          %769 = sbr.rel (%p767) target = $region88
        $region87: #{pack_decoder_forward.1} parent=47 // pred_region
          %s770 = sand.u32 %s40, 1
          %s771 = scalar_lea.sflag [#allocation16], %s770
          %s772 = sand.u32 %s390, 1
          %s773 = scalar_lea.vmem [#allocation17], %s772
          %s775 = ssub.s32 16, 16
          %776 = vsyncadd %s771, %s775
          %s777 = smul.addr %s48, 16
          %s778 = scalar_lea.hbm %s13, %s777
          %s780 = sshll.u32 %s773, 4
          %s781 = int_to_ptr.vmem [resolvable:$true] %s780
          %783 = dma.hbm_to_vmem [thread:$0]  %s778, 16, %s781, %s771
        $region88: #{pack_decoder_forward.1} parent=47 // pred_fallthru
          _
      $region48: #{pack_decoder_forward.1} parent=5 // pred_fallthru
        _
      %p784 = scmp.le.s32.totalorder 1, %s40
      %p785 = scmp.lt.s32.totalorder %s40, 3
      %p786 = pnand %p784, %p785
      %p787 = pneg %p786
      // Predicated region
      $region89: #{pack_decoder_forward.1} parent=5 // pred_check
        _
      $region90: #{pack_decoder_forward.1} parent=5 // pred_check_branch
        %789 = sbr.rel (%p786) target = $region92
      $region91: #{pack_decoder_forward.1} parent=5 // pred_region
        %s790 = ssub.s32 %s40, 1
        // Predicated region
        $region93: #{pack_decoder_forward.1} parent=91 // pred_check
          %p791 = pneg %p125
        $region94: #{pack_decoder_forward.1} parent=91 // pred_check_branch
          %793 = sbr.rel (%p791) target = $region96
        $region95: #{pack_decoder_forward.1} parent=91 // pred_region
          %794 = dma.done [#allocation4], 128
        $region96: #{pack_decoder_forward.1} parent=91 // pred_fallthru
          _
        %s795 = sand.u32 %s45, 1
        %s796 = scalar_lea.sflag [#allocation7], %s795
        %s797 = sand.u32 %s159, 1
        %s798 = smul.addr %s797, 64
        %s799 = scalar_lea.vmem [#allocation6], %s798
        // Predicated region
        $region97: #{pack_decoder_forward.1} parent=91 // pred_check
          %p800 = pneg %p172
        $region98: #{pack_decoder_forward.1} parent=91 // pred_check_branch
          %802 = sbr.rel (%p800) target = $region100
        $region99: #{pack_decoder_forward.1} parent=91 // pred_region
          %803 = dma.done %s796, 1024
        $region100: #{pack_decoder_forward.1} parent=91 // pred_fallthru
          _
        %s804 = sand.u32 %s45, 1
        %s805 = scalar_lea.sflag [#allocation7], %s804
        %s806 = sand.u32 %s185, 1
        %s807 = scalar_lea.vmem [#allocation8], %s806
        // Predicated region
        $region101: #{pack_decoder_forward.1} parent=91 // pred_check
          %p808 = pneg %p198
        $region102: #{pack_decoder_forward.1} parent=91 // pred_check_branch
          %810 = sbr.rel (%p808) target = $region104
        $region103: #{pack_decoder_forward.1} parent=91 // pred_region
          %811 = dma.done %s805, 16
        $region104: #{pack_decoder_forward.1} parent=91 // pred_fallthru
          _
        %s812 = sand.u32 %s45, 1
        %s813 = scalar_lea.sflag [#allocation10], %s812
        %s814 = sand.u32 %s263, 1
        %s815 = smul.addr %s814, 64
        %s816 = scalar_lea.vmem [#allocation9], %s815
        // Predicated region
        $region105: #{pack_decoder_forward.1} parent=91 // pred_check
          %p817 = pneg %p276
        $region106: #{pack_decoder_forward.1} parent=91 // pred_check_branch
          %819 = sbr.rel (%p817) target = $region108
        $region107: #{pack_decoder_forward.1} parent=91 // pred_region
          %820 = dma.done %s813, 1024
        $region108: #{pack_decoder_forward.1} parent=91 // pred_fallthru
          _
        %s821 = sand.u32 %s45, 1
        %s822 = scalar_lea.sflag [#allocation10], %s821
        %s823 = sand.u32 %s289, 1
        %s824 = scalar_lea.vmem [#allocation11], %s823
        // Predicated region
        $region109: #{pack_decoder_forward.1} parent=91 // pred_check
          %p825 = pneg %p302
        $region110: #{pack_decoder_forward.1} parent=91 // pred_check_branch
          %827 = sbr.rel (%p825) target = $region112
        $region111: #{pack_decoder_forward.1} parent=91 // pred_region
          %828 = dma.done %s822, 16
        $region112: #{pack_decoder_forward.1} parent=91 // pred_fallthru
          _
        %s829 = sand.u32 %s45, 1
        %s830 = scalar_lea.sflag [#allocation13], %s829
        %s831 = sand.u32 %s315, 1
        %s832 = smul.addr %s831, 64
        %s833 = scalar_lea.vmem [#allocation12], %s832
        // Predicated region
        $region113: #{pack_decoder_forward.1} parent=91 // pred_check
          %p834 = pneg %p328
        $region114: #{pack_decoder_forward.1} parent=91 // pred_check_branch
          %836 = sbr.rel (%p834) target = $region116
        $region115: #{pack_decoder_forward.1} parent=91 // pred_region
          %837 = dma.done %s830, 1024
        $region116: #{pack_decoder_forward.1} parent=91 // pred_fallthru
          _
        %s838 = sand.u32 %s45, 1
        %s839 = scalar_lea.sflag [#allocation13], %s838
        %s840 = sand.u32 %s341, 1
        %s841 = scalar_lea.vmem [#allocation14], %s840
        // Predicated region
        $region117: #{pack_decoder_forward.1} parent=91 // pred_check
          %p842 = pneg %p354
        $region118: #{pack_decoder_forward.1} parent=91 // pred_check_branch
          %844 = sbr.rel (%p842) target = $region120
        $region119: #{pack_decoder_forward.1} parent=91 // pred_region
          %845 = dma.done %s839, 16
        $region120: #{pack_decoder_forward.1} parent=91 // pred_fallthru
          _
        %s846 = sand.u32 %s45, 1
        %s847 = scalar_lea.sflag [#allocation16], %s846
        %s848 = sand.u32 %s367, 1
        %s849 = smul.addr %s848, 64
        %s850 = scalar_lea.vmem [#allocation15], %s849
        // Predicated region
        $region121: #{pack_decoder_forward.1} parent=91 // pred_check
          %p851 = pneg %p380
        $region122: #{pack_decoder_forward.1} parent=91 // pred_check_branch
          %853 = sbr.rel (%p851) target = $region124
        $region123: #{pack_decoder_forward.1} parent=91 // pred_region
          %854 = dma.done %s847, 1024
        $region124: #{pack_decoder_forward.1} parent=91 // pred_fallthru
          _
        %s855 = sand.u32 %s45, 1
        %s856 = scalar_lea.sflag [#allocation16], %s855
        %s857 = sand.u32 %s393, 1
        %s858 = scalar_lea.vmem [#allocation17], %s857
        // Predicated region
        $region125: #{pack_decoder_forward.1} parent=91 // pred_check
          %p859 = pneg %p406
        $region126: #{pack_decoder_forward.1} parent=91 // pred_check_branch
          %861 = sbr.rel (%p859) target = $region128
        $region127: #{pack_decoder_forward.1} parent=91 // pred_region
          %862 = dma.done %s856, 16
        $region128: #{pack_decoder_forward.1} parent=91 // pred_fallthru
          _
        // Predicated region
        $region129: #{pack_decoder_forward.1} parent=91 // pred_check
          %p863 = pneg %p427
        $region130: #{pack_decoder_forward.1} parent=91 // pred_check_branch
          %865 = sbr.rel (%p863) target = $region132
        $region131: #{pack_decoder_forward.1} parent=91 // pred_region
          %866 = dma.done [#allocation19], 1024
        $region132: #{pack_decoder_forward.1} parent=91 // pred_fallthru
          _
        // Predicated region
        $region133: #{pack_decoder_forward.1} parent=91 // pred_check
          %p867 = pneg %p448
        $region134: #{pack_decoder_forward.1} parent=91 // pred_check_branch
          %869 = sbr.rel (%p867) target = $region136
        $region135: #{pack_decoder_forward.1} parent=91 // pred_region
          %870 = dma.done [#allocation19], 16
        $region136: #{pack_decoder_forward.1} parent=91 // pred_fallthru
          _
        // Predicated region
        $region137: #{pack_decoder_forward.1} parent=91 // pred_check
          %p871 = pneg %p469
        $region138: #{pack_decoder_forward.1} parent=91 // pred_check_branch
          %873 = sbr.rel (%p871) target = $region140
        $region139: #{pack_decoder_forward.1} parent=91 // pred_region
          %874 = dma.done [#allocation22], 1024
        $region140: #{pack_decoder_forward.1} parent=91 // pred_fallthru
          _
        // Predicated region
        $region141: #{pack_decoder_forward.1} parent=91 // pred_check
          %p875 = pneg %p490
        $region142: #{pack_decoder_forward.1} parent=91 // pred_check_branch
          %877 = sbr.rel (%p875) target = $region144
        $region143: #{pack_decoder_forward.1} parent=91 // pred_region
          %878 = dma.done [#allocation22], 16
        $region144: #{pack_decoder_forward.1} parent=91 // pred_fallthru
          _
        %s879 = smul.u32 2, %s49
        %p880 = scmp.lt.s32.totalorder %s879, 1
        %s881 = scalar_select %p880, %s879, 1
        %s882 = smul.addr %s881, 4
        %s883 = scalar_lea.vmem %s0, %s882
        %p884 = pneg %p78
        %p885 = pneg %p75
        %s886 = smul.u32 2, %s49
        %p887 = scmp.lt.s32.totalorder %s886, 1
        %s888 = scalar_select %p887, %s886, 1
        %s889 = smul.addr %s888, 4
        %s890 = scalar_lea.vmem %s1, %s889
        %p891 = pneg %p104
        %p892 = pneg %p101
        %p893 = pneg %p125
        %p894 = pneg %p122
        %p895 = pneg %p146
        %p896 = pneg %p143
        %s897 = sand.u32 %s45, 1
        %s898 = scalar_lea.sflag [#allocation7], %s897
        %s899 = sand.u32 %s159, 1
        %s900 = smul.addr %s899, 64
        %s901 = scalar_lea.vmem [#allocation6], %s900
        %p902 = pneg %p172
        %p903 = pneg %p169
        %s904 = sand.u32 %s45, 1
        %s905 = scalar_lea.sflag [#allocation7], %s904
        %s906 = sand.u32 %s185, 1
        %s907 = scalar_lea.vmem [#allocation8], %s906
        %p908 = pneg %p198
        %p909 = pneg %p195
        %p910 = scmp.lt.s32.totalorder %s50, 1
        %s911 = scalar_select %p910, %s50, 1
        %s912 = smul.addr %s911, 8
        %s913 = smul.addr %s912, 4
        %s914 = scalar_lea.vmem %s6, %s913
        %p915 = pneg %p224
        %p916 = pneg %p221
        %p917 = scmp.lt.s32.totalorder %s50, 1
        %s918 = scalar_select %p917, %s50, 1
        %s919 = smul.addr %s918, 2
        %s920 = scalar_lea.vmem %s7, %s919
        %p921 = pneg %p250
        %p922 = pneg %p247
        %s923 = sand.u32 %s45, 1
        %s924 = scalar_lea.sflag [#allocation10], %s923
        %s925 = sand.u32 %s263, 1
        %s926 = smul.addr %s925, 64
        %s927 = scalar_lea.vmem [#allocation9], %s926
        %p928 = pneg %p276
        %p929 = pneg %p273
        %s930 = sand.u32 %s45, 1
        %s931 = scalar_lea.sflag [#allocation10], %s930
        %s932 = sand.u32 %s289, 1
        %s933 = scalar_lea.vmem [#allocation11], %s932
        %p934 = pneg %p302
        %p935 = pneg %p299
        %s936 = sand.u32 %s45, 1
        %s937 = scalar_lea.sflag [#allocation13], %s936
        %s938 = sand.u32 %s315, 1
        %s939 = smul.addr %s938, 64
        %s940 = scalar_lea.vmem [#allocation12], %s939
        %p941 = pneg %p328
        %p942 = pneg %p325
        %s943 = sand.u32 %s45, 1
        %s944 = scalar_lea.sflag [#allocation13], %s943
        %s945 = sand.u32 %s341, 1
        %s946 = scalar_lea.vmem [#allocation14], %s945
        %p947 = pneg %p354
        %p948 = pneg %p351
        %s949 = sand.u32 %s45, 1
        %s950 = scalar_lea.sflag [#allocation16], %s949
        %s951 = sand.u32 %s367, 1
        %s952 = smul.addr %s951, 64
        %s953 = scalar_lea.vmem [#allocation15], %s952
        %p954 = pneg %p380
        %p955 = pneg %p377
        %s956 = sand.u32 %s45, 1
        %s957 = scalar_lea.sflag [#allocation16], %s956
        %s958 = sand.u32 %s393, 1
        %s959 = scalar_lea.vmem [#allocation17], %s958
        %p960 = pneg %p406
        %p961 = pneg %p403
        %p962 = pneg %p427
        %p963 = pneg %p424
        %p964 = pneg %p448
        %p965 = pneg %p445
        %p966 = pneg %p469
        %p967 = pneg %p466
        %p968 = pneg %p490
        %p969 = pneg %p487
        %p970 = pneg %p516
        %p971 = pneg %p513
        %s972 = smul.u32 2, %s49
        %p973 = scmp.lt.s32.totalorder %s972, 1
        %s974 = scalar_select %p973, %s972, 1
        %s975 = smul.addr %s974, 4
        %s976 = scalar_lea.vmem %s0, %s975
        %s977 = smul.u32 2, %s49
        %s978 = smul.u32 2, %s49
        %p979 = scmp.lt.s32.totalorder %s978, 1
        %s980 = scalar_select %p979, %s978, 1
        %s981 = smul.addr %s980, 4
        %s982 = scalar_lea.vmem %s1, %s981
        %s983 = smul.u32 2, %s49
        %p984 = scmp.lt.s32.totalorder %s50, 1
        %s985 = scalar_select %p984, %s50, 1
        %s986 = smul.addr %s985, 8
        %s987 = smul.addr %s986, 4
        %s988 = scalar_lea.vmem %s6, %s987
        %p989 = scmp.lt.s32.totalorder %s50, 1
        %s990 = scalar_select %p989, %s50, 1
        %s991 = smul.addr %s990, 2
        %s992 = scalar_lea.vmem %s7, %s991
        %s993 = smul.u32 2, %s49
        %p995 = scmp.eq.s32.totalorder %s50, 0
        // Predicated region
        $region145: #{pack_decoder_forward.1} parent=91 // pred_check
          %p996 = pneg %p995
        $region146: #{pack_decoder_forward.1} parent=91 // pred_check_branch
          %998 = sbr.rel (%p996) target = $region148
        $region147: #{pack_decoder_forward.1} parent=91 // pred_region
          %v999 = vld [vmem:[%s976] sm:$0xf]
          %v1000 = vld [vmem:[%s976 + $0x4] sm:$0xf]
          %v1001 = vld [vmem:[#allocation3] sm:$0xf]
          %v1002 = vld [vmem:[#allocation3 + $0x4] sm:$0xf]
          %v1003 = vld [vmem:[%s3] sm:$0x1]
          %v1005 = vlaneseq
          %v1006 = vshrl.u32 %v1005, 7
          %v1007 = vsub.s32 0, %v1006
          %v1008 = vrot.slane %v1003, %v1007
          %v1012 = vunpack.c.l.b16 %v999
          %v1013 = vunpack.c.l.b16 %v1000
          %v1014 = vpack.c.b16 %v1013, %v1012
          %v1017 = vunpack.c.l.b16 %v1001
          %v1018 = vunpack.c.l.b16 %v1002
          %v1019 = vpack.c.b16 %v1018, %v1017
          %vm1021 = vcmask 130048
          %v1023 = vsel %vm1021, %v1014, 0
          %1025 = vmatprep.subr.bf16.mxu0 0
          %1026 = vmatpush1.bf16.msra.mxu0 %v1019
          %1027 = vmatprep.subr.bf16.mxu0 0
          %1028 = vmatpush1.bf16.msra.mxu0 0
          %1029 = vmatprep.subr.bf16.mxu0 0
          %1030 = vmatpush1.bf16.msra.mxu0 0
          %1031 = vmatprep.subr.bf16.mxu0 0
          %1032 = vmatpush1.bf16.msra.mxu0 0
          %1033 = vmatprep.subr.bf16.mxu0 0
          %1034 = vmatpush1.bf16.msra.mxu0 0
          %1035 = vmatprep.subr.bf16.mxu0 0
          %1036 = vmatpush1.bf16.msra.mxu0 0
          %1037 = vmatprep.subr.bf16.mxu0 0
          %1038 = vmatpush1.bf16.msra.mxu0 0
          %1039 = vmatprep.subr.bf16.mxu0 0
          %1040 = vmatpush1.bf16.msra.mxu0 0
          %1041 = vmatprep.subr.bf16.mxu0 0
          %1042 = vmatpush1.bf16.msra.mxu0 0
          %1043 = vmatprep.subr.bf16.mxu0 0
          %1044 = vmatpush1.bf16.msra.mxu0 0
          %1045 = vmatprep.subr.bf16.mxu0 0
          %1046 = vmatpush1.bf16.msra.mxu0 0
          %1047 = vmatprep.subr.bf16.mxu0 0
          %1048 = vmatpush1.bf16.msra.mxu0 0
          %1049 = vmatprep.subr.bf16.mxu0 0
          %1050 = vmatpush1.bf16.msra.mxu0 0
          %1051 = vmatprep.subr.bf16.mxu0 0
          %1052 = vmatpush1.bf16.msra.mxu0 0
          %1053 = vmatprep.subr.bf16.mxu0 0
          %1054 = vmatpush1.bf16.msra.mxu0 0
          %1055 = vmatprep.subr.bf16.mxu0 0
          %1056 = vmatpush1.bf16.msra.mxu0 0
          %1057 = vmatprep.mubr.bf16.mxu0 0
          %1058 = vmatmul.mubr.bf16.gmra.mrb[0].mxu0 %v1023
          %v1059 = vpop.f32.mrb[0].mxu0
          %v1060 = vadd.f32 %v1008, %v1059
          %v1061 = vpop.f32.mrb[0].mxu0
          %v1062 = vpop.f32.mrb[0].mxu0
          %v1063 = vadd.f32 %v1008, %v1062
          %v1064 = vpop.f32.mrb[0].mxu0
          %1065 = vdwg.mxu0
          %1066 = vst [vmem:[#allocation2] sm:$0xff] %v1060
          %1067 = vst [vmem:[#allocation2 + $0x8] sm:$0xff] %v1063
        $region148: #{pack_decoder_forward.1} parent=91 // pred_fallthru
          _
        %v1068 = vld [vmem:[#allocation2] sm:$0xff]
        %v1069 = vld [vmem:[#allocation2 + $0x8] sm:$0xff]
        %v1070 = vld [vmem:[%s799] sm:$0xf]
        %v1071 = vld [vmem:[%s799 + $0x4] sm:$0xf]
        %v1072 = vld [vmem:[%s799 + $0x8] sm:$0xf]
        %v1073 = vld [vmem:[%s799 + $0xc] sm:$0xf]
        %v1074 = vld [vmem:[%s799 + $0x10] sm:$0xf]
        %v1075 = vld [vmem:[%s799 + $0x14] sm:$0xf]
        %v1076 = vld [vmem:[%s799 + $0x18] sm:$0xf]
        %v1077 = vld [vmem:[%s799 + $0x1c] sm:$0xf]
        %v1078 = vld [vmem:[%s799 + $0x20] sm:$0xf]
        %v1079 = vld [vmem:[%s799 + $0x24] sm:$0xf]
        %v1080 = vld [vmem:[%s799 + $0x28] sm:$0xf]
        %v1081 = vld [vmem:[%s799 + $0x2c] sm:$0xf]
        %v1082 = vld [vmem:[%s799 + $0x30] sm:$0xf]
        %v1083 = vld [vmem:[%s799 + $0x34] sm:$0xf]
        %v1084 = vld [vmem:[%s799 + $0x38] sm:$0xf]
        %v1085 = vld [vmem:[%s799 + $0x3c] sm:$0xf]
        %v1086 = vpack.c.bf16 %v1069, %v1068
        %v1087 = vld [vmem:[%s807] sm:$0x1]
        %v1089 = vlaneseq
        %v1090 = vshrl.u32 %v1089, 7
        %v1091 = vsub.s32 0, %v1090
        %v1092 = vrot.slane %v1087, %v1091
        %v1110 = vunpack.c.l.b16 %v1070
        %v1111 = vunpack.c.l.b16 %v1071
        %v1112 = vunpack.c.l.b16 %v1072
        %v1113 = vunpack.c.l.b16 %v1073
        %v1114 = vunpack.c.l.b16 %v1074
        %v1115 = vunpack.c.l.b16 %v1075
        %v1116 = vunpack.c.l.b16 %v1076
        %v1117 = vunpack.c.l.b16 %v1077
        %v1118 = vunpack.c.l.b16 %v1078
        %v1119 = vunpack.c.l.b16 %v1079
        %v1120 = vunpack.c.l.b16 %v1080
        %v1121 = vunpack.c.l.b16 %v1081
        %v1122 = vunpack.c.l.b16 %v1082
        %v1123 = vunpack.c.l.b16 %v1083
        %v1124 = vunpack.c.l.b16 %v1084
        %v1125 = vunpack.c.l.b16 %v1085
        %v1126 = vpack.c.b16 %v1111, %v1110
        %v1127 = vpack.c.b16 %v1113, %v1112
        %v1128 = vpack.c.b16 %v1115, %v1114
        %v1129 = vpack.c.b16 %v1117, %v1116
        %v1130 = vpack.c.b16 %v1119, %v1118
        %v1131 = vpack.c.b16 %v1121, %v1120
        %v1132 = vpack.c.b16 %v1123, %v1122
        %v1133 = vpack.c.b16 %v1125, %v1124
        %1142 = vmatprep.subr.bf16.mxu0 0
        %1143 = vmatpush1.bf16.msra.mxu0 %v1126
        %1144 = vmatprep.subr.bf16.mxu0 0
        %1145 = vmatpush1.bf16.msra.mxu0 %v1127
        %1146 = vmatprep.subr.bf16.mxu0 0
        %1147 = vmatpush1.bf16.msra.mxu0 %v1128
        %1148 = vmatprep.subr.bf16.mxu0 0
        %1149 = vmatpush1.bf16.msra.mxu0 %v1129
        %1150 = vmatprep.subr.bf16.mxu0 0
        %1151 = vmatpush1.bf16.msra.mxu0 %v1130
        %1152 = vmatprep.subr.bf16.mxu0 0
        %1153 = vmatpush1.bf16.msra.mxu0 %v1131
        %1154 = vmatprep.subr.bf16.mxu0 0
        %1155 = vmatpush1.bf16.msra.mxu0 %v1132
        %1156 = vmatprep.subr.bf16.mxu0 0
        %1157 = vmatpush1.bf16.msra.mxu0 %v1133
        %1158 = vmatprep.subr.bf16.mxu0 0
        %1159 = vmatpush1.bf16.msra.mxu0 0
        %1160 = vmatprep.subr.bf16.mxu0 0
        %1161 = vmatpush1.bf16.msra.mxu0 0
        %1162 = vmatprep.subr.bf16.mxu0 0
        %1163 = vmatpush1.bf16.msra.mxu0 0
        %1164 = vmatprep.subr.bf16.mxu0 0
        %1165 = vmatpush1.bf16.msra.mxu0 0
        %1166 = vmatprep.subr.bf16.mxu0 0
        %1167 = vmatpush1.bf16.msra.mxu0 0
        %1168 = vmatprep.subr.bf16.mxu0 0
        %1169 = vmatpush1.bf16.msra.mxu0 0
        %1170 = vmatprep.subr.bf16.mxu0 0
        %1171 = vmatpush1.bf16.msra.mxu0 0
        %1172 = vmatprep.subr.bf16.mxu0 0
        %1173 = vmatpush1.bf16.msra.mxu0 0
        %1174 = vmatprep.mubr.bf16.mxu0 0
        %1175 = vmatmul.mubr.bf16.gmra.mrb[0].mxu0 %v1086
        %v1176 = vpop.f32.mrb[0].mxu0
        %v1177 = vadd.f32 %v1092, %v1176
        %v1178 = vpop.f32.mrb[0].mxu0
        %v1179 = vpop.f32.mrb[0].mxu0
        %v1180 = vadd.f32 %v1092, %v1179
        %v1181 = vpop.f32.mrb[0].mxu0
        %1182 = vdwg.mxu0
        %v1183 = vld [vmem:[%s982] sm:$0xf]
        %v1184 = vld [vmem:[%s982 + $0x4] sm:$0xf]
        %v1185 = vld [vmem:[%s988] sm:$0xff]
        %v1186 = vld [vmem:[%s988 + $0x8] sm:$0xff]
        %v1187 = vld [vmem:[%s988 + $0x10] sm:$0xff]
        %v1188 = vld [vmem:[%s988 + $0x18] sm:$0xff]
        %v1189 = vld [vmem:[%s992] sm:$0x3]
        %v1191 = vlaneseq
        %v1192 = vshrl.u32 %v1191, 7
        %v1193 = vsub.s32 0, %v1192
        %v1194 = vrot.slane %v1189, %v1193
        %v1195 = vlaneseq
        %v1196 = vshrl.u32 %v1195, 7
        %v1197 = vsub.s32 1, %v1196
        %v1198 = vrot.slane %v1189, %v1197
        %v1203 = vunpack.c.l.b16 %v1183
        %v1204 = vunpack.c.l.b16 %v1184
        %v1205 = vpack.c.b16 %v1204, %v1203
        %v1210 = vunpack.c.l.b16 %v1185
        %v1211 = vunpack.c.h.b16 %v1185
        %v1212 = vunpack.c.l.b16 %v1186
        %v1213 = vunpack.c.h.b16 %v1186
        %v1214 = vunpack.c.l.b16 %v1187
        %v1215 = vunpack.c.h.b16 %v1187
        %v1216 = vunpack.c.l.b16 %v1188
        %v1217 = vunpack.c.h.b16 %v1188
        %v1218 = vpack.c.b16 %v1212, %v1210
        %v1219 = vpack.c.b16 %v1213, %v1211
        %v1220 = vpack.c.b16 %v1216, %v1214
        %v1221 = vpack.c.b16 %v1217, %v1215
        %vm1226 = vcmask 261120
        %v1228 = vsel %vm1226, %v1205, 0
        %1230 = vmatprep.subr.bf16.mxu0 %v1219
        %1231 = vmatpush1.bf16.msra.mxu0 %v1218
        %1232 = vmatprep.subr.bf16.mxu0 %v1221
        %1233 = vmatpush1.bf16.msra.mxu0 %v1220
        %1234 = vmatprep.subr.bf16.mxu0 0
        %1235 = vmatpush1.bf16.msra.mxu0 0
        %1236 = vmatprep.subr.bf16.mxu0 0
        %1237 = vmatpush1.bf16.msra.mxu0 0
        %1238 = vmatprep.subr.bf16.mxu0 0
        %1239 = vmatpush1.bf16.msra.mxu0 0
        %1240 = vmatprep.subr.bf16.mxu0 0
        %1241 = vmatpush1.bf16.msra.mxu0 0
        %1242 = vmatprep.subr.bf16.mxu0 0
        %1243 = vmatpush1.bf16.msra.mxu0 0
        %1244 = vmatprep.subr.bf16.mxu0 0
        %1245 = vmatpush1.bf16.msra.mxu0 0
        %1246 = vmatprep.subr.bf16.mxu0 0
        %1247 = vmatpush1.bf16.msra.mxu0 0
        %1248 = vmatprep.subr.bf16.mxu0 0
        %1249 = vmatpush1.bf16.msra.mxu0 0
        %1250 = vmatprep.subr.bf16.mxu0 0
        %1251 = vmatpush1.bf16.msra.mxu0 0
        %1252 = vmatprep.subr.bf16.mxu0 0
        %1253 = vmatpush1.bf16.msra.mxu0 0
        %1254 = vmatprep.subr.bf16.mxu0 0
        %1255 = vmatpush1.bf16.msra.mxu0 0
        %1256 = vmatprep.subr.bf16.mxu0 0
        %1257 = vmatpush1.bf16.msra.mxu0 0
        %1258 = vmatprep.subr.bf16.mxu0 0
        %1259 = vmatpush1.bf16.msra.mxu0 0
        %1260 = vmatprep.subr.bf16.mxu0 0
        %1261 = vmatpush1.bf16.msra.mxu0 0
        %1262 = vmatprep.mubr.bf16.mxu0 0
        %1263 = vmatmul.mubr.bf16.gmra.mrb[0].mxu0 %v1228
        %v1264 = vpop.f32.mrb[0].mxu0
        %v1265 = vadd.f32 %v1194, %v1264
        %v1266 = vpop.f32.mrb[0].mxu0
        %v1267 = vadd.f32 %v1198, %v1266
        %v1268 = vpop.f32.mrb[0].mxu0
        %v1269 = vadd.f32 %v1194, %v1268
        %v1270 = vpop.f32.mrb[0].mxu0
        %v1271 = vadd.f32 %v1198, %v1270
        %1272 = vdwg.mxu0
        %v1273 = vpack.c.bf16 %v1177, %v1177
        %v1274 = vpack.c.bf16 %v1180, %v1180
        %v1275 = vpack.c.bf16 %v1265, %v1265
        %v1276 = vpack.c.bf16 %v1269, %v1269
        %1277 = vmatprep.subr.bf16.mxu0 0
        %1278 = vmatpush1.bf16.xpose.msra.mxu0 %v1275
        %1279 = vmatprep.subr.bf16.mxu0 0
        %1280 = vmatpush1.bf16.xpose.msra.mxu0 0
        %1281 = vmatprep.subr.bf16.mxu0 0
        %1282 = vmatpush1.bf16.xpose.msra.mxu0 0
        %1283 = vmatprep.subr.bf16.mxu0 0
        %1284 = vmatpush1.bf16.xpose.msra.mxu0 0
        %1285 = vmatprep.subr.bf16.mxu0 0
        %1286 = vmatpush1.bf16.xpose.msra.mxu0 0
        %1287 = vmatprep.subr.bf16.mxu0 0
        %1288 = vmatpush1.bf16.xpose.msra.mxu0 0
        %1289 = vmatprep.subr.bf16.mxu0 0
        %1290 = vmatpush1.bf16.xpose.msra.mxu0 0
        %1291 = vmatprep.subr.bf16.mxu0 0
        %1292 = vmatpush1.bf16.xpose.msra.mxu0 0
        %1293 = vmatprep.subr.bf16.mxu0 0
        %1294 = vmatpush1.bf16.xpose.msra.mxu0 0
        %1295 = vmatprep.subr.bf16.mxu0 0
        %1296 = vmatpush1.bf16.xpose.msra.mxu0 0
        %1297 = vmatprep.subr.bf16.mxu0 0
        %1298 = vmatpush1.bf16.xpose.msra.mxu0 0
        %1299 = vmatprep.subr.bf16.mxu0 0
        %1300 = vmatpush1.bf16.xpose.msra.mxu0 0
        %1301 = vmatprep.subr.bf16.mxu0 0
        %1302 = vmatpush1.bf16.xpose.msra.mxu0 0
        %1303 = vmatprep.subr.bf16.mxu0 0
        %1304 = vmatpush1.bf16.xpose.msra.mxu0 0
        %1305 = vmatprep.subr.bf16.mxu0 0
        %1306 = vmatpush1.bf16.xpose.msra.mxu0 0
        %1307 = vmatprep.subr.bf16.mxu0 0
        %1308 = vmatpush1.bf16.xpose.msra.mxu0 0
        %1309 = vmatprep.mubr.bf16.mxu0 0
        %1310 = vmatmul.mubr.bf16.gmra.mrb[0].mxu0 %v1273
        %v1311 = vpop.f32.mrb[0].mxu0
        %v1312 = vadd.f32 0.0, %v1311
        %v1313 = vpop.f32.mrb[0].mxu0
        %v1314 = vpop.f32.mrb[0].mxu0
        %v1315 = vpop.f32.mrb[0].mxu0
        %1316 = vdwg.mxu0
        %1317 = vmatprep.subr.bf16.mxu0 0
        %1318 = vmatpush1.bf16.xpose.msra.mxu0 %v1276
        %1319 = vmatprep.subr.bf16.mxu0 0
        %1320 = vmatpush1.bf16.xpose.msra.mxu0 0
        %1321 = vmatprep.subr.bf16.mxu0 0
        %1322 = vmatpush1.bf16.xpose.msra.mxu0 0
        %1323 = vmatprep.subr.bf16.mxu0 0
        %1324 = vmatpush1.bf16.xpose.msra.mxu0 0
        %1325 = vmatprep.subr.bf16.mxu0 0
        %1326 = vmatpush1.bf16.xpose.msra.mxu0 0
        %1327 = vmatprep.subr.bf16.mxu0 0
        %1328 = vmatpush1.bf16.xpose.msra.mxu0 0
        %1329 = vmatprep.subr.bf16.mxu0 0
        %1330 = vmatpush1.bf16.xpose.msra.mxu0 0
        %1331 = vmatprep.subr.bf16.mxu0 0
        %1332 = vmatpush1.bf16.xpose.msra.mxu0 0
        %1333 = vmatprep.subr.bf16.mxu0 0
        %1334 = vmatpush1.bf16.xpose.msra.mxu0 0
        %1335 = vmatprep.subr.bf16.mxu0 0
        %1336 = vmatpush1.bf16.xpose.msra.mxu0 0
        %1337 = vmatprep.subr.bf16.mxu0 0
        %1338 = vmatpush1.bf16.xpose.msra.mxu0 0
        %1339 = vmatprep.subr.bf16.mxu0 0
        %1340 = vmatpush1.bf16.xpose.msra.mxu0 0
        %1341 = vmatprep.subr.bf16.mxu0 0
        %1342 = vmatpush1.bf16.xpose.msra.mxu0 0
        %1343 = vmatprep.subr.bf16.mxu0 0
        %1344 = vmatpush1.bf16.xpose.msra.mxu0 0
        %1345 = vmatprep.subr.bf16.mxu0 0
        %1346 = vmatpush1.bf16.xpose.msra.mxu0 0
        %1347 = vmatprep.subr.bf16.mxu0 0
        %1348 = vmatpush1.bf16.xpose.msra.mxu0 0
        %1349 = vmatprep.mubr.bf16.mxu0 0
        %1350 = vmatmul.mubr.bf16.gmra.mrb[0].mxu0 %v1274
        %v1351 = vpop.f32.mrb[0].mxu0
        %v1352 = vadd.f32 0.0, %v1351
        %v1353 = vpop.f32.mrb[0].mxu0
        %v1354 = vpop.f32.mrb[0].mxu0
        %v1355 = vpop.f32.mrb[0].mxu0
        %1356 = vdwg.mxu0
        %vm1357 = vcmask 64512
        %v1358 = vsel %vm1357, %v1312, -inf
        %1359 = vmax.xlane.f32.xlu0 %v1358
        %v1360 = vpop.xlane.xlu0 %1359
        %v1361 = vsel %vm1357, %v1352, -inf
        %1362 = vmax.xlane.f32.xlu0 %v1361
        %v1363 = vpop.xlane.xlu0 %1362
        %v1364 = vsub.f32 %v1312, %v1360
        %v1365 = vsub.f32 %v1352, %v1363
        %v1366 = vmul.f32 %v1364, 1.442695
        %v1367 = vpow.pop %v1366
        %v1368 = vmul.f32 %v1365, 1.442695
        %v1369 = vpow.pop %v1368
        %v1370 = vsel %vm1357, %v1367, 0.0
        %1371 = vadd.xlane.f32.xlu0 %v1370
        %v1372 = vpop.xlane.xlu0 %1371
        %v1373 = vsel %vm1357, %v1369, 0.0
        %1374 = vadd.xlane.f32.xlu0 %v1373
        %v1375 = vpop.xlane.xlu0 %1374
        %v1376 = vrcp.pop %v1372
        %v1377 = vrcp.pop %v1375
        %v1378 = vmul.f32 %v1367, %v1376
        %v1379 = vmul.f32 %v1369, %v1377
        %v1380 = vpack.c.bf16 %v1378, %v1378
        %v1381 = vpack.c.bf16 %v1379, %v1379
        %v1382 = vpack.c.bf16 %v1267, %v1267
        %v1383 = vpack.c.bf16 %v1271, %v1271
        %v1385 = vsel %vm1357, %v1380, 0
        %vm1387 = vcmask 1043456
        %v1389 = vsel %vm1387, %v1382, 0
        %1391 = vmatprep.subr.bf16.mxu0 0
        %1392 = vmatpush1.bf16.msra.mxu0 %v1389
        %1393 = vmatprep.subr.bf16.mxu0 0
        %1394 = vmatpush1.bf16.msra.mxu0 0
        %1395 = vmatprep.subr.bf16.mxu0 0
        %1396 = vmatpush1.bf16.msra.mxu0 0
        %1397 = vmatprep.subr.bf16.mxu0 0
        %1398 = vmatpush1.bf16.msra.mxu0 0
        %1399 = vmatprep.subr.bf16.mxu0 0
        %1400 = vmatpush1.bf16.msra.mxu0 0
        %1401 = vmatprep.subr.bf16.mxu0 0
        %1402 = vmatpush1.bf16.msra.mxu0 0
        %1403 = vmatprep.subr.bf16.mxu0 0
        %1404 = vmatpush1.bf16.msra.mxu0 0
        %1405 = vmatprep.subr.bf16.mxu0 0
        %1406 = vmatpush1.bf16.msra.mxu0 0
        %1407 = vmatprep.subr.bf16.mxu0 0
        %1408 = vmatpush1.bf16.msra.mxu0 0
        %1409 = vmatprep.subr.bf16.mxu0 0
        %1410 = vmatpush1.bf16.msra.mxu0 0
        %1411 = vmatprep.subr.bf16.mxu0 0
        %1412 = vmatpush1.bf16.msra.mxu0 0
        %1413 = vmatprep.subr.bf16.mxu0 0
        %1414 = vmatpush1.bf16.msra.mxu0 0
        %1415 = vmatprep.subr.bf16.mxu0 0
        %1416 = vmatpush1.bf16.msra.mxu0 0
        %1417 = vmatprep.subr.bf16.mxu0 0
        %1418 = vmatpush1.bf16.msra.mxu0 0
        %1419 = vmatprep.subr.bf16.mxu0 0
        %1420 = vmatpush1.bf16.msra.mxu0 0
        %1421 = vmatprep.subr.bf16.mxu0 0
        %1422 = vmatpush1.bf16.msra.mxu0 0
        %1423 = vmatprep.mubr.bf16.mxu0 0
        %1424 = vmatmul.mubr.bf16.gmra.mrb[0].mxu0 %v1385
        %v1425 = vpop.f32.mrb[0].mxu0
        %v1426 = vadd.f32 0.0, %v1425
        %v1427 = vpop.f32.mrb[0].mxu0
        %v1428 = vpop.f32.mrb[0].mxu0
        %v1429 = vpop.f32.mrb[0].mxu0
        %1430 = vdwg.mxu0
        %v1432 = vsel %vm1357, %v1381, 0
        %v1435 = vsel %vm1387, %v1383, 0
        %1437 = vmatprep.subr.bf16.mxu0 0
        %1438 = vmatpush1.bf16.msra.mxu0 %v1435
        %1439 = vmatprep.subr.bf16.mxu0 0
        %1440 = vmatpush1.bf16.msra.mxu0 0
        %1441 = vmatprep.subr.bf16.mxu0 0
        %1442 = vmatpush1.bf16.msra.mxu0 0
        %1443 = vmatprep.subr.bf16.mxu0 0
        %1444 = vmatpush1.bf16.msra.mxu0 0
        %1445 = vmatprep.subr.bf16.mxu0 0
        %1446 = vmatpush1.bf16.msra.mxu0 0
        %1447 = vmatprep.subr.bf16.mxu0 0
        %1448 = vmatpush1.bf16.msra.mxu0 0
        %1449 = vmatprep.subr.bf16.mxu0 0
        %1450 = vmatpush1.bf16.msra.mxu0 0
        %1451 = vmatprep.subr.bf16.mxu0 0
        %1452 = vmatpush1.bf16.msra.mxu0 0
        %1453 = vmatprep.subr.bf16.mxu0 0
        %1454 = vmatpush1.bf16.msra.mxu0 0
        %1455 = vmatprep.subr.bf16.mxu0 0
        %1456 = vmatpush1.bf16.msra.mxu0 0
        %1457 = vmatprep.subr.bf16.mxu0 0
        %1458 = vmatpush1.bf16.msra.mxu0 0
        %1459 = vmatprep.subr.bf16.mxu0 0
        %1460 = vmatpush1.bf16.msra.mxu0 0
        %1461 = vmatprep.subr.bf16.mxu0 0
        %1462 = vmatpush1.bf16.msra.mxu0 0
        %1463 = vmatprep.subr.bf16.mxu0 0
        %1464 = vmatpush1.bf16.msra.mxu0 0
        %1465 = vmatprep.subr.bf16.mxu0 0
        %1466 = vmatpush1.bf16.msra.mxu0 0
        %1467 = vmatprep.subr.bf16.mxu0 0
        %1468 = vmatpush1.bf16.msra.mxu0 0
        %1469 = vmatprep.mubr.bf16.mxu0 0
        %1470 = vmatmul.mubr.bf16.gmra.mrb[0].mxu0 %v1432
        %v1471 = vpop.f32.mrb[0].mxu0
        %v1472 = vadd.f32 0.0, %v1471
        %v1473 = vpop.f32.mrb[0].mxu0
        %v1474 = vpop.f32.mrb[0].mxu0
        %v1475 = vpop.f32.mrb[0].mxu0
        %1476 = vdwg.mxu0
        %v1477 = vld [vmem:[%s816] sm:$0xf]
        %v1478 = vld [vmem:[%s816 + $0x4] sm:$0xf]
        %v1479 = vld [vmem:[%s816 + $0x8] sm:$0xf]
        %v1480 = vld [vmem:[%s816 + $0xc] sm:$0xf]
        %v1481 = vld [vmem:[%s816 + $0x10] sm:$0xf]
        %v1482 = vld [vmem:[%s816 + $0x14] sm:$0xf]
        %v1483 = vld [vmem:[%s816 + $0x18] sm:$0xf]
        %v1484 = vld [vmem:[%s816 + $0x1c] sm:$0xf]
        %v1485 = vld [vmem:[%s816 + $0x20] sm:$0xf]
        %v1486 = vld [vmem:[%s816 + $0x24] sm:$0xf]
        %v1487 = vld [vmem:[%s816 + $0x28] sm:$0xf]
        %v1488 = vld [vmem:[%s816 + $0x2c] sm:$0xf]
        %v1489 = vld [vmem:[%s816 + $0x30] sm:$0xf]
        %v1490 = vld [vmem:[%s816 + $0x34] sm:$0xf]
        %v1491 = vld [vmem:[%s816 + $0x38] sm:$0xf]
        %v1492 = vld [vmem:[%s816 + $0x3c] sm:$0xf]
        %v1493 = vpack.c.bf16 %v1472, %v1426
        %v1494 = vld [vmem:[%s824] sm:$0x1]
        %v1496 = vlaneseq
        %v1497 = vshrl.u32 %v1496, 7
        %v1498 = vsub.s32 0, %v1497
        %v1499 = vrot.slane %v1494, %v1498
        %v1517 = vunpack.c.l.b16 %v1477
        %v1518 = vunpack.c.l.b16 %v1478
        %v1519 = vunpack.c.l.b16 %v1479
        %v1520 = vunpack.c.l.b16 %v1480
        %v1521 = vunpack.c.l.b16 %v1481
        %v1522 = vunpack.c.l.b16 %v1482
        %v1523 = vunpack.c.l.b16 %v1483
        %v1524 = vunpack.c.l.b16 %v1484
        %v1525 = vunpack.c.l.b16 %v1485
        %v1526 = vunpack.c.l.b16 %v1486
        %v1527 = vunpack.c.l.b16 %v1487
        %v1528 = vunpack.c.l.b16 %v1488
        %v1529 = vunpack.c.l.b16 %v1489
        %v1530 = vunpack.c.l.b16 %v1490
        %v1531 = vunpack.c.l.b16 %v1491
        %v1532 = vunpack.c.l.b16 %v1492
        %v1533 = vpack.c.b16 %v1518, %v1517
        %v1534 = vpack.c.b16 %v1520, %v1519
        %v1535 = vpack.c.b16 %v1522, %v1521
        %v1536 = vpack.c.b16 %v1524, %v1523
        %v1537 = vpack.c.b16 %v1526, %v1525
        %v1538 = vpack.c.b16 %v1528, %v1527
        %v1539 = vpack.c.b16 %v1530, %v1529
        %v1540 = vpack.c.b16 %v1532, %v1531
        %1549 = vmatprep.subr.bf16.mxu0 0
        %1550 = vmatpush1.bf16.msra.mxu0 %v1533
        %1551 = vmatprep.subr.bf16.mxu0 0
        %1552 = vmatpush1.bf16.msra.mxu0 %v1534
        %1553 = vmatprep.subr.bf16.mxu0 0
        %1554 = vmatpush1.bf16.msra.mxu0 %v1535
        %1555 = vmatprep.subr.bf16.mxu0 0
        %1556 = vmatpush1.bf16.msra.mxu0 %v1536
        %1557 = vmatprep.subr.bf16.mxu0 0
        %1558 = vmatpush1.bf16.msra.mxu0 %v1537
        %1559 = vmatprep.subr.bf16.mxu0 0
        %1560 = vmatpush1.bf16.msra.mxu0 %v1538
        %1561 = vmatprep.subr.bf16.mxu0 0
        %1562 = vmatpush1.bf16.msra.mxu0 %v1539
        %1563 = vmatprep.subr.bf16.mxu0 0
        %1564 = vmatpush1.bf16.msra.mxu0 %v1540
        %1565 = vmatprep.subr.bf16.mxu0 0
        %1566 = vmatpush1.bf16.msra.mxu0 0
        %1567 = vmatprep.subr.bf16.mxu0 0
        %1568 = vmatpush1.bf16.msra.mxu0 0
        %1569 = vmatprep.subr.bf16.mxu0 0
        %1570 = vmatpush1.bf16.msra.mxu0 0
        %1571 = vmatprep.subr.bf16.mxu0 0
        %1572 = vmatpush1.bf16.msra.mxu0 0
        %1573 = vmatprep.subr.bf16.mxu0 0
        %1574 = vmatpush1.bf16.msra.mxu0 0
        %1575 = vmatprep.subr.bf16.mxu0 0
        %1576 = vmatpush1.bf16.msra.mxu0 0
        %1577 = vmatprep.subr.bf16.mxu0 0
        %1578 = vmatpush1.bf16.msra.mxu0 0
        %1579 = vmatprep.subr.bf16.mxu0 0
        %1580 = vmatpush1.bf16.msra.mxu0 0
        %1581 = vmatprep.mubr.bf16.mxu0 0
        %1582 = vmatmul.mubr.bf16.gmra.mrb[0].mxu0 %v1493
        %v1583 = vpop.f32.mrb[0].mxu0
        %v1584 = vadd.f32 %v1499, %v1583
        %v1585 = vpop.f32.mrb[0].mxu0
        %v1586 = vpop.f32.mrb[0].mxu0
        %v1587 = vadd.f32 %v1499, %v1586
        %v1588 = vpop.f32.mrb[0].mxu0
        %1589 = vdwg.mxu0
        %v1590 = vadd.f32 %v1068, %v1584
        %v1591 = vadd.f32 %v1069, %v1587
        %v1592 = vld [vmem:[%s833] sm:$0xf]
        %v1593 = vld [vmem:[%s833 + $0x4] sm:$0xf]
        %v1594 = vld [vmem:[%s833 + $0x8] sm:$0xf]
        %v1595 = vld [vmem:[%s833 + $0xc] sm:$0xf]
        %v1596 = vld [vmem:[%s833 + $0x10] sm:$0xf]
        %v1597 = vld [vmem:[%s833 + $0x14] sm:$0xf]
        %v1598 = vld [vmem:[%s833 + $0x18] sm:$0xf]
        %v1599 = vld [vmem:[%s833 + $0x1c] sm:$0xf]
        %v1600 = vld [vmem:[%s833 + $0x20] sm:$0xf]
        %v1601 = vld [vmem:[%s833 + $0x24] sm:$0xf]
        %v1602 = vld [vmem:[%s833 + $0x28] sm:$0xf]
        %v1603 = vld [vmem:[%s833 + $0x2c] sm:$0xf]
        %v1604 = vld [vmem:[%s833 + $0x30] sm:$0xf]
        %v1605 = vld [vmem:[%s833 + $0x34] sm:$0xf]
        %v1606 = vld [vmem:[%s833 + $0x38] sm:$0xf]
        %v1607 = vld [vmem:[%s833 + $0x3c] sm:$0xf]
        %v1608 = vpack.c.bf16 %v1591, %v1590
        %v1609 = vld [vmem:[%s841] sm:$0x1]
        %v1611 = vlaneseq
        %v1612 = vshrl.u32 %v1611, 7
        %v1613 = vsub.s32 0, %v1612
        %v1614 = vrot.slane %v1609, %v1613
        %v1632 = vunpack.c.l.b16 %v1592
        %v1633 = vunpack.c.l.b16 %v1593
        %v1634 = vunpack.c.l.b16 %v1594
        %v1635 = vunpack.c.l.b16 %v1595
        %v1636 = vunpack.c.l.b16 %v1596
        %v1637 = vunpack.c.l.b16 %v1597
        %v1638 = vunpack.c.l.b16 %v1598
        %v1639 = vunpack.c.l.b16 %v1599
        %v1640 = vunpack.c.l.b16 %v1600
        %v1641 = vunpack.c.l.b16 %v1601
        %v1642 = vunpack.c.l.b16 %v1602
        %v1643 = vunpack.c.l.b16 %v1603
        %v1644 = vunpack.c.l.b16 %v1604
        %v1645 = vunpack.c.l.b16 %v1605
        %v1646 = vunpack.c.l.b16 %v1606
        %v1647 = vunpack.c.l.b16 %v1607
        %v1648 = vpack.c.b16 %v1633, %v1632
        %v1649 = vpack.c.b16 %v1635, %v1634
        %v1650 = vpack.c.b16 %v1637, %v1636
        %v1651 = vpack.c.b16 %v1639, %v1638
        %v1652 = vpack.c.b16 %v1641, %v1640
        %v1653 = vpack.c.b16 %v1643, %v1642
        %v1654 = vpack.c.b16 %v1645, %v1644
        %v1655 = vpack.c.b16 %v1647, %v1646
        %1664 = vmatprep.subr.bf16.mxu0 0
        %1665 = vmatpush1.bf16.msra.mxu0 %v1648
        %1666 = vmatprep.subr.bf16.mxu0 0
        %1667 = vmatpush1.bf16.msra.mxu0 %v1649
        %1668 = vmatprep.subr.bf16.mxu0 0
        %1669 = vmatpush1.bf16.msra.mxu0 %v1650
        %1670 = vmatprep.subr.bf16.mxu0 0
        %1671 = vmatpush1.bf16.msra.mxu0 %v1651
        %1672 = vmatprep.subr.bf16.mxu0 0
        %1673 = vmatpush1.bf16.msra.mxu0 %v1652
        %1674 = vmatprep.subr.bf16.mxu0 0
        %1675 = vmatpush1.bf16.msra.mxu0 %v1653
        %1676 = vmatprep.subr.bf16.mxu0 0
        %1677 = vmatpush1.bf16.msra.mxu0 %v1654
        %1678 = vmatprep.subr.bf16.mxu0 0
        %1679 = vmatpush1.bf16.msra.mxu0 %v1655
        %1680 = vmatprep.subr.bf16.mxu0 0
        %1681 = vmatpush1.bf16.msra.mxu0 0
        %1682 = vmatprep.subr.bf16.mxu0 0
        %1683 = vmatpush1.bf16.msra.mxu0 0
        %1684 = vmatprep.subr.bf16.mxu0 0
        %1685 = vmatpush1.bf16.msra.mxu0 0
        %1686 = vmatprep.subr.bf16.mxu0 0
        %1687 = vmatpush1.bf16.msra.mxu0 0
        %1688 = vmatprep.subr.bf16.mxu0 0
        %1689 = vmatpush1.bf16.msra.mxu0 0
        %1690 = vmatprep.subr.bf16.mxu0 0
        %1691 = vmatpush1.bf16.msra.mxu0 0
        %1692 = vmatprep.subr.bf16.mxu0 0
        %1693 = vmatpush1.bf16.msra.mxu0 0
        %1694 = vmatprep.subr.bf16.mxu0 0
        %1695 = vmatpush1.bf16.msra.mxu0 0
        %1696 = vmatprep.mubr.bf16.mxu0 0
        %1697 = vmatmul.mubr.bf16.gmra.mrb[0].mxu0 %v1608
        %v1698 = vpop.f32.mrb[0].mxu0
        %v1699 = vadd.f32 %v1614, %v1698
        %v1700 = vpop.f32.mrb[0].mxu0
        %v1701 = vpop.f32.mrb[0].mxu0
        %v1702 = vadd.f32 %v1614, %v1701
        %v1703 = vpop.f32.mrb[0].mxu0
        %1704 = vdwg.mxu0
        %v1705 = vmax.f32 %v1699, 0.0
        %v1706 = vmax.f32 %v1702, 0.0
        %v1707 = vld [vmem:[%s850] sm:$0xf]
        %v1708 = vld [vmem:[%s850 + $0x4] sm:$0xf]
        %v1709 = vld [vmem:[%s850 + $0x8] sm:$0xf]
        %v1710 = vld [vmem:[%s850 + $0xc] sm:$0xf]
        %v1711 = vld [vmem:[%s850 + $0x10] sm:$0xf]
        %v1712 = vld [vmem:[%s850 + $0x14] sm:$0xf]
        %v1713 = vld [vmem:[%s850 + $0x18] sm:$0xf]
        %v1714 = vld [vmem:[%s850 + $0x1c] sm:$0xf]
        %v1715 = vld [vmem:[%s850 + $0x20] sm:$0xf]
        %v1716 = vld [vmem:[%s850 + $0x24] sm:$0xf]
        %v1717 = vld [vmem:[%s850 + $0x28] sm:$0xf]
        %v1718 = vld [vmem:[%s850 + $0x2c] sm:$0xf]
        %v1719 = vld [vmem:[%s850 + $0x30] sm:$0xf]
        %v1720 = vld [vmem:[%s850 + $0x34] sm:$0xf]
        %v1721 = vld [vmem:[%s850 + $0x38] sm:$0xf]
        %v1722 = vld [vmem:[%s850 + $0x3c] sm:$0xf]
        %v1723 = vpack.c.bf16 %v1706, %v1705
        %v1724 = vld [vmem:[%s858] sm:$0x1]
        %v1726 = vlaneseq
        %v1727 = vshrl.u32 %v1726, 7
        %v1728 = vsub.s32 0, %v1727
        %v1729 = vrot.slane %v1724, %v1728
        %v1747 = vunpack.c.l.b16 %v1707
        %v1748 = vunpack.c.l.b16 %v1708
        %v1749 = vunpack.c.l.b16 %v1709
        %v1750 = vunpack.c.l.b16 %v1710
        %v1751 = vunpack.c.l.b16 %v1711
        %v1752 = vunpack.c.l.b16 %v1712
        %v1753 = vunpack.c.l.b16 %v1713
        %v1754 = vunpack.c.l.b16 %v1714
        %v1755 = vunpack.c.l.b16 %v1715
        %v1756 = vunpack.c.l.b16 %v1716
        %v1757 = vunpack.c.l.b16 %v1717
        %v1758 = vunpack.c.l.b16 %v1718
        %v1759 = vunpack.c.l.b16 %v1719
        %v1760 = vunpack.c.l.b16 %v1720
        %v1761 = vunpack.c.l.b16 %v1721
        %v1762 = vunpack.c.l.b16 %v1722
        %v1763 = vpack.c.b16 %v1748, %v1747
        %v1764 = vpack.c.b16 %v1750, %v1749
        %v1765 = vpack.c.b16 %v1752, %v1751
        %v1766 = vpack.c.b16 %v1754, %v1753
        %v1767 = vpack.c.b16 %v1756, %v1755
        %v1768 = vpack.c.b16 %v1758, %v1757
        %v1769 = vpack.c.b16 %v1760, %v1759
        %v1770 = vpack.c.b16 %v1762, %v1761
        %1779 = vmatprep.subr.bf16.mxu0 0
        %1780 = vmatpush1.bf16.msra.mxu0 %v1763
        %1781 = vmatprep.subr.bf16.mxu0 0
        %1782 = vmatpush1.bf16.msra.mxu0 %v1764
        %1783 = vmatprep.subr.bf16.mxu0 0
        %1784 = vmatpush1.bf16.msra.mxu0 %v1765
        %1785 = vmatprep.subr.bf16.mxu0 0
        %1786 = vmatpush1.bf16.msra.mxu0 %v1766
        %1787 = vmatprep.subr.bf16.mxu0 0
        %1788 = vmatpush1.bf16.msra.mxu0 %v1767
        %1789 = vmatprep.subr.bf16.mxu0 0
        %1790 = vmatpush1.bf16.msra.mxu0 %v1768
        %1791 = vmatprep.subr.bf16.mxu0 0
        %1792 = vmatpush1.bf16.msra.mxu0 %v1769
        %1793 = vmatprep.subr.bf16.mxu0 0
        %1794 = vmatpush1.bf16.msra.mxu0 %v1770
        %1795 = vmatprep.subr.bf16.mxu0 0
        %1796 = vmatpush1.bf16.msra.mxu0 0
        %1797 = vmatprep.subr.bf16.mxu0 0
        %1798 = vmatpush1.bf16.msra.mxu0 0
        %1799 = vmatprep.subr.bf16.mxu0 0
        %1800 = vmatpush1.bf16.msra.mxu0 0
        %1801 = vmatprep.subr.bf16.mxu0 0
        %1802 = vmatpush1.bf16.msra.mxu0 0
        %1803 = vmatprep.subr.bf16.mxu0 0
        %1804 = vmatpush1.bf16.msra.mxu0 0
        %1805 = vmatprep.subr.bf16.mxu0 0
        %1806 = vmatpush1.bf16.msra.mxu0 0
        %1807 = vmatprep.subr.bf16.mxu0 0
        %1808 = vmatpush1.bf16.msra.mxu0 0
        %1809 = vmatprep.subr.bf16.mxu0 0
        %1810 = vmatpush1.bf16.msra.mxu0 0
        %1811 = vmatprep.mubr.bf16.mxu0 0
        %1812 = vmatmul.mubr.bf16.gmra.mrb[0].mxu0 %v1723
        %v1813 = vpop.f32.mrb[0].mxu0
        %v1814 = vadd.f32 %v1729, %v1813
        %v1815 = vpop.f32.mrb[0].mxu0
        %v1816 = vpop.f32.mrb[0].mxu0
        %v1817 = vadd.f32 %v1729, %v1816
        %v1818 = vpop.f32.mrb[0].mxu0
        %1819 = vdwg.mxu0
        %v1820 = vadd.f32 %v1590, %v1814
        %v1821 = vadd.f32 %v1591, %v1817
        %1822 = vst [vmem:[#allocation2] sm:$0xff] %v1820
        %1823 = vst [vmem:[#allocation2 + $0x8] sm:$0xff] %v1821
        %p1824 = scmp.eq.s32.totalorder %s50, 1
        // Predicated region
        $region149: #{pack_decoder_forward.1} parent=91 // pred_check
          %p1825 = pneg %p1824
        $region150: #{pack_decoder_forward.1} parent=91 // pred_check_branch
          %1827 = sbr.rel (%p1825) target = $region152
        $region151: #{pack_decoder_forward.1} parent=91 // pred_region
          %v1828 = vld [vmem:[#allocation18] sm:$0xf]
          %v1829 = vld [vmem:[#allocation18 + $0x4] sm:$0xf]
          %v1830 = vld [vmem:[#allocation18 + $0x8] sm:$0xf]
          %v1831 = vld [vmem:[#allocation18 + $0xc] sm:$0xf]
          %v1832 = vld [vmem:[#allocation18 + $0x10] sm:$0xf]
          %v1833 = vld [vmem:[#allocation18 + $0x14] sm:$0xf]
          %v1834 = vld [vmem:[#allocation18 + $0x18] sm:$0xf]
          %v1835 = vld [vmem:[#allocation18 + $0x1c] sm:$0xf]
          %v1836 = vld [vmem:[#allocation18 + $0x20] sm:$0xf]
          %v1837 = vld [vmem:[#allocation18 + $0x24] sm:$0xf]
          %v1838 = vld [vmem:[#allocation18 + $0x28] sm:$0xf]
          %v1839 = vld [vmem:[#allocation18 + $0x2c] sm:$0xf]
          %v1840 = vld [vmem:[#allocation18 + $0x30] sm:$0xf]
          %v1841 = vld [vmem:[#allocation18 + $0x34] sm:$0xf]
          %v1842 = vld [vmem:[#allocation18 + $0x38] sm:$0xf]
          %v1843 = vld [vmem:[#allocation18 + $0x3c] sm:$0xf]
          %v1844 = vpack.c.bf16 %v1821, %v1820
          %v1845 = vld [vmem:[#allocation20] sm:$0x1]
          %v1847 = vlaneseq
          %v1848 = vshrl.u32 %v1847, 7
          %v1849 = vsub.s32 0, %v1848
          %v1850 = vrot.slane %v1845, %v1849
          %v1868 = vunpack.c.l.b16 %v1828
          %v1869 = vunpack.c.l.b16 %v1829
          %v1870 = vunpack.c.l.b16 %v1830
          %v1871 = vunpack.c.l.b16 %v1831
          %v1872 = vunpack.c.l.b16 %v1832
          %v1873 = vunpack.c.l.b16 %v1833
          %v1874 = vunpack.c.l.b16 %v1834
          %v1875 = vunpack.c.l.b16 %v1835
          %v1876 = vunpack.c.l.b16 %v1836
          %v1877 = vunpack.c.l.b16 %v1837
          %v1878 = vunpack.c.l.b16 %v1838
          %v1879 = vunpack.c.l.b16 %v1839
          %v1880 = vunpack.c.l.b16 %v1840
          %v1881 = vunpack.c.l.b16 %v1841
          %v1882 = vunpack.c.l.b16 %v1842
          %v1883 = vunpack.c.l.b16 %v1843
          %v1884 = vpack.c.b16 %v1869, %v1868
          %v1885 = vpack.c.b16 %v1871, %v1870
          %v1886 = vpack.c.b16 %v1873, %v1872
          %v1887 = vpack.c.b16 %v1875, %v1874
          %v1888 = vpack.c.b16 %v1877, %v1876
          %v1889 = vpack.c.b16 %v1879, %v1878
          %v1890 = vpack.c.b16 %v1881, %v1880
          %v1891 = vpack.c.b16 %v1883, %v1882
          %1900 = vmatprep.subr.bf16.mxu0 0
          %1901 = vmatpush1.bf16.msra.mxu0 %v1884
          %1902 = vmatprep.subr.bf16.mxu0 0
          %1903 = vmatpush1.bf16.msra.mxu0 %v1885
          %1904 = vmatprep.subr.bf16.mxu0 0
          %1905 = vmatpush1.bf16.msra.mxu0 %v1886
          %1906 = vmatprep.subr.bf16.mxu0 0
          %1907 = vmatpush1.bf16.msra.mxu0 %v1887
          %1908 = vmatprep.subr.bf16.mxu0 0
          %1909 = vmatpush1.bf16.msra.mxu0 %v1888
          %1910 = vmatprep.subr.bf16.mxu0 0
          %1911 = vmatpush1.bf16.msra.mxu0 %v1889
          %1912 = vmatprep.subr.bf16.mxu0 0
          %1913 = vmatpush1.bf16.msra.mxu0 %v1890
          %1914 = vmatprep.subr.bf16.mxu0 0
          %1915 = vmatpush1.bf16.msra.mxu0 %v1891
          %1916 = vmatprep.subr.bf16.mxu0 0
          %1917 = vmatpush1.bf16.msra.mxu0 0
          %1918 = vmatprep.subr.bf16.mxu0 0
          %1919 = vmatpush1.bf16.msra.mxu0 0
          %1920 = vmatprep.subr.bf16.mxu0 0
          %1921 = vmatpush1.bf16.msra.mxu0 0
          %1922 = vmatprep.subr.bf16.mxu0 0
          %1923 = vmatpush1.bf16.msra.mxu0 0
          %1924 = vmatprep.subr.bf16.mxu0 0
          %1925 = vmatpush1.bf16.msra.mxu0 0
          %1926 = vmatprep.subr.bf16.mxu0 0
          %1927 = vmatpush1.bf16.msra.mxu0 0
          %1928 = vmatprep.subr.bf16.mxu0 0
          %1929 = vmatpush1.bf16.msra.mxu0 0
          %1930 = vmatprep.subr.bf16.mxu0 0
          %1931 = vmatpush1.bf16.msra.mxu0 0
          %1932 = vmatprep.mubr.bf16.mxu0 0
          %1933 = vmatmul.mubr.bf16.gmra.mrb[0].mxu0 %v1844
          %v1934 = vpop.f32.mrb[0].mxu0
          %v1935 = vadd.f32 %v1850, %v1934
          %v1936 = vpop.f32.mrb[0].mxu0
          %v1937 = vpop.f32.mrb[0].mxu0
          %v1938 = vadd.f32 %v1850, %v1937
          %v1939 = vpop.f32.mrb[0].mxu0
          %1940 = vdwg.mxu0
          %v1941 = vmax.f32 %v1935, 0.0
          %v1942 = vmax.f32 %v1938, 0.0
          %v1943 = vld [vmem:[#allocation21] sm:$0xf]
          %v1944 = vld [vmem:[#allocation21 + $0x4] sm:$0xf]
          %v1945 = vld [vmem:[#allocation21 + $0x8] sm:$0xf]
          %v1946 = vld [vmem:[#allocation21 + $0xc] sm:$0xf]
          %v1947 = vld [vmem:[#allocation21 + $0x10] sm:$0xf]
          %v1948 = vld [vmem:[#allocation21 + $0x14] sm:$0xf]
          %v1949 = vld [vmem:[#allocation21 + $0x18] sm:$0xf]
          %v1950 = vld [vmem:[#allocation21 + $0x1c] sm:$0xf]
          %v1951 = vld [vmem:[#allocation21 + $0x20] sm:$0xf]
          %v1952 = vld [vmem:[#allocation21 + $0x24] sm:$0xf]
          %v1953 = vld [vmem:[#allocation21 + $0x28] sm:$0xf]
          %v1954 = vld [vmem:[#allocation21 + $0x2c] sm:$0xf]
          %v1955 = vld [vmem:[#allocation21 + $0x30] sm:$0xf]
          %v1956 = vld [vmem:[#allocation21 + $0x34] sm:$0xf]
          %v1957 = vld [vmem:[#allocation21 + $0x38] sm:$0xf]
          %v1958 = vld [vmem:[#allocation21 + $0x3c] sm:$0xf]
          %v1959 = vpack.c.bf16 %v1942, %v1941
          %v1960 = vld [vmem:[#allocation23] sm:$0x1]
          %v1962 = vlaneseq
          %v1963 = vshrl.u32 %v1962, 7
          %v1964 = vsub.s32 0, %v1963
          %v1965 = vrot.slane %v1960, %v1964
          %v1983 = vunpack.c.l.b16 %v1943
          %v1984 = vunpack.c.l.b16 %v1944
          %v1985 = vunpack.c.l.b16 %v1945
          %v1986 = vunpack.c.l.b16 %v1946
          %v1987 = vunpack.c.l.b16 %v1947
          %v1988 = vunpack.c.l.b16 %v1948
          %v1989 = vunpack.c.l.b16 %v1949
          %v1990 = vunpack.c.l.b16 %v1950
          %v1991 = vunpack.c.l.b16 %v1951
          %v1992 = vunpack.c.l.b16 %v1952
          %v1993 = vunpack.c.l.b16 %v1953
          %v1994 = vunpack.c.l.b16 %v1954
          %v1995 = vunpack.c.l.b16 %v1955
          %v1996 = vunpack.c.l.b16 %v1956
          %v1997 = vunpack.c.l.b16 %v1957
          %v1998 = vunpack.c.l.b16 %v1958
          %v1999 = vpack.c.b16 %v1984, %v1983
          %v2000 = vpack.c.b16 %v1986, %v1985
          %v2001 = vpack.c.b16 %v1988, %v1987
          %v2002 = vpack.c.b16 %v1990, %v1989
          %v2003 = vpack.c.b16 %v1992, %v1991
          %v2004 = vpack.c.b16 %v1994, %v1993
          %v2005 = vpack.c.b16 %v1996, %v1995
          %v2006 = vpack.c.b16 %v1998, %v1997
          %2015 = vmatprep.subr.bf16.mxu0 0
          %2016 = vmatpush1.bf16.msra.mxu0 %v1999
          %2017 = vmatprep.subr.bf16.mxu0 0
          %2018 = vmatpush1.bf16.msra.mxu0 %v2000
          %2019 = vmatprep.subr.bf16.mxu0 0
          %2020 = vmatpush1.bf16.msra.mxu0 %v2001
          %2021 = vmatprep.subr.bf16.mxu0 0
          %2022 = vmatpush1.bf16.msra.mxu0 %v2002
          %2023 = vmatprep.subr.bf16.mxu0 0
          %2024 = vmatpush1.bf16.msra.mxu0 %v2003
          %2025 = vmatprep.subr.bf16.mxu0 0
          %2026 = vmatpush1.bf16.msra.mxu0 %v2004
          %2027 = vmatprep.subr.bf16.mxu0 0
          %2028 = vmatpush1.bf16.msra.mxu0 %v2005
          %2029 = vmatprep.subr.bf16.mxu0 0
          %2030 = vmatpush1.bf16.msra.mxu0 %v2006
          %2031 = vmatprep.subr.bf16.mxu0 0
          %2032 = vmatpush1.bf16.msra.mxu0 0
          %2033 = vmatprep.subr.bf16.mxu0 0
          %2034 = vmatpush1.bf16.msra.mxu0 0
          %2035 = vmatprep.subr.bf16.mxu0 0
          %2036 = vmatpush1.bf16.msra.mxu0 0
          %2037 = vmatprep.subr.bf16.mxu0 0
          %2038 = vmatpush1.bf16.msra.mxu0 0
          %2039 = vmatprep.subr.bf16.mxu0 0
          %2040 = vmatpush1.bf16.msra.mxu0 0
          %2041 = vmatprep.subr.bf16.mxu0 0
          %2042 = vmatpush1.bf16.msra.mxu0 0
          %2043 = vmatprep.subr.bf16.mxu0 0
          %2044 = vmatpush1.bf16.msra.mxu0 0
          %2045 = vmatprep.subr.bf16.mxu0 0
          %2046 = vmatpush1.bf16.msra.mxu0 0
          %2047 = vmatprep.mubr.bf16.mxu0 0
          %2048 = vmatmul.mubr.bf16.gmra.mrb[0].mxu0 %v1959
          %v2049 = vpop.f32.mrb[0].mxu0
          %v2050 = vadd.f32 %v1965, %v2049
          %v2051 = vpop.f32.mrb[0].mxu0
          %v2052 = vpop.f32.mrb[0].mxu0
          %v2053 = vadd.f32 %v1965, %v2052
          %v2054 = vpop.f32.mrb[0].mxu0
          %2055 = vdwg.mxu0
          %2056 = vst [vmem:[#allocation24] sm:$0xff] %v2050
          %2057 = vst [vmem:[#allocation24 + $0x8] sm:$0xff] %v2053
        $region152: #{pack_decoder_forward.1} parent=91 // pred_fallthru
          _
        // Predicated region
        $region153: #{pack_decoder_forward.1} parent=91 // pred_check
          %p2058 = pneg %p513
        $region154: #{pack_decoder_forward.1} parent=91 // pred_check_branch
          %2060 = sbr.rel (%p2058) target = $region156
        $region155: #{pack_decoder_forward.1} parent=91 // pred_region
          %s2061 = smul.u32 2, %s49
          %s2063 = ssub.s32 256, 256
          %2064 = vsyncadd [#allocation5], %s2063
          %s2065 = smul.addr %s2061, 128
          %s2066 = scalar_lea.hbm %s18, %s2065
          %s2067 = sshll.u32 [#allocation24], 4
          %s2068 = int_to_ptr.vmem [resolvable:$true] %s2067
          %2073 = dma.vmem_to_hbm [thread:$0]  %s2068, 256, %s2066, [#allocation5], 128, 128, 8
        $region156: #{pack_decoder_forward.1} parent=91 // pred_fallthru
          _
        // Predicated region
        $region157: #{pack_decoder_forward.1} parent=91 // pred_check
          %p2074 = pneg %p513
        $region158: #{pack_decoder_forward.1} parent=91 // pred_check_branch
          %2076 = sbr.rel (%p2074) target = $region160
        $region159: #{pack_decoder_forward.1} parent=91 // pred_region
          %2077 = dma.done [#allocation5], 256
        $region160: #{pack_decoder_forward.1} parent=91 // pred_fallthru
          _
      $region92: #{pack_decoder_forward.1} parent=5 // pred_fallthru
        _
      %p2078 = scmp.le.s32.totalorder 2, %s40
      // Predicated region
      $region161: #{pack_decoder_forward.1} parent=5 // pred_check
        %p2079 = pneg %p2078
      $region162: #{pack_decoder_forward.1} parent=5 // pred_check_branch
        %2081 = sbr.rel (%p2079) target = $region164
      $region163: #{pack_decoder_forward.1} parent=5 // pred_region
        %s2082 = ssub.s32 %s40, 2
      $region164: #{pack_decoder_forward.1} parent=5 // pred_fallthru
        _
    $region6: #{pack_decoder_forward.1} parent=1 // loop_footer
      %s44 = sadd.s32 1, %s40
    $region7: #{pack_decoder_forward.1} parent=1 // loop_footer_branch
      %39 = sbr.rel target = $region3
    $region8: #{pack_decoder_forward.1} parent=1 // loop_exit
      _
    %2083 = vsyncpa [#allocation4], 1
    %s2084 = scalar_lea.sflag [#allocation4], 1
    %2085 = vsyncpa %s2084, 1
    %2086 = vsyncpa [#allocation7], 1
    %s2087 = scalar_lea.sflag [#allocation7], 1
    %2088 = vsyncpa %s2087, 1
    %2089 = vsyncpa [#allocation10], 1
    %s2090 = scalar_lea.sflag [#allocation10], 1
    %2091 = vsyncpa %s2090, 1
    %2092 = vsyncpa [#allocation13], 1
    %s2093 = scalar_lea.sflag [#allocation13], 1
    %2094 = vsyncpa %s2093, 1
    %2095 = vsyncpa [#allocation16], 1
    %s2096 = scalar_lea.sflag [#allocation16], 1
    %2097 = vsyncpa %s2096, 1
    %2098 = vsyncpa [#allocation19], 1
    %2099 = vsyncpa [#allocation22], 1
    %2100 = vsyncpa [#allocation5], 1
    %s2101 = scalar_lea.sflag [#allocation5], 1
    %2102 = vsyncpa %s2101, 1

</llo_original>
